<compile_context>
chip_gen: v6e
topology: v6e:2x2x1
jax: 0.10.0
libtpu: 0.0.40
codegen_flags: <defaults>
</compile_context>

<pallas_src>
import functools

import numpy as np
import jax
import jax.numpy as jnp
from jax.experimental import pallas as pl
from jax.experimental.pallas import tpu as pltpu

EPS = 1e-5          # nn.InstanceNorm2d default
NEG_SLOPE = 0.01    # nn.LeakyReLU default


# --------------------------------------------------------------------------- #
# Helpers
# --------------------------------------------------------------------------- #
def _instance_norm_lanes(a, inv_hw):
    """InstanceNorm over the lane (H*W) axis of a (TB, C, HW) slab.

    Centered variance (mean subtracted before squaring) to match PyTorch's
    InstanceNorm2d without E[x^2] - E[x]^2 cancellation (review concern #1).
    """
    mean = jnp.sum(a, axis=-1, keepdims=True) * inv_hw
    centered = a - mean
    var = jnp.sum(centered * centered, axis=-1, keepdims=True) * inv_hw
    return centered * jax.lax.rsqrt(var + EPS)


def _leaky_relu(a):
    return jnp.where(a >= 0, a, NEG_SLOPE * a)


def _border_masks(H, W):
    """(9, H*W) f32 masks, one per 3x3 tap in (dh, dw) row-major order.

    Zero where the lane-roll for that tap wrapped across an image border.
    Depends only on the static H, W -> computed once at trace time (numpy) and
    passed to the kernel as a tiny replicated VMEM input (hoisted out of the
    kernel per review).
    """
    HW = H * W
    lane = np.arange(HW)
    row, col = lane // W, lane % W
    rows = []
    for dh in (-1, 0, 1):
        for dw in (-1, 0, 1):
            m = np.ones(HW, np.float32)
            if dh == -1:
                m = m * (row >= 1)
            elif dh == 1:
                m = m * (row <= H - 2)
            if dw == -1:
                m = m * (col >= 1)
            elif dw == 1:
                m = m * (col <= W - 2)
            rows.append(m.astype(np.float32))
    return np.stack(rows, axis=0)


# --------------------------------------------------------------------------- #
# Single-buffered replicated operands (pipeline_mode=pl.Buffered(1)), probed once
# --------------------------------------------------------------------------- #
_BUFFERED_REP_OK = None


def _buffered_rep_supported():
    """Probe once whether pipeline_mode=pl.Buffered(1) lowers on this jax/libtpu."""
    global _BUFFERED_REP_OK
    if _BUFFERED_REP_OK is None:
        def _copy(x_ref, o_ref):
            o_ref[...] = x_ref[...]

        try:
            spec = pl.BlockSpec((8, 128), lambda i: (0, 0),
                                pipeline_mode=pl.Buffered(1))
            fn = pl.pallas_call(
                _copy,
                out_shape=jax.ShapeDtypeStruct((8, 128), jnp.float32),
                grid_spec=pltpu.PrefetchScalarGridSpec(
                    num_scalar_prefetch=0,
                    grid=(2,),
                    in_specs=[spec],
                    out_specs=pl.BlockSpec((8, 128), lambda i: (0, 0))),
            )
            jax.block_until_ready(fn(jnp.zeros((8, 128), jnp.float32)))
            _BUFFERED_REP_OK = True
        except Exception:
            _BUFFERED_REP_OK = False
    return _BUFFERED_REP_OK


def _rep_spec(shape):
    """BlockSpec for a grid-invariant (replicated) operand: weights/biases/masks.

    Single-buffered (pl.Buffered(1)) when supported: these blocks never change
    across grid steps, so double-buffering them only burns VMEM headroom
    (matters most on v7x's 64 MiB VMEM once TB-sample activation blocks grow).
    """
    nd = len(shape)
    idx = lambda n: (0,) * nd
    if _buffered_rep_supported():
        return pl.BlockSpec(shape, idx, pipeline_mode=pl.Buffered(1))
    return pl.BlockSpec(shape, idx)


# --------------------------------------------------------------------------- #
# Kernel
# --------------------------------------------------------------------------- #
def _make_kernel(H, W, TB, need_skip, mxu_bf16):
    HW = H * W
    inv_hw = 1.0 / HW
    # 3x3 tap order matches _border_masks and the (9, O, I) weight layout.
    shifts = [dh * W + dw for dh in (-1, 0, 1) for dw in (-1, 0, 1)]

    def mm(w, a):
        # MXU matmul, f32 accumulation. bf16 operands only when mxu_bf16 (gated on
        # channel width >= 128 in residual_forward; never worthwhile on v5e).
        if mxu_bf16:
            w = w.astype(jnp.bfloat16)
            a = a.astype(jnp.bfloat16)
        return jnp.dot(w, a, preferred_element_type=jnp.float32)

    def per_sample_mm(w, slab, bias):
        # slab: (TB, C, HW); w: (O, C); bias: (O, 1)  ->  (TB, O, HW)
        # Statically unrolled over TB samples: slab[b] selects a major block (no
        # sublane slicing); each matmul is a tiny latency-bound MXU op.
        return jnp.stack([mm(w, slab[b]) + bias for b in range(TB)], axis=0)

    def kernel(x_ref, m_ref, w1_ref, b1_ref, w2_ref, b2_ref, w3_ref, b3_ref, *rest):
        if need_skip:
            ws_ref, bs_ref, o_ref = rest
        else:
            (o_ref,) = rest

        x = x_ref[...]                                     # (TB, Cin, HW) f32

        # --- skip path -------------------------------------------------------
        if need_skip:
            # NOTE (review concern #2): when mxu_bf16 is on, the skip matmul
            # operands are bf16 too (residual carries bf16 error); f32 is exact.
            residual = per_sample_mm(ws_ref[...], x, bs_ref[...])   # (TB, Cout, HW)
        else:
            residual = x                                   # identity, Cout == Cin

        # --- bn1 -> lrelu -> conv1 (1x1) ---------------------------------------
        a = _leaky_relu(_instance_norm_lanes(x, inv_hw))
        a = per_sample_mm(w1_ref[...], a, b1_ref[...])     # (TB, Cmid, HW)

        # --- bn2 -> lrelu -------------------------------------------------------
        a = _leaky_relu(_instance_norm_lanes(a, inv_hw))

        # --- conv2 (3x3, pad 1): 9 accumulated MXU matmuls over masked rolls ----
        # One tap live at a time (no 9-tap sublane concat / relayouts); the border
        # masks are a precomputed replicated input, so no per-invocation iota,
        # divides, compares or selects.
        w2 = w2_ref[...]                                   # (9, Cmid, Cmid)
        masks = m_ref[...]                                 # (9, HW)
        b2 = b2_ref[...]                                   # (Cmid, 1)
        # Center tap (shift 0, all-ones mask) initializes the accumulators.
        acc = [mm(w2[4], a[b]) + b2 for b in range(TB)]
        for k, d in enumerate(shifts):
            if d == 0:
                continue
            wk = w2[k]                                     # (Cmid, Cmid)
            mrow = masks[k:k + 1, :]                       # (1, HW)
            for b in range(TB):
                tap = pltpu.roll(a[b], shift=(-d) % HW, axis=1) * mrow
                acc[b] = acc[b] + mm(wk, tap)
        a = jnp.stack(acc, axis=0)                         # (TB, Cmid, HW)

        # --- bn3 -> lrelu -> conv3 (1x1) -----------------------------------------
        a = _leaky_relu(_instance_norm_lanes(a, inv_hw))
        a = per_sample_mm(w3_ref[...], a, b3_ref[...])     # (TB, Cout, HW)

        # --- residual add; lane-dense store (last dim HW is a multiple of 128) ---
        o_ref[...] = a + residual

    return kernel


# --------------------------------------------------------------------------- #
# Wrapper
# --------------------------------------------------------------------------- #
def _pick_tb(N, Cin, Cout, HW, max_tb=8, vmem_budget_bytes=8 * 1024 * 1024):
    """Largest divisor of N (<= max_tb) that (a) keeps >=2 grid steps so the
    "parallel" batch axis can shard across v7x's two TensorCores, and (b) keeps
    the double-buffered activation blocks under a conservative VMEM budget."""
    divisors = [d for d in range(1, N + 1) if N % d == 0 and d <= max_tb]
    preferred = [d for d in divisors if N // d >= 2] or divisors
    tb = max(preferred)

    def act_bytes(t):
        # in + out activation blocks, x2 pipeline buffers each, f32.
        return 2 * 2 * t * (Cin + Cout) * HW * 4

    while act_bytes(tb) > vmem_budget_bytes:
        smaller = [d for d in preferred if d < tb]
        if not smaller:
            break
        tb = max(smaller)
    return tb


def residual_forward(x_nchw, params, *, use_bf16=False, max_batch_block=8):
    """x_nchw: (N, Cin, H, W) float32. Returns (N, Cout, H, W) float32."""
    w1, b1, w2, b2, w3, b3, ws, bs = params
    N, Cin, H, W = x_nchw.shape
    Cmid = w1.shape[1]
    Cout = w3.shape[1]
    HW = H * W
    need_skip = Cin != Cout                    # static (shape-derived)

    # bf16 MXU operands only pay off at production channel widths (>=128) on
    # v6e/v7x; at Cmid=4..8 the casts / (16,128) repack are pure overhead and
    # v5e's VPU has no bf16 path -> gate keeps f32 (per review).
    mxu_bf16 = bool(use_bf16) and min(Cin, Cmid, Cout) >= 128

    TB = _pick_tb(N, Cin, Cout, HW, max_tb=max_batch_block)
    assert N % TB == 0
    grid = (N // TB,)

    # Free reshape (no transpose): channels stay on sublanes, H*W lands on lanes.
    x_flat = x_nchw.reshape(N, Cin, HW)

    # Tiny one-off weight re-layouts (a few KiB) into W^T / per-tap (9, O, I) form.
    w1t = jnp.transpose(w1)                                          # (Cmid, Cin)
    w2taps = jnp.transpose(w2, (0, 1, 3, 2)).reshape(9, Cmid, Cmid)  # (9, O, I)
    w3t = jnp.transpose(w3)                                          # (Cout, Cmid)
    masks = jnp.asarray(_border_masks(H, W))                         # (9, HW) static

    args = [x_flat, masks,
            w1t, b1.reshape(Cmid, 1),
            w2taps, b2.reshape(Cmid, 1),
            w3t, b3.reshape(Cout, 1)]
    if need_skip:
        args += [jnp.transpose(ws), bs.reshape(Cout, 1)]

    in_specs = [pl.BlockSpec((TB, Cin, HW), lambda n: (n, 0, 0))]
    in_specs += [_rep_spec(a.shape) for a in args[1:]]

    out_flat = pl.pallas_call(
        _make_kernel(H, W, TB, need_skip, mxu_bf16),
        out_shape=jax.ShapeDtypeStruct((N, Cout, HW), jnp.float32),
        grid_spec=pltpu.PrefetchScalarGridSpec(
            num_scalar_prefetch=0,
            grid=grid,
            in_specs=in_specs,
            out_specs=pl.BlockSpec((TB, Cout, HW), lambda n: (n, 0, 0)),
        ),
        compiler_params=pltpu.CompilerParams(
            dimension_semantics=("parallel",),   # batch steps shard across v7x TCs
            # Blocks are tiny here; the explicit limit documents the v7x headroom
            # constraint (64 MiB physical, 32 MiB default-scoped).
            vmem_limit_bytes=32 * 1024 * 1024,
        ),
    )(*args)

    return out_flat.reshape(N, Cout, H, W)


def make_params(key, inp_dim, out_dim):
    mid = out_dim // 2
    ks = jax.random.split(key, 8)
    scale = 0.1
    w1 = scale * jax.random.normal(ks[0], (inp_dim, mid), jnp.float32)
    b1 = scale * jax.random.normal(ks[1], (1, mid), jnp.float32)
    w2 = scale * jax.random.normal(ks[2], (3, 3, mid, mid), jnp.float32)
    b2 = scale * jax.random.normal(ks[3], (1, mid), jnp.float32)
    w3 = scale * jax.random.normal(ks[4], (mid, out_dim), jnp.float32)
    b3 = scale * jax.random.normal(ks[5], (1, out_dim), jnp.float32)
    if inp_dim != out_dim:
        ws = scale * jax.random.normal(ks[6], (inp_dim, out_dim), jnp.float32)
        bs = scale * jax.random.normal(ks[7], (1, out_dim), jnp.float32)
    else:
        # need_skip=False in PyTorch: residual is identity. Kept only for the
        # reference; the kernel elides this path statically.
        ws = jnp.eye(inp_dim, out_dim, dtype=jnp.float32)
        bs = jnp.zeros((1, out_dim), jnp.float32)
    return w1, b1, w2, b2, w3, b3, ws, bs


# ------------------------------ pure-JAX reference ------------------------------
def residual_reference(x_nchw, params):
    w1, b1, w2, b2, w3, b3, ws, bs = params
    x = jnp.transpose(x_nchw, (0, 2, 3, 1))  # NHWC

    def inorm(t):
        mean = jnp.mean(t, axis=(1, 2), keepdims=True)
        var = jnp.mean((t - mean) ** 2, axis=(1, 2), keepdims=True)
        return (t - mean) / jnp.sqrt(var + EPS)

    def lrelu(t):
        return jnp.where(t >= 0, t, NEG_SLOPE * t)

    def conv1x1(t, w, b):
        return jnp.einsum('nhwc,co->nhwo', t, w) + b[0]

    def conv3x3(t, w, b):
        y = jax.lax.conv_general_dilated(
            t, w, (1, 1), 'SAME', dimension_numbers=('NHWC', 'HWIO', 'NHWC'))
        return y + b[0]

    residual = conv1x1(x, ws, bs)
    out = conv1x1(lrelu(inorm(x)), w1, b1)
    out = conv3x3(lrelu(inorm(out)), w2, b2)
    out = conv1x1(lrelu(inorm(out)), w3, b3)
    out = out + residual
    return jnp.transpose(out, (0, 3, 1, 2))


if __name__ == "__main__":
    # N=8 -> TB=4 samples per grid step and 2 grid steps (so the "parallel" batch
    # axis can feed both v7x TensorCores), per the batching feedback.
    N, H, W = 8, 16, 16
    key = jax.random.PRNGKey(0)

    _buffered_rep_supported()   # one-time capability probe (outside any jit trace)

    def run_case(inp_dim, out_dim, case_key):
        kx, kp = jax.random.split(case_key)
        x = jax.random.normal(kx, (N, inp_dim, H, W), jnp.float32)
        params = make_params(kp, inp_dim, out_dim)
        ref = residual_reference(x, params)

        # Exact f32 path (matches PyTorch semantics).
        fwd = jax.jit(functools.partial(residual_forward, use_bf16=False))
        out = jax.block_until_ready(fwd(x, params))
        assert out.shape == (N, out_dim, H, W), out.shape
        assert jnp.allclose(out, ref, atol=1e-4, rtol=1e-4), (
            float(jnp.max(jnp.abs(out - ref))))

        # use_bf16=True is gated on channel width (>=128), so at these widths the
        # kernel stays on the exact f32 MXU path (bf16 never pays at Cmid=4..8 and
        # is a net loss on v5e, per review).
        fwd_req_bf16 = jax.jit(functools.partial(residual_forward, use_bf16=True))
        out_b = jax.block_until_ready(fwd_req_bf16(x, params))
        assert jnp.allclose(out_b, ref, atol=1e-4, rtol=1e-4), (
            float(jnp.max(jnp.abs(out_b - ref))))

    k0, k1 = jax.random.split(key)
    run_case(4, 8, k0)   # inp_dim != out_dim: 1x1 skip conv path
    run_case(8, 8, k1)   # inp_dim == out_dim: identity skip, statically elided

    print("KERNEL_OK")
</pallas_src>

<mosaic_0001>
module attributes {stable_mosaic.version = 11 : i64} {
  func.func @_copy(%arg0: i32, %arg1: memref<8x128xf32, #tpu.memory_space<vmem>>, %arg2: memref<8x128xf32, #tpu.memory_space<vmem>>) attributes {dimension_semantics = [#tpu.dimension_semantics<arbitrary>], iteration_bounds = array<i64: 2>, scalar_prefetch = 0 : i64, scratch_operands = 0 : i64, tpu.core_type = #tpu.core_type<tc>, window_params = [{pipeline_mode = #tpu.pipeline_mode<synchronous>, transform_indices = @transform_0, window_bounds = array<i64: 8, 128>}, {pipeline_mode = #tpu.pipeline_mode<synchronous>, transform_indices = @transform_1, window_bounds = array<i64: 8, 128>}]} {
    %c0 = arith.constant 0 : index
    %c0_0 = arith.constant 0 : index
    %0 = vector.load %arg1[%c0, %c0_0] : memref<8x128xf32, #tpu.memory_space<vmem>>, vector<8x128xf32>
    %c0_1 = arith.constant 0 : index
    %c0_2 = arith.constant 0 : index
    %1 = vector.load %arg2[%c0_1, %c0_2] : memref<8x128xf32, #tpu.memory_space<vmem>>, vector<8x128xf32>
    tpu.vector_store %arg2[%c0_1, %c0_2], %0 {strides = array<i32>} : memref<8x128xf32, #tpu.memory_space<vmem>>, vector<8x128xf32>,
    return
  }
  func.func @transform_0(%arg0: i32) -> (i32, i32) {
    %c0_i32 = arith.constant 0 : i32
    %c0_i32_0 = arith.constant 0 : i32
    %c0_i32_1 = arith.constant 0 : i32
    return %c0_i32, %c0_i32_0 : i32, i32
  }
  func.func @transform_1(%arg0: i32) -> (i32, i32) {
    %c0_i32 = arith.constant 0 : i32
    %c0_i32_0 = arith.constant 0 : i32
    %c0_i32_1 = arith.constant 0 : i32
    return %c0_i32, %c0_i32_0 : i32, i32
  }
}

module attributes {stable_mosaic.version = 11 : i64} {
  func.func @kernel(%arg0: i32, %arg1: memref<4x4x256xf32, #tpu.memory_space<vmem>>, %arg2: memref<9x256xf32, #tpu.memory_space<vmem>>, %arg3: memref<4x4xf32, #tpu.memory_space<vmem>>, %arg4: memref<4x1xf32, #tpu.memory_space<vmem>>, %arg5: memref<9x4x4xf32, #tpu.memory_space<vmem>>, %arg6: memref<4x1xf32, #tpu.memory_space<vmem>>, %arg7: memref<8x4xf32, #tpu.memory_space<vmem>>, %arg8: memref<8x1xf32, #tpu.memory_space<vmem>>, %arg9: memref<8x4xf32, #tpu.memory_space<vmem>>, %arg10: memref<8x1xf32, #tpu.memory_space<vmem>>, %arg11: memref<4x8x256xf32, #tpu.memory_space<vmem>>) attributes {dimension_semantics = [#tpu.dimension_semantics<parallel>], iteration_bounds = array<i64: 2>, scalar_prefetch = 0 : i64, scratch_operands = 0 : i64, tpu.core_type = #tpu.core_type<tc>, window_params = [{transform_indices = @transform_0, window_bounds = array<i64: 4, 4, 256>}, {pipeline_mode = #tpu.pipeline_mode<synchronous>, transform_indices = @transform_1, window_bounds = array<i64: 9, 256>}, {pipeline_mode = #tpu.pipeline_mode<synchronous>, transform_indices = @transform_2, window_bounds = array<i64: 4, 4>}, {pipeline_mode = #tpu.pipeline_mode<synchronous>, transform_indices = @transform_3, window_bounds = array<i64: 4, 1>}, {pipeline_mode = #tpu.pipeline_mode<synchronous>, transform_indices = @transform_4, window_bounds = array<i64: 9, 4, 4>}, {pipeline_mode = #tpu.pipeline_mode<synchronous>, transform_indices = @transform_5, window_bounds = array<i64: 4, 1>}, {pipeline_mode = #tpu.pipeline_mode<synchronous>, transform_indices = @transform_6, window_bounds = array<i64: 8, 4>}, {pipeline_mode = #tpu.pipeline_mode<synchronous>, transform_indices = @transform_7, window_bounds = array<i64: 8, 1>}, {pipeline_mode = #tpu.pipeline_mode<synchronous>, transform_indices = @transform_8, window_bounds = array<i64: 8, 4>}, {pipeline_mode = #tpu.pipeline_mode<synchronous>, transform_indices = @transform_9, window_bounds = array<i64: 8, 1>}, {transform_indices = @transform_10, window_bounds = array<i64: 4, 8, 256>}]} {
    %c0 = arith.constant 0 : index
    %c0_0 = arith.constant 0 : index
    %c0_1 = arith.constant 0 : index
    %0 = vector.load %arg1[%c0, %c0_0, %c0_1] : memref<4x4x256xf32, #tpu.memory_space<vmem>>, vector<4x4x256xf32>
    %c0_2 = arith.constant 0 : index
    %c0_3 = arith.constant 0 : index
    %1 = vector.load %arg9[%c0_2, %c0_3] : memref<8x4xf32, #tpu.memory_space<vmem>>, vector<8x4xf32>
    %c0_4 = arith.constant 0 : index
    %c0_5 = arith.constant 0 : index
    %2 = vector.load %arg10[%c0_4, %c0_5] : memref<8x1xf32, #tpu.memory_space<vmem>>, vector<8x1xf32>
    %3 = vector.extract_strided_slice %0 {offsets = [0, 0, 0], sizes = [1, 4, 256], strides = [1, 1, 1]} : vector<4x4x256xf32> to vector<1x4x256xf32>
    %4 = vector.shape_cast %3 : vector<1x4x256xf32> to vector<4x256xf32>
    %cst = arith.constant dense<0.000000e+00> : vector<8x256xf32>
    %5 = tpu.matmul %1, %4, %cst {dimension_numbers = #tpu.dot_dimension_numbers<[1], [0], [0], [1], [0, 0, 1, 1], [], []>} : vector<8x4xf32>, vector<4x256xf32>, vector<8x256xf32> -> vector<8x256xf32>
    %6 = vector.broadcast %2 : vector<8x1xf32> to vector<8x256xf32>
    %7 = arith.addf %5, %6 : vector<8x256xf32>
    %8 = vector.extract_strided_slice %0 {offsets = [1, 0, 0], sizes = [1, 4, 256], strides = [1, 1, 1]} : vector<4x4x256xf32> to vector<1x4x256xf32>
    %9 = vector.shape_cast %8 : vector<1x4x256xf32> to vector<4x256xf32>
    %cst_6 = arith.constant dense<0.000000e+00> : vector<8x256xf32>
    %10 = tpu.matmul %1, %9, %cst_6 {dimension_numbers = #tpu.dot_dimension_numbers<[1], [0], [0], [1], [0, 0, 1, 1], [], []>} : vector<8x4xf32>, vector<4x256xf32>, vector<8x256xf32> -> vector<8x256xf32>
    %11 = vector.broadcast %2 : vector<8x1xf32> to vector<8x256xf32>
    %12 = arith.addf %10, %11 : vector<8x256xf32>
    %13 = vector.extract_strided_slice %0 {offsets = [2, 0, 0], sizes = [1, 4, 256], strides = [1, 1, 1]} : vector<4x4x256xf32> to vector<1x4x256xf32>
    %14 = vector.shape_cast %13 : vector<1x4x256xf32> to vector<4x256xf32>
    %cst_7 = arith.constant dense<0.000000e+00> : vector<8x256xf32>
    %15 = tpu.matmul %1, %14, %cst_7 {dimension_numbers = #tpu.dot_dimension_numbers<[1], [0], [0], [1], [0, 0, 1, 1], [], []>} : vector<8x4xf32>, vector<4x256xf32>, vector<8x256xf32> -> vector<8x256xf32>
    %16 = vector.broadcast %2 : vector<8x1xf32> to vector<8x256xf32>
    %17 = arith.addf %15, %16 : vector<8x256xf32>
    %18 = vector.extract_strided_slice %0 {offsets = [3, 0, 0], sizes = [1, 4, 256], strides = [1, 1, 1]} : vector<4x4x256xf32> to vector<1x4x256xf32>
    %19 = vector.shape_cast %18 : vector<1x4x256xf32> to vector<4x256xf32>
    %cst_8 = arith.constant dense<0.000000e+00> : vector<8x256xf32>
    %20 = tpu.matmul %1, %19, %cst_8 {dimension_numbers = #tpu.dot_dimension_numbers<[1], [0], [0], [1], [0, 0, 1, 1], [], []>} : vector<8x4xf32>, vector<4x256xf32>, vector<8x256xf32> -> vector<8x256xf32>
    %21 = vector.broadcast %2 : vector<8x1xf32> to vector<8x256xf32>
    %22 = arith.addf %20, %21 : vector<8x256xf32>
    %23 = vector.shape_cast %7 : vector<8x256xf32> to vector<1x8x256xf32>
    %24 = vector.shape_cast %12 : vector<8x256xf32> to vector<1x8x256xf32>
    %25 = vector.shape_cast %17 : vector<8x256xf32> to vector<1x8x256xf32>
    %26 = vector.shape_cast %22 : vector<8x256xf32> to vector<1x8x256xf32>
    %27 = tpu.concatenate %23, %24, %25, %26 in 0 : vector<1x8x256xf32>, vector<1x8x256xf32>, vector<1x8x256xf32>, vector<1x8x256xf32> -> vector<4x8x256xf32>
    %cst_9 = arith.constant dense<0.000000e+00> : vector<4x4xf32>
    %28 = vector.multi_reduction <add>, %0, %cst_9 [2] : vector<4x4x256xf32> to vector<4x4xf32>
    %29 = vector.shape_cast %28 : vector<4x4xf32> to vector<4x4x1xf32>
    %cst_10 = arith.constant 3.906250e-03 : f32
    %30 = vector.broadcast %cst_10 : f32 to vector<4x4x1xf32>
    %31 = arith.mulf %29, %30 : vector<4x4x1xf32>
    %32 = vector.broadcast %31 : vector<4x4x1xf32> to vector<4x4x256xf32>
    %33 = arith.subf %0, %32 : vector<4x4x256xf32>
    %34 = arith.mulf %33, %33 : vector<4x4x256xf32>
    %cst_11 = arith.constant dense<0.000000e+00> : vector<4x4xf32>
    %35 = vector.multi_reduction <add>, %34, %cst_11 [2] : vector<4x4x256xf32> to vector<4x4xf32>
    %36 = vector.shape_cast %35 : vector<4x4xf32> to vector<4x4x1xf32>
    %cst_12 = arith.constant 3.906250e-03 : f32
    %37 = vector.broadcast %cst_12 : f32 to vector<4x4x1xf32>
    %38 = arith.mulf %36, %37 : vector<4x4x1xf32>
    %cst_13 = arith.constant 9.99999974E-6 : f32
    %39 = vector.broadcast %cst_13 : f32 to vector<4x4x1xf32>
    %40 = arith.addf %38, %39 : vector<4x4x1xf32>
    %41 = math.rsqrt %40 : vector<4x4x1xf32>
    %42 = vector.broadcast %41 : vector<4x4x1xf32> to vector<4x4x256xf32>
    %43 = arith.mulf %33, %42 : vector<4x4x256xf32>
    %cst_14 = arith.constant 0.000000e+00 : f32
    %44 = vector.broadcast %cst_14 : f32 to vector<4x4x256xf32>
    %45 = arith.cmpf oge, %43, %44 : vector<4x4x256xf32>
    %cst_15 = arith.constant 0.00999999977 : f32
    %46 = vector.broadcast %cst_15 : f32 to vector<4x4x256xf32>
    %47 = arith.mulf %46, %43 : vector<4x4x256xf32>
    %48 = arith.select %45, %43, %47 : vector<4x4x256xi1>, vector<4x4x256xf32>
    %c0_16 = arith.constant 0 : index
    %c0_17 = arith.constant 0 : index
    %49 = vector.load %arg3[%c0_16, %c0_17] : memref<4x4xf32, #tpu.memory_space<vmem>>, vector<4x4xf32>
    %c0_18 = arith.constant 0 : index
    %c0_19 = arith.constant 0 : index
    %50 = vector.load %arg4[%c0_18, %c0_19] : memref<4x1xf32, #tpu.memory_space<vmem>>, vector<4x1xf32>
    %51 = vector.extract_strided_slice %48 {offsets = [0, 0, 0], sizes = [1, 4, 256], strides = [1, 1, 1]} : vector<4x4x256xf32> to vector<1x4x256xf32>
    %52 = vector.shape_cast %51 : vector<1x4x256xf32> to vector<4x256xf32>
    %cst_20 = arith.constant dense<0.000000e+00> : vector<4x256xf32>
    %53 = tpu.matmul %49, %52, %cst_20 {dimension_numbers = #tpu.dot_dimension_numbers<[1], [0], [0], [1], [0, 0, 1, 1], [], []>} : vector<4x4xf32>, vector<4x256xf32>, vector<4x256xf32> -> vector<4x256xf32>
    %54 = vector.broadcast %50 : vector<4x1xf32> to vector<4x256xf32>
    %55 = arith.addf %53, %54 : vector<4x256xf32>
    %56 = vector.extract_strided_slice %48 {offsets = [1, 0, 0], sizes = [1, 4, 256], strides = [1, 1, 1]} : vector<4x4x256xf32> to vector<1x4x256xf32>
    %57 = vector.shape_cast %56 : vector<1x4x256xf32> to vector<4x256xf32>
    %cst_21 = arith.constant dense<0.000000e+00> : vector<4x256xf32>
    %58 = tpu.matmul %49, %57, %cst_21 {dimension_numbers = #tpu.dot_dimension_numbers<[1], [0], [0], [1], [0, 0, 1, 1], [], []>} : vector<4x4xf32>, vector<4x256xf32>, vector<4x256xf32> -> vector<4x256xf32>
    %59 = vector.broadcast %50 : vector<4x1xf32> to vector<4x256xf32>
    %60 = arith.addf %58, %59 : vector<4x256xf32>
    %61 = vector.extract_strided_slice %48 {offsets = [2, 0, 0], sizes = [1, 4, 256], strides = [1, 1, 1]} : vector<4x4x256xf32> to vector<1x4x256xf32>
    %62 = vector.shape_cast %61 : vector<1x4x256xf32> to vector<4x256xf32>
    %cst_22 = arith.constant dense<0.000000e+00> : vector<4x256xf32>
    %63 = tpu.matmul %49, %62, %cst_22 {dimension_numbers = #tpu.dot_dimension_numbers<[1], [0], [0], [1], [0, 0, 1, 1], [], []>} : vector<4x4xf32>, vector<4x256xf32>, vector<4x256xf32> -> vector<4x256xf32>
    %64 = vector.broadcast %50 : vector<4x1xf32> to vector<4x256xf32>
    %65 = arith.addf %63, %64 : vector<4x256xf32>
    %66 = vector.extract_strided_slice %48 {offsets = [3, 0, 0], sizes = [1, 4, 256], strides = [1, 1, 1]} : vector<4x4x256xf32> to vector<1x4x256xf32>
    %67 = vector.shape_cast %66 : vector<1x4x256xf32> to vector<4x256xf32>
    %cst_23 = arith.constant dense<0.000000e+00> : vector<4x256xf32>
    %68 = tpu.matmul %49, %67, %cst_23 {dimension_numbers = #tpu.dot_dimension_numbers<[1], [0], [0], [1], [0, 0, 1, 1], [], []>} : vector<4x4xf32>, vector<4x256xf32>, vector<4x256xf32> -> vector<4x256xf32>
    %69 = vector.broadcast %50 : vector<4x1xf32> to vector<4x256xf32>
    %70 = arith.addf %68, %69 : vector<4x256xf32>
    %71 = vector.shape_cast %55 : vector<4x256xf32> to vector<1x4x256xf32>
    %72 = vector.shape_cast %60 : vector<4x256xf32> to vector<1x4x256xf32>
    %73 = vector.shape_cast %65 : vector<4x256xf32> to vector<1x4x256xf32>
    %74 = vector.shape_cast %70 : vector<4x256xf32> to vector<1x4x256xf32>
    %75 = tpu.concatenate %71, %72, %73, %74 in 0 : vector<1x4x256xf32>, vector<1x4x256xf32>, vector<1x4x256xf32>, vector<1x4x256xf32> -> vector<4x4x256xf32>
    %cst_24 = arith.constant dense<0.000000e+00> : vector<4x4xf32>
    %76 = vector.multi_reduction <add>, %75, %cst_24 [2] : vector<4x4x256xf32> to vector<4x4xf32>
    %77 = vector.shape_cast %76 : vector<4x4xf32> to vector<4x4x1xf32>
    %cst_25 = arith.constant 3.906250e-03 : f32
    %78 = vector.broadcast %cst_25 : f32 to vector<4x4x1xf32>
    %79 = arith.mulf %77, %78 : vector<4x4x1xf32>
    %80 = vector.broadcast %79 : vector<4x4x1xf32> to vector<4x4x256xf32>
    %81 = arith.subf %75, %80 : vector<4x4x256xf32>
    %82 = arith.mulf %81, %81 : vector<4x4x256xf32>
    %cst_26 = arith.constant dense<0.000000e+00> : vector<4x4xf32>
    %83 = vector.multi_reduction <add>, %82, %cst_26 [2] : vector<4x4x256xf32> to vector<4x4xf32>
    %84 = vector.shape_cast %83 : vector<4x4xf32> to vector<4x4x1xf32>
    %cst_27 = arith.constant 3.906250e-03 : f32
    %85 = vector.broadcast %cst_27 : f32 to vector<4x4x1xf32>
    %86 = arith.mulf %84, %85 : vector<4x4x1xf32>
    %cst_28 = arith.constant 9.99999974E-6 : f32
    %87 = vector.broadcast %cst_28 : f32 to vector<4x4x1xf32>
    %88 = arith.addf %86, %87 : vector<4x4x1xf32>
    %89 = math.rsqrt %88 : vector<4x4x1xf32>
    %90 = vector.broadcast %89 : vector<4x4x1xf32> to vector<4x4x256xf32>
    %91 = arith.mulf %81, %90 : vector<4x4x256xf32>
    %cst_29 = arith.constant 0.000000e+00 : f32
    %92 = vector.broadcast %cst_29 : f32 to vector<4x4x256xf32>
    %93 = arith.cmpf oge, %91, %92 : vector<4x4x256xf32>
    %cst_30 = arith.constant 0.00999999977 : f32
    %94 = vector.broadcast %cst_30 : f32 to vector<4x4x256xf32>
    %95 = arith.mulf %94, %91 : vector<4x4x256xf32>
    %96 = arith.select %93, %91, %95 : vector<4x4x256xi1>, vector<4x4x256xf32>
    %c0_31 = arith.constant 0 : index
    %c0_32 = arith.constant 0 : index
    %c0_33 = arith.constant 0 : index
    %97 = vector.load %arg5[%c0_31, %c0_32, %c0_33] : memref<9x4x4xf32, #tpu.memory_space<vmem>>, vector<9x4x4xf32>
    %c0_34 = arith.constant 0 : index
    %c0_35 = arith.constant 0 : index
    %98 = vector.load %arg2[%c0_34, %c0_35] : memref<9x256xf32, #tpu.memory_space<vmem>>, vector<9x256xf32>
    %c0_36 = arith.constant 0 : index
    %c0_37 = arith.constant 0 : index
    %99 = vector.load %arg6[%c0_36, %c0_37] : memref<4x1xf32, #tpu.memory_space<vmem>>, vector<4x1xf32>
    %100 = vector.extract_strided_slice %97 {offsets = [4, 0, 0], sizes = [1, 4, 4], strides = [1, 1, 1]} : vector<9x4x4xf32> to vector<1x4x4xf32>
    %101 = vector.shape_cast %100 : vector<1x4x4xf32> to vector<4x4xf32>
    %102 = vector.extract_strided_slice %96 {offsets = [0, 0, 0], sizes = [1, 4, 256], strides = [1, 1, 1]} : vector<4x4x256xf32> to vector<1x4x256xf32>
    %103 = vector.shape_cast %102 : vector<1x4x256xf32> to vector<4x256xf32>
    %cst_38 = arith.constant dense<0.000000e+00> : vector<4x256xf32>
    %104 = tpu.matmul %101, %103, %cst_38 {dimension_numbers = #tpu.dot_dimension_numbers<[1], [0], [0], [1], [0, 0, 1, 1], [], []>} : vector<4x4xf32>, vector<4x256xf32>, vector<4x256xf32> -> vector<4x256xf32>
    %105 = vector.broadcast %99 : vector<4x1xf32> to vector<4x256xf32>
    %106 = arith.addf %104, %105 : vector<4x256xf32>
    %107 = vector.extract_strided_slice %97 {offsets = [4, 0, 0], sizes = [1, 4, 4], strides = [1, 1, 1]} : vector<9x4x4xf32> to vector<1x4x4xf32>
    %108 = vector.shape_cast %107 : vector<1x4x4xf32> to vector<4x4xf32>
    %109 = vector.extract_strided_slice %96 {offsets = [1, 0, 0], sizes = [1, 4, 256], strides = [1, 1, 1]} : vector<4x4x256xf32> to vector<1x4x256xf32>
    %110 = vector.shape_cast %109 : vector<1x4x256xf32> to vector<4x256xf32>
    %cst_39 = arith.constant dense<0.000000e+00> : vector<4x256xf32>
    %111 = tpu.matmul %108, %110, %cst_39 {dimension_numbers = #tpu.dot_dimension_numbers<[1], [0], [0], [1], [0, 0, 1, 1], [], []>} : vector<4x4xf32>, vector<4x256xf32>, vector<4x256xf32> -> vector<4x256xf32>
    %112 = vector.broadcast %99 : vector<4x1xf32> to vector<4x256xf32>
    %113 = arith.addf %111, %112 : vector<4x256xf32>
    %114 = vector.extract_strided_slice %97 {offsets = [4, 0, 0], sizes = [1, 4, 4], strides = [1, 1, 1]} : vector<9x4x4xf32> to vector<1x4x4xf32>
    %115 = vector.shape_cast %114 : vector<1x4x4xf32> to vector<4x4xf32>
    %116 = vector.extract_strided_slice %96 {offsets = [2, 0, 0], sizes = [1, 4, 256], strides = [1, 1, 1]} : vector<4x4x256xf32> to vector<1x4x256xf32>
    %117 = vector.shape_cast %116 : vector<1x4x256xf32> to vector<4x256xf32>
    %cst_40 = arith.constant dense<0.000000e+00> : vector<4x256xf32>
    %118 = tpu.matmul %115, %117, %cst_40 {dimension_numbers = #tpu.dot_dimension_numbers<[1], [0], [0], [1], [0, 0, 1, 1], [], []>} : vector<4x4xf32>, vector<4x256xf32>, vector<4x256xf32> -> vector<4x256xf32>
    %119 = vector.broadcast %99 : vector<4x1xf32> to vector<4x256xf32>
    %120 = arith.addf %118, %119 : vector<4x256xf32>
    %121 = vector.extract_strided_slice %97 {offsets = [4, 0, 0], sizes = [1, 4, 4], strides = [1, 1, 1]} : vector<9x4x4xf32> to vector<1x4x4xf32>
    %122 = vector.shape_cast %121 : vector<1x4x4xf32> to vector<4x4xf32>
    %123 = vector.extract_strided_slice %96 {offsets = [3, 0, 0], sizes = [1, 4, 256], strides = [1, 1, 1]} : vector<4x4x256xf32> to vector<1x4x256xf32>
    %124 = vector.shape_cast %123 : vector<1x4x256xf32> to vector<4x256xf32>
    %cst_41 = arith.constant dense<0.000000e+00> : vector<4x256xf32>
    %125 = tpu.matmul %122, %124, %cst_41 {dimension_numbers = #tpu.dot_dimension_numbers<[1], [0], [0], [1], [0, 0, 1, 1], [], []>} : vector<4x4xf32>, vector<4x256xf32>, vector<4x256xf32> -> vector<4x256xf32>
    %126 = vector.broadcast %99 : vector<4x1xf32> to vector<4x256xf32>
    %127 = arith.addf %125, %126 : vector<4x256xf32>
    %128 = vector.extract_strided_slice %97 {offsets = [0, 0, 0], sizes = [1, 4, 4], strides = [1, 1, 1]} : vector<9x4x4xf32> to vector<1x4x4xf32>
    %129 = vector.shape_cast %128 : vector<1x4x4xf32> to vector<4x4xf32>
    %130 = vector.extract_strided_slice %98 {offsets = [0, 0], sizes = [1, 256], strides = [1, 1]} : vector<9x256xf32> to vector<1x256xf32>
    %131 = vector.extract_strided_slice %96 {offsets = [0, 0, 0], sizes = [1, 4, 256], strides = [1, 1, 1]} : vector<4x4x256xf32> to vector<1x4x256xf32>
    %132 = vector.shape_cast %131 : vector<1x4x256xf32> to vector<4x256xf32>
    %c17_i32 = arith.constant 17 : i32
    %133 = tpu.dynamic_rotate %132 by %c17_i32 dim 1 : vector<4x256xf32>, i32 -> vector<4x256xf32>
    %134 = vector.broadcast %130 : vector<1x256xf32> to vector<4x256xf32>
    %135 = arith.mulf %133, %134 : vector<4x256xf32>
    %cst_42 = arith.constant dense<0.000000e+00> : vector<4x256xf32>
    %136 = tpu.matmul %129, %135, %cst_42 {dimension_numbers = #tpu.dot_dimension_numbers<[1], [0], [0], [1], [0, 0, 1, 1], [], []>} : vector<4x4xf32>, vector<4x256xf32>, vector<4x256xf32> -> vector<4x256xf32>
    %137 = arith.addf %106, %136 : vector<4x256xf32>
    %138 = vector.extract_strided_slice %96 {offsets = [1, 0, 0], sizes = [1, 4, 256], strides = [1, 1, 1]} : vector<4x4x256xf32> to vector<1x4x256xf32>
    %139 = vector.shape_cast %138 : vector<1x4x256xf32> to vector<4x256xf32>
    %c17_i32_43 = arith.constant 17 : i32
    %140 = tpu.dynamic_rotate %139 by %c17_i32_43 dim 1 : vector<4x256xf32>, i32 -> vector<4x256xf32>
    %141 = vector.broadcast %130 : vector<1x256xf32> to vector<4x256xf32>
    %142 = arith.mulf %140, %141 : vector<4x256xf32>
    %cst_44 = arith.constant dense<0.000000e+00> : vector<4x256xf32>
    %143 = tpu.matmul %129, %142, %cst_44 {dimension_numbers = #tpu.dot_dimension_numbers<[1], [0], [0], [1], [0, 0, 1, 1], [], []>} : vector<4x4xf32>, vector<4x256xf32>, vector<4x256xf32> -> vector<4x256xf32>
    %144 = arith.addf %113, %143 : vector<4x256xf32>
    %145 = vector.extract_strided_slice %96 {offsets = [2, 0, 0], sizes = [1, 4, 256], strides = [1, 1, 1]} : vector<4x4x256xf32> to vector<1x4x256xf32>
    %146 = vector.shape_cast %145 : vector<1x4x256xf32> to vector<4x256xf32>
    %c17_i32_45 = arith.constant 17 : i32
    %147 = tpu.dynamic_rotate %146 by %c17_i32_45 dim 1 : vector<4x256xf32>, i32 -> vector<4x256xf32>
    %148 = vector.broadcast %130 : vector<1x256xf32> to vector<4x256xf32>
    %149 = arith.mulf %147, %148 : vector<4x256xf32>
    %cst_46 = arith.constant dense<0.000000e+00> : vector<4x256xf32>
    %150 = tpu.matmul %129, %149, %cst_46 {dimension_numbers = #tpu.dot_dimension_numbers<[1], [0], [0], [1], [0, 0, 1, 1], [], []>} : vector<4x4xf32>, vector<4x256xf32>, vector<4x256xf32> -> vector<4x256xf32>
    %151 = arith.addf %120, %150 : vector<4x256xf32>
    %152 = vector.extract_strided_slice %96 {offsets = [3, 0, 0], sizes = [1, 4, 256], strides = [1, 1, 1]} : vector<4x4x256xf32> to vector<1x4x256xf32>
    %153 = vector.shape_cast %152 : vector<1x4x256xf32> to vector<4x256xf32>
    %c17_i32_47 = arith.constant 17 : i32
    %154 = tpu.dynamic_rotate %153 by %c17_i32_47 dim 1 : vector<4x256xf32>, i32 -> vector<4x256xf32>
    %155 = vector.broadcast %130 : vector<1x256xf32> to vector<4x256xf32>
    %156 = arith.mulf %154, %155 : vector<4x256xf32>
    %cst_48 = arith.constant dense<0.000000e+00> : vector<4x256xf32>
    %157 = tpu.matmul %129, %156, %cst_48 {dimension_numbers = #tpu.dot_dimension_numbers<[1], [0], [0], [1], [0, 0, 1, 1], [], []>} : vector<4x4xf32>, vector<4x256xf32>, vector<4x256xf32> -> vector<4x256xf32>
    %158 = arith.addf %127, %157 : vector<4x256xf32>
    %159 = vector.extract_strided_slice %97 {offsets = [1, 0, 0], sizes = [1, 4, 4], strides = [1, 1, 1]} : vector<9x4x4xf32> to vector<1x4x4xf32>
    %160 = vector.shape_cast %159 : vector<1x4x4xf32> to vector<4x4xf32>
    %161 = vector.extract_strided_slice %98 {offsets = [1, 0], sizes = [1, 256], strides = [1, 1]} : vector<9x256xf32> to vector<1x256xf32>
    %162 = vector.extract_strided_slice %96 {offsets = [0, 0, 0], sizes = [1, 4, 256], strides = [1, 1, 1]} : vector<4x4x256xf32> to vector<1x4x256xf32>
    %163 = vector.shape_cast %162 : vector<1x4x256xf32> to vector<4x256xf32>
    %c16_i32 = arith.constant 16 : i32
    %164 = tpu.dynamic_rotate %163 by %c16_i32 dim 1 : vector<4x256xf32>, i32 -> vector<4x256xf32>
    %165 = vector.broadcast %161 : vector<1x256xf32> to vector<4x256xf32>
    %166 = arith.mulf %164, %165 : vector<4x256xf32>
    %cst_49 = arith.constant dense<0.000000e+00> : vector<4x256xf32>
    %167 = tpu.matmul %160, %166, %cst_49 {dimension_numbers = #tpu.dot_dimension_numbers<[1], [0], [0], [1], [0, 0, 1, 1], [], []>} : vector<4x4xf32>, vector<4x256xf32>, vector<4x256xf32> -> vector<4x256xf32>
    %168 = arith.addf %137, %167 : vector<4x256xf32>
    %169 = vector.extract_strided_slice %96 {offsets = [1, 0, 0], sizes = [1, 4, 256], strides = [1, 1, 1]} : vector<4x4x256xf32> to vector<1x4x256xf32>
    %170 = vector.shape_cast %169 : vector<1x4x256xf32> to vector<4x256xf32>
    %c16_i32_50 = arith.constant 16 : i32
    %171 = tpu.dynamic_rotate %170 by %c16_i32_50 dim 1 : vector<4x256xf32>, i32 -> vector<4x256xf32>
    %172 = vector.broadcast %161 : vector<1x256xf32> to vector<4x256xf32>
    %173 = arith.mulf %171, %172 : vector<4x256xf32>
    %cst_51 = arith.constant dense<0.000000e+00> : vector<4x256xf32>
    %174 = tpu.matmul %160, %173, %cst_51 {dimension_numbers = #tpu.dot_dimension_numbers<[1], [0], [0], [1], [0, 0, 1, 1], [], []>} : vector<4x4xf32>, vector<4x256xf32>, vector<4x256xf32> -> vector<4x256xf32>
    %175 = arith.addf %144, %174 : vector<4x256xf32>
    %176 = vector.extract_strided_slice %96 {offsets = [2, 0, 0], sizes = [1, 4, 256], strides = [1, 1, 1]} : vector<4x4x256xf32> to vector<1x4x256xf32>
    %177 = vector.shape_cast %176 : vector<1x4x256xf32> to vector<4x256xf32>
    %c16_i32_52 = arith.constant 16 : i32
    %178 = tpu.dynamic_rotate %177 by %c16_i32_52 dim 1 : vector<4x256xf32>, i32 -> vector<4x256xf32>
    %179 = vector.broadcast %161 : vector<1x256xf32> to vector<4x256xf32>
    %180 = arith.mulf %178, %179 : vector<4x256xf32>
    %cst_53 = arith.constant dense<0.000000e+00> : vector<4x256xf32>
    %181 = tpu.matmul %160, %180, %cst_53 {dimension_numbers = #tpu.dot_dimension_numbers<[1], [0], [0], [1], [0, 0, 1, 1], [], []>} : vector<4x4xf32>, vector<4x256xf32>, vector<4x256xf32> -> vector<4x256xf32>
    %182 = arith.addf %151, %181 : vector<4x256xf32>
    %183 = vector.extract_strided_slice %96 {offsets = [3, 0, 0], sizes = [1, 4, 256], strides = [1, 1, 1]} : vector<4x4x256xf32> to vector<1x4x256xf32>
    %184 = vector.shape_cast %183 : vector<1x4x256xf32> to vector<4x256xf32>
    %c16_i32_54 = arith.constant 16 : i32
    %185 = tpu.dynamic_rotate %184 by %c16_i32_54 dim 1 : vector<4x256xf32>, i32 -> vector<4x256xf32>
    %186 = vector.broadcast %161 : vector<1x256xf32> to vector<4x256xf32>
    %187 = arith.mulf %185, %186 : vector<4x256xf32>
    %cst_55 = arith.constant dense<0.000000e+00> : vector<4x256xf32>
    %188 = tpu.matmul %160, %187, %cst_55 {dimension_numbers = #tpu.dot_dimension_numbers<[1], [0], [0], [1], [0, 0, 1, 1], [], []>} : vector<4x4xf32>, vector<4x256xf32>, vector<4x256xf32> -> vector<4x256xf32>
    %189 = arith.addf %158, %188 : vector<4x256xf32>
    %190 = vector.extract_strided_slice %97 {offsets = [2, 0, 0], sizes = [1, 4, 4], strides = [1, 1, 1]} : vector<9x4x4xf32> to vector<1x4x4xf32>
    %191 = vector.shape_cast %190 : vector<1x4x4xf32> to vector<4x4xf32>
    %192 = vector.extract_strided_slice %98 {offsets = [2, 0], sizes = [1, 256], strides = [1, 1]} : vector<9x256xf32> to vector<1x256xf32>
    %193 = vector.extract_strided_slice %96 {offsets = [0, 0, 0], sizes = [1, 4, 256], strides = [1, 1, 1]} : vector<4x4x256xf32> to vector<1x4x256xf32>
    %194 = vector.shape_cast %193 : vector<1x4x256xf32> to vector<4x256xf32>
    %c15_i32 = arith.constant 15 : i32
    %195 = tpu.dynamic_rotate %194 by %c15_i32 dim 1 : vector<4x256xf32>, i32 -> vector<4x256xf32>
    %196 = vector.broadcast %192 : vector<1x256xf32> to vector<4x256xf32>
    %197 = arith.mulf %195, %196 : vector<4x256xf32>
    %cst_56 = arith.constant dense<0.000000e+00> : vector<4x256xf32>
    %198 = tpu.matmul %191, %197, %cst_56 {dimension_numbers = #tpu.dot_dimension_numbers<[1], [0], [0], [1], [0, 0, 1, 1], [], []>} : vector<4x4xf32>, vector<4x256xf32>, vector<4x256xf32> -> vector<4x256xf32>
    %199 = arith.addf %168, %198 : vector<4x256xf32>
    %200 = vector.extract_strided_slice %96 {offsets = [1, 0, 0], sizes = [1, 4, 256], strides = [1, 1, 1]} : vector<4x4x256xf32> to vector<1x4x256xf32>
    %201 = vector.shape_cast %200 : vector<1x4x256xf32> to vector<4x256xf32>
    %c15_i32_57 = arith.constant 15 : i32
    %202 = tpu.dynamic_rotate %201 by %c15_i32_57 dim 1 : vector<4x256xf32>, i32 -> vector<4x256xf32>
    %203 = vector.broadcast %192 : vector<1x256xf32> to vector<4x256xf32>
    %204 = arith.mulf %202, %203 : vector<4x256xf32>
    %cst_58 = arith.constant dense<0.000000e+00> : vector<4x256xf32>
    %205 = tpu.matmul %191, %204, %cst_58 {dimension_numbers = #tpu.dot_dimension_numbers<[1], [0], [0], [1], [0, 0, 1, 1], [], []>} : vector<4x4xf32>, vector<4x256xf32>, vector<4x256xf32> -> vector<4x256xf32>
    %206 = arith.addf %175, %205 : vector<4x256xf32>
    %207 = vector.extract_strided_slice %96 {offsets = [2, 0, 0], sizes = [1, 4, 256], strides = [1, 1, 1]} : vector<4x4x256xf32> to vector<1x4x256xf32>
    %208 = vector.shape_cast %207 : vector<1x4x256xf32> to vector<4x256xf32>
    %c15_i32_59 = arith.constant 15 : i32
    %209 = tpu.dynamic_rotate %208 by %c15_i32_59 dim 1 : vector<4x256xf32>, i32 -> vector<4x256xf32>
    %210 = vector.broadcast %192 : vector<1x256xf32> to vector<4x256xf32>
    %211 = arith.mulf %209, %210 : vector<4x256xf32>
    %cst_60 = arith.constant dense<0.000000e+00> : vector<4x256xf32>
    %212 = tpu.matmul %191, %211, %cst_60 {dimension_numbers = #tpu.dot_dimension_numbers<[1], [0], [0], [1], [0, 0, 1, 1], [], []>} : vector<4x4xf32>, vector<4x256xf32>, vector<4x256xf32> -> vector<4x256xf32>
    %213 = arith.addf %182, %212 : vector<4x256xf32>
    %214 = vector.extract_strided_slice %96 {offsets = [3, 0, 0], sizes = [1, 4, 256], strides = [1, 1, 1]} : vector<4x4x256xf32> to vector<1x4x256xf32>
    %215 = vector.shape_cast %214 : vector<1x4x256xf32> to vector<4x256xf32>
    %c15_i32_61 = arith.constant 15 : i32
    %216 = tpu.dynamic_rotate %215 by %c15_i32_61 dim 1 : vector<4x256xf32>, i32 -> vector<4x256xf32>
    %217 = vector.broadcast %192 : vector<1x256xf32> to vector<4x256xf32>
    %218 = arith.mulf %216, %217 : vector<4x256xf32>
    %cst_62 = arith.constant dense<0.000000e+00> : vector<4x256xf32>
    %219 = tpu.matmul %191, %218, %cst_62 {dimension_numbers = #tpu.dot_dimension_numbers<[1], [0], [0], [1], [0, 0, 1, 1], [], []>} : vector<4x4xf32>, vector<4x256xf32>, vector<4x256xf32> -> vector<4x256xf32>
    %220 = arith.addf %189, %219 : vector<4x256xf32>
    %221 = vector.extract_strided_slice %97 {offsets = [3, 0, 0], sizes = [1, 4, 4], strides = [1, 1, 1]} : vector<9x4x4xf32> to vector<1x4x4xf32>
    %222 = vector.shape_cast %221 : vector<1x4x4xf32> to vector<4x4xf32>
    %223 = vector.extract_strided_slice %98 {offsets = [3, 0], sizes = [1, 256], strides = [1, 1]} : vector<9x256xf32> to vector<1x256xf32>
    %224 = vector.extract_strided_slice %96 {offsets = [0, 0, 0], sizes = [1, 4, 256], strides = [1, 1, 1]} : vector<4x4x256xf32> to vector<1x4x256xf32>
    %225 = vector.shape_cast %224 : vector<1x4x256xf32> to vector<4x256xf32>
    %c1_i32 = arith.constant 1 : i32
    %226 = tpu.dynamic_rotate %225 by %c1_i32 dim 1 : vector<4x256xf32>, i32 -> vector<4x256xf32>
    %227 = vector.broadcast %223 : vector<1x256xf32> to vector<4x256xf32>
    %228 = arith.mulf %226, %227 : vector<4x256xf32>
    %cst_63 = arith.constant dense<0.000000e+00> : vector<4x256xf32>
    %229 = tpu.matmul %222, %228, %cst_63 {dimension_numbers = #tpu.dot_dimension_numbers<[1], [0], [0], [1], [0, 0, 1, 1], [], []>} : vector<4x4xf32>, vector<4x256xf32>, vector<4x256xf32> -> vector<4x256xf32>
    %230 = arith.addf %199, %229 : vector<4x256xf32>
    %231 = vector.extract_strided_slice %96 {offsets = [1, 0, 0], sizes = [1, 4, 256], strides = [1, 1, 1]} : vector<4x4x256xf32> to vector<1x4x256xf32>
    %232 = vector.shape_cast %231 : vector<1x4x256xf32> to vector<4x256xf32>
    %c1_i32_64 = arith.constant 1 : i32
    %233 = tpu.dynamic_rotate %232 by %c1_i32_64 dim 1 : vector<4x256xf32>, i32 -> vector<4x256xf32>
    %234 = vector.broadcast %223 : vector<1x256xf32> to vector<4x256xf32>
    %235 = arith.mulf %233, %234 : vector<4x256xf32>
    %cst_65 = arith.constant dense<0.000000e+00> : vector<4x256xf32>
    %236 = tpu.matmul %222, %235, %cst_65 {dimension_numbers = #tpu.dot_dimension_numbers<[1], [0], [0], [1], [0, 0, 1, 1], [], []>} : vector<4x4xf32>, vector<4x256xf32>, vector<4x256xf32> -> vector<4x256xf32>
    %237 = arith.addf %206, %236 : vector<4x256xf32>
    %238 = vector.extract_strided_slice %96 {offsets = [2, 0, 0], sizes = [1, 4, 256], strides = [1, 1, 1]} : vector<4x4x256xf32> to vector<1x4x256xf32>
    %239 = vector.shape_cast %238 : vector<1x4x256xf32> to vector<4x256xf32>
    %c1_i32_66 = arith.constant 1 : i32
    %240 = tpu.dynamic_rotate %239 by %c1_i32_66 dim 1 : vector<4x256xf32>, i32 -> vector<4x256xf32>
    %241 = vector.broadcast %223 : vector<1x256xf32> to vector<4x256xf32>
    %242 = arith.mulf %240, %241 : vector<4x256xf32>
    %cst_67 = arith.constant dense<0.000000e+00> : vector<4x256xf32>
    %243 = tpu.matmul %222, %242, %cst_67 {dimension_numbers = #tpu.dot_dimension_numbers<[1], [0], [0], [1], [0, 0, 1, 1], [], []>} : vector<4x4xf32>, vector<4x256xf32>, vector<4x256xf32> -> vector<4x256xf32>
    %244 = arith.addf %213, %243 : vector<4x256xf32>
    %245 = vector.extract_strided_slice %96 {offsets = [3, 0, 0], sizes = [1, 4, 256], strides = [1, 1, 1]} : vector<4x4x256xf32> to vector<1x4x256xf32>
    %246 = vector.shape_cast %245 : vector<1x4x256xf32> to vector<4x256xf32>
    %c1_i32_68 = arith.constant 1 : i32
    %247 = tpu.dynamic_rotate %246 by %c1_i32_68 dim 1 : vector<4x256xf32>, i32 -> vector<4x256xf32>
    %248 = vector.broadcast %223 : vector<1x256xf32> to vector<4x256xf32>
    %249 = arith.mulf %247, %248 : vector<4x256xf32>
    %cst_69 = arith.constant dense<0.000000e+00> : vector<4x256xf32>
    %250 = tpu.matmul %222, %249, %cst_69 {dimension_numbers = #tpu.dot_dimension_numbers<[1], [0], [0], [1], [0, 0, 1, 1], [], []>} : vector<4x4xf32>, vector<4x256xf32>, vector<4x256xf32> -> vector<4x256xf32>
    %251 = arith.addf %220, %250 : vector<4x256xf32>
    %252 = vector.extract_strided_slice %97 {offsets = [5, 0, 0], sizes = [1, 4, 4], strides = [1, 1, 1]} : vector<9x4x4xf32> to vector<1x4x4xf32>
    %253 = vector.shape_cast %252 : vector<1x4x4xf32> to vector<4x4xf32>
    %254 = vector.extract_strided_slice %98 {offsets = [5, 0], sizes = [1, 256], strides = [1, 1]} : vector<9x256xf32> to vector<1x256xf32>
    %255 = vector.extract_strided_slice %96 {offsets = [0, 0, 0], sizes = [1, 4, 256], strides = [1, 1, 1]} : vector<4x4x256xf32> to vector<1x4x256xf32>
    %256 = vector.shape_cast %255 : vector<1x4x256xf32> to vector<4x256xf32>
    %c255_i32 = arith.constant 255 : i32
    %257 = tpu.dynamic_rotate %256 by %c255_i32 dim 1 : vector<4x256xf32>, i32 -> vector<4x256xf32>
    %258 = vector.broadcast %254 : vector<1x256xf32> to vector<4x256xf32>
    %259 = arith.mulf %257, %258 : vector<4x256xf32>
    %cst_70 = arith.constant dense<0.000000e+00> : vector<4x256xf32>
    %260 = tpu.matmul %253, %259, %cst_70 {dimension_numbers = #tpu.dot_dimension_numbers<[1], [0], [0], [1], [0, 0, 1, 1], [], []>} : vector<4x4xf32>, vector<4x256xf32>, vector<4x256xf32> -> vector<4x256xf32>
    %261 = arith.addf %230, %260 : vector<4x256xf32>
    %262 = vector.extract_strided_slice %96 {offsets = [1, 0, 0], sizes = [1, 4, 256], strides = [1, 1, 1]} : vector<4x4x256xf32> to vector<1x4x256xf32>
    %263 = vector.shape_cast %262 : vector<1x4x256xf32> to vector<4x256xf32>
    %c255_i32_71 = arith.constant 255 : i32
    %264 = tpu.dynamic_rotate %263 by %c255_i32_71 dim 1 : vector<4x256xf32>, i32 -> vector<4x256xf32>
    %265 = vector.broadcast %254 : vector<1x256xf32> to vector<4x256xf32>
    %266 = arith.mulf %264, %265 : vector<4x256xf32>
    %cst_72 = arith.constant dense<0.000000e+00> : vector<4x256xf32>
    %267 = tpu.matmul %253, %266, %cst_72 {dimension_numbers = #tpu.dot_dimension_numbers<[1], [0], [0], [1], [0, 0, 1, 1], [], []>} : vector<4x4xf32>, vector<4x256xf32>, vector<4x256xf32> -> vector<4x256xf32>
    %268 = arith.addf %237, %267 : vector<4x256xf32>
    %269 = vector.extract_strided_slice %96 {offsets = [2, 0, 0], sizes = [1, 4, 256], strides = [1, 1, 1]} : vector<4x4x256xf32> to vector<1x4x256xf32>
    %270 = vector.shape_cast %269 : vector<1x4x256xf32> to vector<4x256xf32>
    %c255_i32_73 = arith.constant 255 : i32
    %271 = tpu.dynamic_rotate %270 by %c255_i32_73 dim 1 : vector<4x256xf32>, i32 -> vector<4x256xf32>
    %272 = vector.broadcast %254 : vector<1x256xf32> to vector<4x256xf32>
    %273 = arith.mulf %271, %272 : vector<4x256xf32>
    %cst_74 = arith.constant dense<0.000000e+00> : vector<4x256xf32>
    %274 = tpu.matmul %253, %273, %cst_74 {dimension_numbers = #tpu.dot_dimension_numbers<[1], [0], [0], [1], [0, 0, 1, 1], [], []>} : vector<4x4xf32>, vector<4x256xf32>, vector<4x256xf32> -> vector<4x256xf32>
    %275 = arith.addf %244, %274 : vector<4x256xf32>
    %276 = vector.extract_strided_slice %96 {offsets = [3, 0, 0], sizes = [1, 4, 256], strides = [1, 1, 1]} : vector<4x4x256xf32> to vector<1x4x256xf32>
    %277 = vector.shape_cast %276 : vector<1x4x256xf32> to vector<4x256xf32>
    %c255_i32_75 = arith.constant 255 : i32
    %278 = tpu.dynamic_rotate %277 by %c255_i32_75 dim 1 : vector<4x256xf32>, i32 -> vector<4x256xf32>
    %279 = vector.broadcast %254 : vector<1x256xf32> to vector<4x256xf32>
    %280 = arith.mulf %278, %279 : vector<4x256xf32>
    %cst_76 = arith.constant dense<0.000000e+00> : vector<4x256xf32>
    %281 = tpu.matmul %253, %280, %cst_76 {dimension_numbers = #tpu.dot_dimension_numbers<[1], [0], [0], [1], [0, 0, 1, 1], [], []>} : vector<4x4xf32>, vector<4x256xf32>, vector<4x256xf32> -> vector<4x256xf32>
    %282 = arith.addf %251, %281 : vector<4x256xf32>
    %283 = vector.extract_strided_slice %97 {offsets = [6, 0, 0], sizes = [1, 4, 4], strides = [1, 1, 1]} : vector<9x4x4xf32> to vector<1x4x4xf32>
    %284 = vector.shape_cast %283 : vector<1x4x4xf32> to vector<4x4xf32>
    %285 = vector.extract_strided_slice %98 {offsets = [6, 0], sizes = [1, 256], strides = [1, 1]} : vector<9x256xf32> to vector<1x256xf32>
    %286 = vector.extract_strided_slice %96 {offsets = [0, 0, 0], sizes = [1, 4, 256], strides = [1, 1, 1]} : vector<4x4x256xf32> to vector<1x4x256xf32>
    %287 = vector.shape_cast %286 : vector<1x4x256xf32> to vector<4x256xf32>
    %c241_i32 = arith.constant 241 : i32
    %288 = tpu.dynamic_rotate %287 by %c241_i32 dim 1 : vector<4x256xf32>, i32 -> vector<4x256xf32>
    %289 = vector.broadcast %285 : vector<1x256xf32> to vector<4x256xf32>
    %290 = arith.mulf %288, %289 : vector<4x256xf32>
    %cst_77 = arith.constant dense<0.000000e+00> : vector<4x256xf32>
    %291 = tpu.matmul %284, %290, %cst_77 {dimension_numbers = #tpu.dot_dimension_numbers<[1], [0], [0], [1], [0, 0, 1, 1], [], []>} : vector<4x4xf32>, vector<4x256xf32>, vector<4x256xf32> -> vector<4x256xf32>
    %292 = arith.addf %261, %291 : vector<4x256xf32>
    %293 = vector.extract_strided_slice %96 {offsets = [1, 0, 0], sizes = [1, 4, 256], strides = [1, 1, 1]} : vector<4x4x256xf32> to vector<1x4x256xf32>
    %294 = vector.shape_cast %293 : vector<1x4x256xf32> to vector<4x256xf32>
    %c241_i32_78 = arith.constant 241 : i32
    %295 = tpu.dynamic_rotate %294 by %c241_i32_78 dim 1 : vector<4x256xf32>, i32 -> vector<4x256xf32>
    %296 = vector.broadcast %285 : vector<1x256xf32> to vector<4x256xf32>
    %297 = arith.mulf %295, %296 : vector<4x256xf32>
    %cst_79 = arith.constant dense<0.000000e+00> : vector<4x256xf32>
    %298 = tpu.matmul %284, %297, %cst_79 {dimension_numbers = #tpu.dot_dimension_numbers<[1], [0], [0], [1], [0, 0, 1, 1], [], []>} : vector<4x4xf32>, vector<4x256xf32>, vector<4x256xf32> -> vector<4x256xf32>
    %299 = arith.addf %268, %298 : vector<4x256xf32>
    %300 = vector.extract_strided_slice %96 {offsets = [2, 0, 0], sizes = [1, 4, 256], strides = [1, 1, 1]} : vector<4x4x256xf32> to vector<1x4x256xf32>
    %301 = vector.shape_cast %300 : vector<1x4x256xf32> to vector<4x256xf32>
    %c241_i32_80 = arith.constant 241 : i32
    %302 = tpu.dynamic_rotate %301 by %c241_i32_80 dim 1 : vector<4x256xf32>, i32 -> vector<4x256xf32>
    %303 = vector.broadcast %285 : vector<1x256xf32> to vector<4x256xf32>
    %304 = arith.mulf %302, %303 : vector<4x256xf32>
    %cst_81 = arith.constant dense<0.000000e+00> : vector<4x256xf32>
    %305 = tpu.matmul %284, %304, %cst_81 {dimension_numbers = #tpu.dot_dimension_numbers<[1], [0], [0], [1], [0, 0, 1, 1], [], []>} : vector<4x4xf32>, vector<4x256xf32>, vector<4x256xf32> -> vector<4x256xf32>
    %306 = arith.addf %275, %305 : vector<4x256xf32>
    %307 = vector.extract_strided_slice %96 {offsets = [3, 0, 0], sizes = [1, 4, 256], strides = [1, 1, 1]} : vector<4x4x256xf32> to vector<1x4x256xf32>
    %308 = vector.shape_cast %307 : vector<1x4x256xf32> to vector<4x256xf32>
    %c241_i32_82 = arith.constant 241 : i32
    %309 = tpu.dynamic_rotate %308 by %c241_i32_82 dim 1 : vector<4x256xf32>, i32 -> vector<4x256xf32>
    %310 = vector.broadcast %285 : vector<1x256xf32> to vector<4x256xf32>
    %311 = arith.mulf %309, %310 : vector<4x256xf32>
    %cst_83 = arith.constant dense<0.000000e+00> : vector<4x256xf32>
    %312 = tpu.matmul %284, %311, %cst_83 {dimension_numbers = #tpu.dot_dimension_numbers<[1], [0], [0], [1], [0, 0, 1, 1], [], []>} : vector<4x4xf32>, vector<4x256xf32>, vector<4x256xf32> -> vector<4x256xf32>
    %313 = arith.addf %282, %312 : vector<4x256xf32>
    %314 = vector.extract_strided_slice %97 {offsets = [7, 0, 0], sizes = [1, 4, 4], strides = [1, 1, 1]} : vector<9x4x4xf32> to vector<1x4x4xf32>
    %315 = vector.shape_cast %314 : vector<1x4x4xf32> to vector<4x4xf32>
    %316 = vector.extract_strided_slice %98 {offsets = [7, 0], sizes = [1, 256], strides = [1, 1]} : vector<9x256xf32> to vector<1x256xf32>
    %317 = vector.extract_strided_slice %96 {offsets = [0, 0, 0], sizes = [1, 4, 256], strides = [1, 1, 1]} : vector<4x4x256xf32> to vector<1x4x256xf32>
    %318 = vector.shape_cast %317 : vector<1x4x256xf32> to vector<4x256xf32>
    %c240_i32 = arith.constant 240 : i32
    %319 = tpu.dynamic_rotate %318 by %c240_i32 dim 1 : vector<4x256xf32>, i32 -> vector<4x256xf32>
    %320 = vector.broadcast %316 : vector<1x256xf32> to vector<4x256xf32>
    %321 = arith.mulf %319, %320 : vector<4x256xf32>
    %cst_84 = arith.constant dense<0.000000e+00> : vector<4x256xf32>
    %322 = tpu.matmul %315, %321, %cst_84 {dimension_numbers = #tpu.dot_dimension_numbers<[1], [0], [0], [1], [0, 0, 1, 1], [], []>} : vector<4x4xf32>, vector<4x256xf32>, vector<4x256xf32> -> vector<4x256xf32>
    %323 = arith.addf %292, %322 : vector<4x256xf32>
    %324 = vector.extract_strided_slice %96 {offsets = [1, 0, 0], sizes = [1, 4, 256], strides = [1, 1, 1]} : vector<4x4x256xf32> to vector<1x4x256xf32>
    %325 = vector.shape_cast %324 : vector<1x4x256xf32> to vector<4x256xf32>
    %c240_i32_85 = arith.constant 240 : i32
    %326 = tpu.dynamic_rotate %325 by %c240_i32_85 dim 1 : vector<4x256xf32>, i32 -> vector<4x256xf32>
    %327 = vector.broadcast %316 : vector<1x256xf32> to vector<4x256xf32>
    %328 = arith.mulf %326, %327 : vector<4x256xf32>
    %cst_86 = arith.constant dense<0.000000e+00> : vector<4x256xf32>
    %329 = tpu.matmul %315, %328, %cst_86 {dimension_numbers = #tpu.dot_dimension_numbers<[1], [0], [0], [1], [0, 0, 1, 1], [], []>} : vector<4x4xf32>, vector<4x256xf32>, vector<4x256xf32> -> vector<4x256xf32>
    %330 = arith.addf %299, %329 : vector<4x256xf32>
    %331 = vector.extract_strided_slice %96 {offsets = [2, 0, 0], sizes = [1, 4, 256], strides = [1, 1, 1]} : vector<4x4x256xf32> to vector<1x4x256xf32>
    %332 = vector.shape_cast %331 : vector<1x4x256xf32> to vector<4x256xf32>
    %c240_i32_87 = arith.constant 240 : i32
    %333 = tpu.dynamic_rotate %332 by %c240_i32_87 dim 1 : vector<4x256xf32>, i32 -> vector<4x256xf32>
    %334 = vector.broadcast %316 : vector<1x256xf32> to vector<4x256xf32>
    %335 = arith.mulf %333, %334 : vector<4x256xf32>
    %cst_88 = arith.constant dense<0.000000e+00> : vector<4x256xf32>
    %336 = tpu.matmul %315, %335, %cst_88 {dimension_numbers = #tpu.dot_dimension_numbers<[1], [0], [0], [1], [0, 0, 1, 1], [], []>} : vector<4x4xf32>, vector<4x256xf32>, vector<4x256xf32> -> vector<4x256xf32>
    %337 = arith.addf %306, %336 : vector<4x256xf32>
    %338 = vector.extract_strided_slice %96 {offsets = [3, 0, 0], sizes = [1, 4, 256], strides = [1, 1, 1]} : vector<4x4x256xf32> to vector<1x4x256xf32>
    %339 = vector.shape_cast %338 : vector<1x4x256xf32> to vector<4x256xf32>
    %c240_i32_89 = arith.constant 240 : i32
    %340 = tpu.dynamic_rotate %339 by %c240_i32_89 dim 1 : vector<4x256xf32>, i32 -> vector<4x256xf32>
    %341 = vector.broadcast %316 : vector<1x256xf32> to vector<4x256xf32>
    %342 = arith.mulf %340, %341 : vector<4x256xf32>
    %cst_90 = arith.constant dense<0.000000e+00> : vector<4x256xf32>
    %343 = tpu.matmul %315, %342, %cst_90 {dimension_numbers = #tpu.dot_dimension_numbers<[1], [0], [0], [1], [0, 0, 1, 1], [], []>} : vector<4x4xf32>, vector<4x256xf32>, vector<4x256xf32> -> vector<4x256xf32>
    %344 = arith.addf %313, %343 : vector<4x256xf32>
    %345 = vector.extract_strided_slice %97 {offsets = [8, 0, 0], sizes = [1, 4, 4], strides = [1, 1, 1]} : vector<9x4x4xf32> to vector<1x4x4xf32>
    %346 = vector.shape_cast %345 : vector<1x4x4xf32> to vector<4x4xf32>
    %347 = vector.extract_strided_slice %98 {offsets = [8, 0], sizes = [1, 256], strides = [1, 1]} : vector<9x256xf32> to vector<1x256xf32>
    %348 = vector.extract_strided_slice %96 {offsets = [0, 0, 0], sizes = [1, 4, 256], strides = [1, 1, 1]} : vector<4x4x256xf32> to vector<1x4x256xf32>
    %349 = vector.shape_cast %348 : vector<1x4x256xf32> to vector<4x256xf32>
    %c239_i32 = arith.constant 239 : i32
    %350 = tpu.dynamic_rotate %349 by %c239_i32 dim 1 : vector<4x256xf32>, i32 -> vector<4x256xf32>
    %351 = vector.broadcast %347 : vector<1x256xf32> to vector<4x256xf32>
    %352 = arith.mulf %350, %351 : vector<4x256xf32>
    %cst_91 = arith.constant dense<0.000000e+00> : vector<4x256xf32>
    %353 = tpu.matmul %346, %352, %cst_91 {dimension_numbers = #tpu.dot_dimension_numbers<[1], [0], [0], [1], [0, 0, 1, 1], [], []>} : vector<4x4xf32>, vector<4x256xf32>, vector<4x256xf32> -> vector<4x256xf32>
    %354 = arith.addf %323, %353 : vector<4x256xf32>
    %355 = vector.extract_strided_slice %96 {offsets = [1, 0, 0], sizes = [1, 4, 256], strides = [1, 1, 1]} : vector<4x4x256xf32> to vector<1x4x256xf32>
    %356 = vector.shape_cast %355 : vector<1x4x256xf32> to vector<4x256xf32>
    %c239_i32_92 = arith.constant 239 : i32
    %357 = tpu.dynamic_rotate %356 by %c239_i32_92 dim 1 : vector<4x256xf32>, i32 -> vector<4x256xf32>
    %358 = vector.broadcast %347 : vector<1x256xf32> to vector<4x256xf32>
    %359 = arith.mulf %357, %358 : vector<4x256xf32>
    %cst_93 = arith.constant dense<0.000000e+00> : vector<4x256xf32>
    %360 = tpu.matmul %346, %359, %cst_93 {dimension_numbers = #tpu.dot_dimension_numbers<[1], [0], [0], [1], [0, 0, 1, 1], [], []>} : vector<4x4xf32>, vector<4x256xf32>, vector<4x256xf32> -> vector<4x256xf32>
    %361 = arith.addf %330, %360 : vector<4x256xf32>
    %362 = vector.extract_strided_slice %96 {offsets = [2, 0, 0], sizes = [1, 4, 256], strides = [1, 1, 1]} : vector<4x4x256xf32> to vector<1x4x256xf32>
    %363 = vector.shape_cast %362 : vector<1x4x256xf32> to vector<4x256xf32>
    %c239_i32_94 = arith.constant 239 : i32
    %364 = tpu.dynamic_rotate %363 by %c239_i32_94 dim 1 : vector<4x256xf32>, i32 -> vector<4x256xf32>
    %365 = vector.broadcast %347 : vector<1x256xf32> to vector<4x256xf32>
    %366 = arith.mulf %364, %365 : vector<4x256xf32>
    %cst_95 = arith.constant dense<0.000000e+00> : vector<4x256xf32>
    %367 = tpu.matmul %346, %366, %cst_95 {dimension_numbers = #tpu.dot_dimension_numbers<[1], [0], [0], [1], [0, 0, 1, 1], [], []>} : vector<4x4xf32>, vector<4x256xf32>, vector<4x256xf32> -> vector<4x256xf32>
    %368 = arith.addf %337, %367 : vector<4x256xf32>
    %369 = vector.extract_strided_slice %96 {offsets = [3, 0, 0], sizes = [1, 4, 256], strides = [1, 1, 1]} : vector<4x4x256xf32> to vector<1x4x256xf32>
    %370 = vector.shape_cast %369 : vector<1x4x256xf32> to vector<4x256xf32>
    %c239_i32_96 = arith.constant 239 : i32
    %371 = tpu.dynamic_rotate %370 by %c239_i32_96 dim 1 : vector<4x256xf32>, i32 -> vector<4x256xf32>
    %372 = vector.broadcast %347 : vector<1x256xf32> to vector<4x256xf32>
    %373 = arith.mulf %371, %372 : vector<4x256xf32>
    %cst_97 = arith.constant dense<0.000000e+00> : vector<4x256xf32>
    %374 = tpu.matmul %346, %373, %cst_97 {dimension_numbers = #tpu.dot_dimension_numbers<[1], [0], [0], [1], [0, 0, 1, 1], [], []>} : vector<4x4xf32>, vector<4x256xf32>, vector<4x256xf32> -> vector<4x256xf32>
    %375 = arith.addf %344, %374 : vector<4x256xf32>
    %376 = vector.shape_cast %354 : vector<4x256xf32> to vector<1x4x256xf32>
    %377 = vector.shape_cast %361 : vector<4x256xf32> to vector<1x4x256xf32>
    %378 = vector.shape_cast %368 : vector<4x256xf32> to vector<1x4x256xf32>
    %379 = vector.shape_cast %375 : vector<4x256xf32> to vector<1x4x256xf32>
    %380 = tpu.concatenate %376, %377, %378, %379 in 0 : vector<1x4x256xf32>, vector<1x4x256xf32>, vector<1x4x256xf32>, vector<1x4x256xf32> -> vector<4x4x256xf32>
    %cst_98 = arith.constant dense<0.000000e+00> : vector<4x4xf32>
    %381 = vector.multi_reduction <add>, %380, %cst_98 [2] : vector<4x4x256xf32> to vector<4x4xf32>
    %382 = vector.shape_cast %381 : vector<4x4xf32> to vector<4x4x1xf32>
    %cst_99 = arith.constant 3.906250e-03 : f32
    %383 = vector.broadcast %cst_99 : f32 to vector<4x4x1xf32>
    %384 = arith.mulf %382, %383 : vector<4x4x1xf32>
    %385 = vector.broadcast %384 : vector<4x4x1xf32> to vector<4x4x256xf32>
    %386 = arith.subf %380, %385 : vector<4x4x256xf32>
    %387 = arith.mulf %386, %386 : vector<4x4x256xf32>
    %cst_100 = arith.constant dense<0.000000e+00> : vector<4x4xf32>
    %388 = vector.multi_reduction <add>, %387, %cst_100 [2] : vector<4x4x256xf32> to vector<4x4xf32>
    %389 = vector.shape_cast %388 : vector<4x4xf32> to vector<4x4x1xf32>
    %cst_101 = arith.constant 3.906250e-03 : f32
    %390 = vector.broadcast %cst_101 : f32 to vector<4x4x1xf32>
    %391 = arith.mulf %389, %390 : vector<4x4x1xf32>
    %cst_102 = arith.constant 9.99999974E-6 : f32
    %392 = vector.broadcast %cst_102 : f32 to vector<4x4x1xf32>
    %393 = arith.addf %391, %392 : vector<4x4x1xf32>
    %394 = math.rsqrt %393 : vector<4x4x1xf32>
    %395 = vector.broadcast %394 : vector<4x4x1xf32> to vector<4x4x256xf32>
    %396 = arith.mulf %386, %395 : vector<4x4x256xf32>
    %cst_103 = arith.constant 0.000000e+00 : f32
    %397 = vector.broadcast %cst_103 : f32 to vector<4x4x256xf32>
    %398 = arith.cmpf oge, %396, %397 : vector<4x4x256xf32>
    %cst_104 = arith.constant 0.00999999977 : f32
    %399 = vector.broadcast %cst_104 : f32 to vector<4x4x256xf32>
    %400 = arith.mulf %399, %396 : vector<4x4x256xf32>
    %401 = arith.select %398, %396, %400 : vector<4x4x256xi1>, vector<4x4x256xf32>
    %c0_105 = arith.constant 0 : index
    %c0_106 = arith.constant 0 : index
    %402 = vector.load %arg7[%c0_105, %c0_106] : memref<8x4xf32, #tpu.memory_space<vmem>>, vector<8x4xf32>
    %c0_107 = arith.constant 0 : index
    %c0_108 = arith.constant 0 : index
    %403 = vector.load %arg8[%c0_107, %c0_108] : memref<8x1xf32, #tpu.memory_space<vmem>>, vector<8x1xf32>
    %404 = vector.extract_strided_slice %401 {offsets = [0, 0, 0], sizes = [1, 4, 256], strides = [1, 1, 1]} : vector<4x4x256xf32> to vector<1x4x256xf32>
    %405 = vector.shape_cast %404 : vector<1x4x256xf32> to vector<4x256xf32>
    %cst_109 = arith.constant dense<0.000000e+00> : vector<8x256xf32>
    %406 = tpu.matmul %402, %405, %cst_109 {dimension_numbers = #tpu.dot_dimension_numbers<[1], [0], [0], [1], [0, 0, 1, 1], [], []>} : vector<8x4xf32>, vector<4x256xf32>, vector<8x256xf32> -> vector<8x256xf32>
    %407 = vector.broadcast %403 : vector<8x1xf32> to vector<8x256xf32>
    %408 = arith.addf %406, %407 : vector<8x256xf32>
    %409 = vector.extract_strided_slice %401 {offsets = [1, 0, 0], sizes = [1, 4, 256], strides = [1, 1, 1]} : vector<4x4x256xf32> to vector<1x4x256xf32>
    %410 = vector.shape_cast %409 : vector<1x4x256xf32> to vector<4x256xf32>
    %cst_110 = arith.constant dense<0.000000e+00> : vector<8x256xf32>
    %411 = tpu.matmul %402, %410, %cst_110 {dimension_numbers = #tpu.dot_dimension_numbers<[1], [0], [0], [1], [0, 0, 1, 1], [], []>} : vector<8x4xf32>, vector<4x256xf32>, vector<8x256xf32> -> vector<8x256xf32>
    %412 = vector.broadcast %403 : vector<8x1xf32> to vector<8x256xf32>
    %413 = arith.addf %411, %412 : vector<8x256xf32>
    %414 = vector.extract_strided_slice %401 {offsets = [2, 0, 0], sizes = [1, 4, 256], strides = [1, 1, 1]} : vector<4x4x256xf32> to vector<1x4x256xf32>
    %415 = vector.shape_cast %414 : vector<1x4x256xf32> to vector<4x256xf32>
    %cst_111 = arith.constant dense<0.000000e+00> : vector<8x256xf32>
    %416 = tpu.matmul %402, %415, %cst_111 {dimension_numbers = #tpu.dot_dimension_numbers<[1], [0], [0], [1], [0, 0, 1, 1], [], []>} : vector<8x4xf32>, vector<4x256xf32>, vector<8x256xf32> -> vector<8x256xf32>
    %417 = vector.broadcast %403 : vector<8x1xf32> to vector<8x256xf32>
    %418 = arith.addf %416, %417 : vector<8x256xf32>
    %419 = vector.extract_strided_slice %401 {offsets = [3, 0, 0], sizes = [1, 4, 256], strides = [1, 1, 1]} : vector<4x4x256xf32> to vector<1x4x256xf32>
    %420 = vector.shape_cast %419 : vector<1x4x256xf32> to vector<4x256xf32>
    %cst_112 = arith.constant dense<0.000000e+00> : vector<8x256xf32>
    %421 = tpu.matmul %402, %420, %cst_112 {dimension_numbers = #tpu.dot_dimension_numbers<[1], [0], [0], [1], [0, 0, 1, 1], [], []>} : vector<8x4xf32>, vector<4x256xf32>, vector<8x256xf32> -> vector<8x256xf32>
    %422 = vector.broadcast %403 : vector<8x1xf32> to vector<8x256xf32>
    %423 = arith.addf %421, %422 : vector<8x256xf32>
    %424 = vector.shape_cast %408 : vector<8x256xf32> to vector<1x8x256xf32>
    %425 = vector.shape_cast %413 : vector<8x256xf32> to vector<1x8x256xf32>
    %426 = vector.shape_cast %418 : vector<8x256xf32> to vector<1x8x256xf32>
    %427 = vector.shape_cast %423 : vector<8x256xf32> to vector<1x8x256xf32>
    %428 = tpu.concatenate %424, %425, %426, %427 in 0 : vector<1x8x256xf32>, vector<1x8x256xf32>, vector<1x8x256xf32>, vector<1x8x256xf32> -> vector<4x8x256xf32>
    %429 = arith.addf %428, %27 : vector<4x8x256xf32>
    %c0_113 = arith.constant 0 : index
    %c0_114 = arith.constant 0 : index
    %c0_115 = arith.constant 0 : index
    %430 = vector.load %arg11[%c0_113, %c0_114, %c0_115] : memref<4x8x256xf32, #tpu.memory_space<vmem>>, vector<4x8x256xf32>
    tpu.vector_store %arg11[%c0_113, %c0_114, %c0_115], %429 {strides = array<i32>} : memref<4x8x256xf32, #tpu.memory_space<vmem>>, vector<4x8x256xf32>,
    return
  }
  func.func @transform_0(%arg0: i32) -> (i32, i32, i32) {
    %c0_i32 = arith.constant 0 : i32
    %c0_i32_0 = arith.constant 0 : i32
    %c0_i32_1 = arith.constant 0 : i32
    return %arg0, %c0_i32, %c0_i32_0 : i32, i32, i32
  }
  func.func @transform_1(%arg0: i32) -> (i32, i32) {
    %c0_i32 = arith.constant 0 : i32
    %c0_i32_0 = arith.constant 0 : i32
    %c0_i32_1 = arith.constant 0 : i32
    return %c0_i32, %c0_i32_0 : i32, i32
  }
  func.func @transform_2(%arg0: i32) -> (i32, i32) {
    %c0_i32 = arith.constant 0 : i32
    %c0_i32_0 = arith.constant 0 : i32
    %c0_i32_1 = arith.constant 0 : i32
    return %c0_i32, %c0_i32_0 : i32, i32
  }
  func.func @transform_3(%arg0: i32) -> (i32, i32) {
    %c0_i32 = arith.constant 0 : i32
    %c0_i32_0 = arith.constant 0 : i32
    %c0_i32_1 = arith.constant 0 : i32
    return %c0_i32, %c0_i32_0 : i32, i32
  }
  func.func @transform_4(%arg0: i32) -> (i32, i32, i32) {
    %c0_i32 = arith.constant 0 : i32
    %c0_i32_0 = arith.constant 0 : i32
    %c0_i32_1 = arith.constant 0 : i32
    %c0_i32_2 = arith.constant 0 : i32
    return %c0_i32, %c0_i32_0, %c0_i32_1 : i32, i32, i32
  }
  func.func @transform_5(%arg0: i32) -> (i32, i32) {
    %c0_i32 = arith.constant 0 : i32
    %c0_i32_0 = arith.constant 0 : i32
    %c0_i32_1 = arith.constant 0 : i32
    return %c0_i32, %c0_i32_0 : i32, i32
  }
  func.func @transform_6(%arg0: i32) -> (i32, i32) {
    %c0_i32 = arith.constant 0 : i32
    %c0_i32_0 = arith.constant 0 : i32
    %c0_i32_1 = arith.constant 0 : i32
    return %c0_i32, %c0_i32_0 : i32, i32
  }
  func.func @transform_7(%arg0: i32) -> (i32, i32) {
    %c0_i32 = arith.constant 0 : i32
    %c0_i32_0 = arith.constant 0 : i32
    %c0_i32_1 = arith.constant 0 : i32
    return %c0_i32, %c0_i32_0 : i32, i32
  }
  func.func @transform_8(%arg0: i32) -> (i32, i32) {
    %c0_i32 = arith.constant 0 : i32
    %c0_i32_0 = arith.constant 0 : i32
    %c0_i32_1 = arith.constant 0 : i32
    return %c0_i32, %c0_i32_0 : i32, i32
  }
  func.func @transform_9(%arg0: i32) -> (i32, i32) {
    %c0_i32 = arith.constant 0 : i32
    %c0_i32_0 = arith.constant 0 : i32
    %c0_i32_1 = arith.constant 0 : i32
    return %c0_i32, %c0_i32_0 : i32, i32
  }
  func.func @transform_10(%arg0: i32) -> (i32, i32, i32) {
    %c0_i32 = arith.constant 0 : i32
    %c0_i32_0 = arith.constant 0 : i32
    %c0_i32_1 = arith.constant 0 : i32
    return %arg0, %c0_i32, %c0_i32_0 : i32, i32, i32
  }
}

</mosaic_0001>

<llo_original>
// kernel: tpu_custom_call.1
$region0: #{tpu_custom_call.1}
  #allocation0 [shape = 'u32[]', space=smem, size = 0x4, offset = 0x4, fixed_abs, tag = 'smem constant byte address 0x4 - core index']
  #allocation1 [shape = 'u32[144,128]{1,0:T(1,128)}', space=vmem, size = 0x12000, scoped, tag = 'internal scratch']
  %s0 = inlined_call_operand.hbm [shape: f32[8,128], index: 0, kind: input, shape index: {}]
  %s1 = inlined_call_operand.hbm [shape: f32[8,128], index: 1, kind: output, shape index: {}]
  %s2 = sld [smem:[#allocation0]]
  $region41: #{tpu_custom_call.1} parent=0
    _
  %s4 = ssub.s32 1, %s2
  %s5 = scalar_select 0, %s4, %s2
  $region1: #{tpu_custom_call.1} parent=0
    #allocation2 [shape = 'u8[4096]{0}', space=vmem, size = 0x1000, scoped, tag = 'input window, operand 0, single buffered']
    #allocation3 [shape = 's32[2]{0}', space=sflag, size = 0x8, scoped, tag = 'scoped memory for tpu_custom_call.1']
    #allocation4 [shape = 's32[2]{0}', space=sflag, size = 0x8, scoped, tag = 'scoped memory for tpu_custom_call.1']
    #allocation5 [shape = 'u8[4096]{0}', space=vmem, size = 0x1000, scoped, tag = 'output window, operand 0, single buffered']
    %6 = vsyncpa [#allocation3], 0
    %7 = vsyncpa [#allocation4], 0
    loop: start=0, step=1, limit=4
    $region2: #{tpu_custom_call.1} parent=1 // loop_pre_header
      _
    $region3: #{tpu_custom_call.1} parent=1 // loop_header
      %s9 = sphi 0, %s13
      %p10 = scmp.ge.s32.totalorder %s9, 4
      %s17 = sphi 0, %s17
      %s19 = sphi 0, %s17
      %s20 = sphi 0, %s19
      %s34 = sphi 0, %s20
      %s38 = sphi 0, %s38
      %s40 = sphi 0, %s38
      %s41 = sphi 0, %s40
      %s55 = sphi 0, %s41
    $region4: #{tpu_custom_call.1} parent=1 // loop_header_branch
      %12 = sbr.rel (%p10) target = $region8
    $region5: #{tpu_custom_call.1} parent=1 // loop_body
      %s14 = ssub.s32 %s9, 1
      %s15 = ssub.s32 %s9, 2
      %s16 = sadd.s32 %s9, 1
      %s18 = sadd.s32 %s17, 1
      %p21 = scmp.eq.s32.totalorder %s9, 1
      %p22 = scmp.ne.s32.totalorder %s17, %s19
      %p23 = scmp.eq.s32.totalorder %s9, 0
      %p24 = por %p22, %p23
      %p25 = scmp.ne.s32.totalorder %s17, %s19
      %p26 = scmp.eq.s32.totalorder %s14, 1
      %p27 = por %p25, %p26
      %p28 = scmp.ne.s32.totalorder %s19, %s20
      %p29 = scmp.eq.s32.totalorder %s14, 0
      %p30 = por %p28, %p29
      %p31 = scmp.ne.s32.totalorder %s19, %s20
      %p32 = scmp.eq.s32.totalorder %s15, 1
      %p33 = por %p31, %p32
      %p35 = scmp.ne.s32.totalorder %s20, %s34
      %p36 = scmp.eq.s32.totalorder %s15, 0
      %p37 = por %p35, %p36
      %s39 = sadd.s32 %s38, 1
      %p42 = scmp.eq.s32.totalorder %s9, 1
      %p43 = scmp.ne.s32.totalorder %s38, %s40
      %p44 = scmp.eq.s32.totalorder %s9, 0
      %p45 = por %p43, %p44
      %p46 = scmp.ne.s32.totalorder %s38, %s40
      %p47 = scmp.eq.s32.totalorder %s14, 1
      %p48 = por %p46, %p47
      %p49 = scmp.ne.s32.totalorder %s40, %s41
      %p50 = scmp.eq.s32.totalorder %s14, 0
      %p51 = por %p49, %p50
      %p52 = scmp.ne.s32.totalorder %s40, %s41
      %p53 = scmp.eq.s32.totalorder %s15, 1
      %p54 = por %p52, %p53
      %p56 = scmp.ne.s32.totalorder %s41, %s55
      %p57 = scmp.eq.s32.totalorder %s15, 0
      %p58 = por %p56, %p57
      %p59 = scmp.le.s32.totalorder 1, %s9
      %p60 = scmp.lt.s32.totalorder %s9, 3
      %p61 = pnand %p59, %p60
      %p62 = pneg %p61
      // Predicated region
      $region9: #{tpu_custom_call.1} parent=5 // pred_check
        _
      $region10: #{tpu_custom_call.1} parent=5 // pred_check_branch
        %64 = sbr.rel (%p61) target = $region12
      $region11: #{tpu_custom_call.1} parent=5 // pred_region
        %s65 = ssub.s32 %s9, 1
        // Predicated region
        $region13: #{tpu_custom_call.1} parent=11 // pred_check
          %p66 = pneg %p30
        $region14: #{tpu_custom_call.1} parent=11 // pred_check_branch
          %68 = sbr.rel (%p66) target = $region16
        $region15: #{tpu_custom_call.1} parent=11 // pred_region
          %s70 = ssub.s32 128, 128
          %71 = vsyncadd [#allocation3], %s70
          %s73 = sshll.u32 [#allocation2], 4
          %s74 = int_to_ptr.vmem [resolvable:$true] %s73
          %76 = dma.hbm_to_vmem [thread:$0]  %s0, 128, %s74, [#allocation3]
        $region16: #{tpu_custom_call.1} parent=11 // pred_fallthru
          _
      $region12: #{tpu_custom_call.1} parent=5 // pred_fallthru
        _
      %p77 = scmp.lt.s32.totalorder %s9, 2
      // Predicated region
      $region17: #{tpu_custom_call.1} parent=5 // pred_check
        %p78 = pneg %p77
      $region18: #{tpu_custom_call.1} parent=5 // pred_check_branch
        %80 = sbr.rel (%p78) target = $region20
      $region19: #{tpu_custom_call.1} parent=5 // pred_region
        _
      $region20: #{tpu_custom_call.1} parent=5 // pred_fallthru
        _
      %p81 = scmp.le.s32.totalorder 1, %s9
      %p82 = scmp.lt.s32.totalorder %s9, 3
      %p83 = pnand %p81, %p82
      %p84 = pneg %p83
      // Predicated region
      $region21: #{tpu_custom_call.1} parent=5 // pred_check
        _
      $region22: #{tpu_custom_call.1} parent=5 // pred_check_branch
        %86 = sbr.rel (%p83) target = $region24
      $region23: #{tpu_custom_call.1} parent=5 // pred_region
        %s87 = ssub.s32 %s9, 1
        // Predicated region
        $region25: #{tpu_custom_call.1} parent=23 // pred_check
          %p88 = pneg %p30
        $region26: #{tpu_custom_call.1} parent=23 // pred_check_branch
          %90 = sbr.rel (%p88) target = $region28
        $region27: #{tpu_custom_call.1} parent=23 // pred_region
          %91 = dma.done [#allocation3], 128
        $region28: #{tpu_custom_call.1} parent=23 // pred_fallthru
          _
        %p92 = pneg %p30
        %p93 = pneg %p27
        %p94 = pneg %p51
        %p95 = pneg %p48
        %v96 = vld [vmem:[#allocation2] sm:$0xff]
        %97 = vst [vmem:[#allocation5] sm:$0xff] %v96
        // Predicated region
        $region29: #{tpu_custom_call.1} parent=23 // pred_check
          %p98 = pneg %p48
        $region30: #{tpu_custom_call.1} parent=23 // pred_check_branch
          %100 = sbr.rel (%p98) target = $region32
        $region31: #{tpu_custom_call.1} parent=23 // pred_region
          %s102 = ssub.s32 128, 128
          %103 = vsyncadd [#allocation4], %s102
          %s105 = sshll.u32 [#allocation5], 4
          %s106 = int_to_ptr.vmem [resolvable:$true] %s105
          %108 = dma.vmem_to_hbm [thread:$0]  %s106, 128, %s1, [#allocation4]
        $region32: #{tpu_custom_call.1} parent=23 // pred_fallthru
          _
        // Predicated region
        $region33: #{tpu_custom_call.1} parent=23 // pred_check
          %p109 = pneg %p48
        $region34: #{tpu_custom_call.1} parent=23 // pred_check_branch
          %111 = sbr.rel (%p109) target = $region36
        $region35: #{tpu_custom_call.1} parent=23 // pred_region
          %112 = dma.done [#allocation4], 128
        $region36: #{tpu_custom_call.1} parent=23 // pred_fallthru
          _
      $region24: #{tpu_custom_call.1} parent=5 // pred_fallthru
        _
      %p113 = scmp.le.s32.totalorder 2, %s9
      // Predicated region
      $region37: #{tpu_custom_call.1} parent=5 // pred_check
        %p114 = pneg %p113
      $region38: #{tpu_custom_call.1} parent=5 // pred_check_branch
        %116 = sbr.rel (%p114) target = $region40
      $region39: #{tpu_custom_call.1} parent=5 // pred_region
        %s117 = ssub.s32 %s9, 2
      $region40: #{tpu_custom_call.1} parent=5 // pred_fallthru
        _
    $region6: #{tpu_custom_call.1} parent=1 // loop_footer
      %s13 = sadd.s32 1, %s9
    $region7: #{tpu_custom_call.1} parent=1 // loop_footer_branch
      %8 = sbr.rel target = $region3
    $region8: #{tpu_custom_call.1} parent=1 // loop_exit
      _
    %118 = vsyncpa [#allocation3], 1
    %s119 = scalar_lea.sflag [#allocation3], 1
    %120 = vsyncpa %s119, 1
    %121 = vsyncpa [#allocation4], 1
    %s122 = scalar_lea.sflag [#allocation4], 1
    %123 = vsyncpa %s122, 1

// kernel: residual_forward.1
$region0: #{residual_forward.1}
  #allocation0 [shape = 'u32[]', space=smem, size = 0x4, offset = 0x4, fixed_abs, tag = 'smem constant byte address 0x4 - core index']
  #allocation1 [shape = 'u32[144,128]{1,0:T(1,128)}', space=vmem, size = 0x12000, scoped, tag = 'internal scratch']
  %s0 = inlined_call_operand.vmem [shape: f32[8,4,256], index: 0, kind: input, shape index: {}]
  %s1 = inlined_call_operand.vmem [shape: f32[9,256], index: 1, kind: input, shape index: {}]
  %s2 = inlined_call_operand.vmem [shape: f32[4,4], index: 2, kind: input, shape index: {}]
  %s3 = inlined_call_operand.vmem [shape: f32[4,1], index: 3, kind: input, shape index: {}]
  %s4 = inlined_call_operand.vmem [shape: f32[9,4,4], index: 4, kind: input, shape index: {}]
  %s5 = inlined_call_operand.vmem [shape: f32[4,1], index: 5, kind: input, shape index: {}]
  %s6 = inlined_call_operand.vmem [shape: f32[8,4], index: 6, kind: input, shape index: {}]
  %s7 = inlined_call_operand.vmem [shape: f32[8,1], index: 7, kind: input, shape index: {}]
  %s8 = inlined_call_operand.vmem [shape: f32[8,4], index: 8, kind: input, shape index: {}]
  %s9 = inlined_call_operand.vmem [shape: f32[8,1], index: 9, kind: input, shape index: {}]
  %s10 = inlined_call_operand.vmem [shape: f32[8,8,256], index: 10, kind: output, shape index: {}]
  %s11 = sld [smem:[#allocation0]]
  $region73: #{residual_forward.1} parent=0
    _
  %s13 = ssub.s32 1, %s11
  %s14 = scalar_select 0, %s13, %s11
  loop: start=0, step=1, limit=4
  $region2: #{residual_forward.1} parent=0 // loop_pre_header
    _
  $region3: #{residual_forward.1} parent=0 // loop_header
    %s16 = sphi 0, %s20
    %p17 = scmp.ge.s32.totalorder %s16, 4
    %s26 = sphi 0, %s28
    %s29 = sphi 0, %s26
    %s30 = sphi 0, %s29
    %s46 = sphi 0, %s30
    %s50 = sphi 0, %s50
    %s52 = sphi 0, %s50
    %s53 = sphi 0, %s52
    %s67 = sphi 0, %s53
    %s71 = sphi 0, %s71
    %s73 = sphi 0, %s71
    %s74 = sphi 0, %s73
    %s88 = sphi 0, %s74
    %s92 = sphi 0, %s92
    %s94 = sphi 0, %s92
    %s95 = sphi 0, %s94
    %s109 = sphi 0, %s95
    %s113 = sphi 0, %s113
    %s115 = sphi 0, %s113
    %s116 = sphi 0, %s115
    %s130 = sphi 0, %s116
    %s134 = sphi 0, %s134
    %s136 = sphi 0, %s134
    %s137 = sphi 0, %s136
    %s151 = sphi 0, %s137
    %s155 = sphi 0, %s155
    %s157 = sphi 0, %s155
    %s158 = sphi 0, %s157
    %s172 = sphi 0, %s158
    %s176 = sphi 0, %s176
    %s178 = sphi 0, %s176
    %s179 = sphi 0, %s178
    %s193 = sphi 0, %s179
    %s197 = sphi 0, %s197
    %s199 = sphi 0, %s197
    %s200 = sphi 0, %s199
    %s214 = sphi 0, %s200
    %s218 = sphi 0, %s218
    %s220 = sphi 0, %s218
    %s221 = sphi 0, %s220
    %s235 = sphi 0, %s221
    %s241 = sphi 0, %s243
    %s244 = sphi 0, %s241
    %s245 = sphi 0, %s244
    %s261 = sphi 0, %s245
  $region4: #{residual_forward.1} parent=0 // loop_header_branch
    %19 = sbr.rel (%p17) target = $region8
  $region5: #{residual_forward.1} parent=0 // loop_body
    %s21 = ssub.s32 %s16, 1
    %s22 = ssub.s32 %s16, 2
    %s23 = sadd.s32 %s16, 1
    %s24 = ssub.s32 %s16, %s23
    %p25 = scmp.eq.s32.totalorder %s24, 0
    %s27 = sadd.s32 %s26, 1
    %s28 = scalar_select %p25, %s26, %s27
    %p31 = pneg %p25
    %p32 = scmp.eq.s32.totalorder %s16, 1
    %p33 = por %p31, %p32
    %p34 = scmp.ne.s32.totalorder %s26, %s29
    %p35 = scmp.eq.s32.totalorder %s16, 0
    %p36 = por %p34, %p35
    %p37 = scmp.ne.s32.totalorder %s26, %s29
    %p38 = scmp.eq.s32.totalorder %s21, 1
    %p39 = por %p37, %p38
    %p40 = scmp.ne.s32.totalorder %s29, %s30
    %p41 = scmp.eq.s32.totalorder %s21, 0
    %p42 = por %p40, %p41
    %p43 = scmp.ne.s32.totalorder %s29, %s30
    %p44 = scmp.eq.s32.totalorder %s22, 1
    %p45 = por %p43, %p44
    %p47 = scmp.ne.s32.totalorder %s30, %s46
    %p48 = scmp.eq.s32.totalorder %s22, 0
    %p49 = por %p47, %p48
    %s51 = sadd.s32 %s50, 1
    %p54 = scmp.eq.s32.totalorder %s16, 1
    %p55 = scmp.ne.s32.totalorder %s50, %s52
    %p56 = scmp.eq.s32.totalorder %s16, 0
    %p57 = por %p55, %p56
    %p58 = scmp.ne.s32.totalorder %s50, %s52
    %p59 = scmp.eq.s32.totalorder %s21, 1
    %p60 = por %p58, %p59
    %p61 = scmp.ne.s32.totalorder %s52, %s53
    %p62 = scmp.eq.s32.totalorder %s21, 0
    %p63 = por %p61, %p62
    %p64 = scmp.ne.s32.totalorder %s52, %s53
    %p65 = scmp.eq.s32.totalorder %s22, 1
    %p66 = por %p64, %p65
    %p68 = scmp.ne.s32.totalorder %s53, %s67
    %p69 = scmp.eq.s32.totalorder %s22, 0
    %p70 = por %p68, %p69
    %s72 = sadd.s32 %s71, 1
    %p75 = scmp.eq.s32.totalorder %s16, 1
    %p76 = scmp.ne.s32.totalorder %s71, %s73
    %p77 = scmp.eq.s32.totalorder %s16, 0
    %p78 = por %p76, %p77
    %p79 = scmp.ne.s32.totalorder %s71, %s73
    %p80 = scmp.eq.s32.totalorder %s21, 1
    %p81 = por %p79, %p80
    %p82 = scmp.ne.s32.totalorder %s73, %s74
    %p83 = scmp.eq.s32.totalorder %s21, 0
    %p84 = por %p82, %p83
    %p85 = scmp.ne.s32.totalorder %s73, %s74
    %p86 = scmp.eq.s32.totalorder %s22, 1
    %p87 = por %p85, %p86
    %p89 = scmp.ne.s32.totalorder %s74, %s88
    %p90 = scmp.eq.s32.totalorder %s22, 0
    %p91 = por %p89, %p90
    %s93 = sadd.s32 %s92, 1
    %p96 = scmp.eq.s32.totalorder %s16, 1
    %p97 = scmp.ne.s32.totalorder %s92, %s94
    %p98 = scmp.eq.s32.totalorder %s16, 0
    %p99 = por %p97, %p98
    %p100 = scmp.ne.s32.totalorder %s92, %s94
    %p101 = scmp.eq.s32.totalorder %s21, 1
    %p102 = por %p100, %p101
    %p103 = scmp.ne.s32.totalorder %s94, %s95
    %p104 = scmp.eq.s32.totalorder %s21, 0
    %p105 = por %p103, %p104
    %p106 = scmp.ne.s32.totalorder %s94, %s95
    %p107 = scmp.eq.s32.totalorder %s22, 1
    %p108 = por %p106, %p107
    %p110 = scmp.ne.s32.totalorder %s95, %s109
    %p111 = scmp.eq.s32.totalorder %s22, 0
    %p112 = por %p110, %p111
    %s114 = sadd.s32 %s113, 1
    %p117 = scmp.eq.s32.totalorder %s16, 1
    %p118 = scmp.ne.s32.totalorder %s113, %s115
    %p119 = scmp.eq.s32.totalorder %s16, 0
    %p120 = por %p118, %p119
    %p121 = scmp.ne.s32.totalorder %s113, %s115
    %p122 = scmp.eq.s32.totalorder %s21, 1
    %p123 = por %p121, %p122
    %p124 = scmp.ne.s32.totalorder %s115, %s116
    %p125 = scmp.eq.s32.totalorder %s21, 0
    %p126 = por %p124, %p125
    %p127 = scmp.ne.s32.totalorder %s115, %s116
    %p128 = scmp.eq.s32.totalorder %s22, 1
    %p129 = por %p127, %p128
    %p131 = scmp.ne.s32.totalorder %s116, %s130
    %p132 = scmp.eq.s32.totalorder %s22, 0
    %p133 = por %p131, %p132
    %s135 = sadd.s32 %s134, 1
    %p138 = scmp.eq.s32.totalorder %s16, 1
    %p139 = scmp.ne.s32.totalorder %s134, %s136
    %p140 = scmp.eq.s32.totalorder %s16, 0
    %p141 = por %p139, %p140
    %p142 = scmp.ne.s32.totalorder %s134, %s136
    %p143 = scmp.eq.s32.totalorder %s21, 1
    %p144 = por %p142, %p143
    %p145 = scmp.ne.s32.totalorder %s136, %s137
    %p146 = scmp.eq.s32.totalorder %s21, 0
    %p147 = por %p145, %p146
    %p148 = scmp.ne.s32.totalorder %s136, %s137
    %p149 = scmp.eq.s32.totalorder %s22, 1
    %p150 = por %p148, %p149
    %p152 = scmp.ne.s32.totalorder %s137, %s151
    %p153 = scmp.eq.s32.totalorder %s22, 0
    %p154 = por %p152, %p153
    %s156 = sadd.s32 %s155, 1
    %p159 = scmp.eq.s32.totalorder %s16, 1
    %p160 = scmp.ne.s32.totalorder %s155, %s157
    %p161 = scmp.eq.s32.totalorder %s16, 0
    %p162 = por %p160, %p161
    %p163 = scmp.ne.s32.totalorder %s155, %s157
    %p164 = scmp.eq.s32.totalorder %s21, 1
    %p165 = por %p163, %p164
    %p166 = scmp.ne.s32.totalorder %s157, %s158
    %p167 = scmp.eq.s32.totalorder %s21, 0
    %p168 = por %p166, %p167
    %p169 = scmp.ne.s32.totalorder %s157, %s158
    %p170 = scmp.eq.s32.totalorder %s22, 1
    %p171 = por %p169, %p170
    %p173 = scmp.ne.s32.totalorder %s158, %s172
    %p174 = scmp.eq.s32.totalorder %s22, 0
    %p175 = por %p173, %p174
    %s177 = sadd.s32 %s176, 1
    %p180 = scmp.eq.s32.totalorder %s16, 1
    %p181 = scmp.ne.s32.totalorder %s176, %s178
    %p182 = scmp.eq.s32.totalorder %s16, 0
    %p183 = por %p181, %p182
    %p184 = scmp.ne.s32.totalorder %s176, %s178
    %p185 = scmp.eq.s32.totalorder %s21, 1
    %p186 = por %p184, %p185
    %p187 = scmp.ne.s32.totalorder %s178, %s179
    %p188 = scmp.eq.s32.totalorder %s21, 0
    %p189 = por %p187, %p188
    %p190 = scmp.ne.s32.totalorder %s178, %s179
    %p191 = scmp.eq.s32.totalorder %s22, 1
    %p192 = por %p190, %p191
    %p194 = scmp.ne.s32.totalorder %s179, %s193
    %p195 = scmp.eq.s32.totalorder %s22, 0
    %p196 = por %p194, %p195
    %s198 = sadd.s32 %s197, 1
    %p201 = scmp.eq.s32.totalorder %s16, 1
    %p202 = scmp.ne.s32.totalorder %s197, %s199
    %p203 = scmp.eq.s32.totalorder %s16, 0
    %p204 = por %p202, %p203
    %p205 = scmp.ne.s32.totalorder %s197, %s199
    %p206 = scmp.eq.s32.totalorder %s21, 1
    %p207 = por %p205, %p206
    %p208 = scmp.ne.s32.totalorder %s199, %s200
    %p209 = scmp.eq.s32.totalorder %s21, 0
    %p210 = por %p208, %p209
    %p211 = scmp.ne.s32.totalorder %s199, %s200
    %p212 = scmp.eq.s32.totalorder %s22, 1
    %p213 = por %p211, %p212
    %p215 = scmp.ne.s32.totalorder %s200, %s214
    %p216 = scmp.eq.s32.totalorder %s22, 0
    %p217 = por %p215, %p216
    %s219 = sadd.s32 %s218, 1
    %p222 = scmp.eq.s32.totalorder %s16, 1
    %p223 = scmp.ne.s32.totalorder %s218, %s220
    %p224 = scmp.eq.s32.totalorder %s16, 0
    %p225 = por %p223, %p224
    %p226 = scmp.ne.s32.totalorder %s218, %s220
    %p227 = scmp.eq.s32.totalorder %s21, 1
    %p228 = por %p226, %p227
    %p229 = scmp.ne.s32.totalorder %s220, %s221
    %p230 = scmp.eq.s32.totalorder %s21, 0
    %p231 = por %p229, %p230
    %p232 = scmp.ne.s32.totalorder %s220, %s221
    %p233 = scmp.eq.s32.totalorder %s22, 1
    %p234 = por %p232, %p233
    %p236 = scmp.ne.s32.totalorder %s221, %s235
    %p237 = scmp.eq.s32.totalorder %s22, 0
    %p238 = por %p236, %p237
    %s239 = ssub.s32 %s16, %s23
    %p240 = scmp.eq.s32.totalorder %s239, 0
    %s242 = sadd.s32 %s241, 1
    %s243 = scalar_select %p240, %s241, %s242
    %p246 = pneg %p240
    %p247 = scmp.eq.s32.totalorder %s16, 1
    %p248 = por %p246, %p247
    %p249 = scmp.ne.s32.totalorder %s241, %s244
    %p250 = scmp.eq.s32.totalorder %s16, 0
    %p251 = por %p249, %p250
    %p252 = scmp.ne.s32.totalorder %s241, %s244
    %p253 = scmp.eq.s32.totalorder %s21, 1
    %p254 = por %p252, %p253
    %p255 = scmp.ne.s32.totalorder %s244, %s245
    %p256 = scmp.eq.s32.totalorder %s21, 0
    %p257 = por %p255, %p256
    %p258 = scmp.ne.s32.totalorder %s244, %s245
    %p259 = scmp.eq.s32.totalorder %s22, 1
    %p260 = por %p258, %p259
    %p262 = scmp.ne.s32.totalorder %s245, %s261
    %p263 = scmp.eq.s32.totalorder %s22, 0
    %p264 = por %p262, %p263
    %p265 = scmp.le.s32.totalorder 1, %s16
    %p266 = scmp.lt.s32.totalorder %s16, 3
    %p267 = pnand %p265, %p266
    %p268 = pneg %p267
    // Predicated region
    $region9: #{residual_forward.1} parent=5 // pred_check
      _
    $region10: #{residual_forward.1} parent=5 // pred_check_branch
      %270 = sbr.rel (%p267) target = $region12
    $region11: #{residual_forward.1} parent=5 // pred_region
      %s271 = ssub.s32 %s16, 1
      // Predicated region
      $region13: #{residual_forward.1} parent=11 // pred_check
        %p272 = pneg %p63
      $region14: #{residual_forward.1} parent=11 // pred_check_branch
        %274 = sbr.rel (%p272) target = $region16
      $region15: #{residual_forward.1} parent=11 // pred_region
        _
      $region16: #{residual_forward.1} parent=11 // pred_fallthru
        _
      // Predicated region
      $region17: #{residual_forward.1} parent=11 // pred_check
        %p275 = pneg %p84
      $region18: #{residual_forward.1} parent=11 // pred_check_branch
        %277 = sbr.rel (%p275) target = $region20
      $region19: #{residual_forward.1} parent=11 // pred_region
        _
      $region20: #{residual_forward.1} parent=11 // pred_fallthru
        _
      // Predicated region
      $region21: #{residual_forward.1} parent=11 // pred_check
        %p278 = pneg %p105
      $region22: #{residual_forward.1} parent=11 // pred_check_branch
        %280 = sbr.rel (%p278) target = $region24
      $region23: #{residual_forward.1} parent=11 // pred_region
        _
      $region24: #{residual_forward.1} parent=11 // pred_fallthru
        _
      // Predicated region
      $region25: #{residual_forward.1} parent=11 // pred_check
        %p281 = pneg %p126
      $region26: #{residual_forward.1} parent=11 // pred_check_branch
        %283 = sbr.rel (%p281) target = $region28
      $region27: #{residual_forward.1} parent=11 // pred_region
        _
      $region28: #{residual_forward.1} parent=11 // pred_fallthru
        _
      // Predicated region
      $region29: #{residual_forward.1} parent=11 // pred_check
        %p284 = pneg %p147
      $region30: #{residual_forward.1} parent=11 // pred_check_branch
        %286 = sbr.rel (%p284) target = $region32
      $region31: #{residual_forward.1} parent=11 // pred_region
        _
      $region32: #{residual_forward.1} parent=11 // pred_fallthru
        _
      // Predicated region
      $region33: #{residual_forward.1} parent=11 // pred_check
        %p287 = pneg %p168
      $region34: #{residual_forward.1} parent=11 // pred_check_branch
        %289 = sbr.rel (%p287) target = $region36
      $region35: #{residual_forward.1} parent=11 // pred_region
        _
      $region36: #{residual_forward.1} parent=11 // pred_fallthru
        _
      // Predicated region
      $region37: #{residual_forward.1} parent=11 // pred_check
        %p290 = pneg %p189
      $region38: #{residual_forward.1} parent=11 // pred_check_branch
        %292 = sbr.rel (%p290) target = $region40
      $region39: #{residual_forward.1} parent=11 // pred_region
        _
      $region40: #{residual_forward.1} parent=11 // pred_fallthru
        _
      // Predicated region
      $region41: #{residual_forward.1} parent=11 // pred_check
        %p293 = pneg %p210
      $region42: #{residual_forward.1} parent=11 // pred_check_branch
        %295 = sbr.rel (%p293) target = $region44
      $region43: #{residual_forward.1} parent=11 // pred_region
        _
      $region44: #{residual_forward.1} parent=11 // pred_fallthru
        _
      // Predicated region
      $region45: #{residual_forward.1} parent=11 // pred_check
        %p296 = pneg %p231
      $region46: #{residual_forward.1} parent=11 // pred_check_branch
        %298 = sbr.rel (%p296) target = $region48
      $region47: #{residual_forward.1} parent=11 // pred_region
        _
      $region48: #{residual_forward.1} parent=11 // pred_fallthru
        _
    $region12: #{residual_forward.1} parent=5 // pred_fallthru
      _
    %p299 = scmp.lt.s32.totalorder %s16, 2
    // Predicated region
    $region49: #{residual_forward.1} parent=5 // pred_check
      %p300 = pneg %p299
    $region50: #{residual_forward.1} parent=5 // pred_check_branch
      %302 = sbr.rel (%p300) target = $region52
    $region51: #{residual_forward.1} parent=5 // pred_region
      // Predicated region
      $region53: #{residual_forward.1} parent=51 // pred_check
        %p303 = pneg %p36
      $region54: #{residual_forward.1} parent=51 // pred_check_branch
        %305 = sbr.rel (%p303) target = $region56
      $region55: #{residual_forward.1} parent=51 // pred_region
        %s306 = smul.u32 4, %s16
        %p307 = scmp.lt.s32.totalorder %s306, 7
        %s308 = scalar_select %p307, %s306, 7
        %s309 = smul.addr %s308, 2
        %s310 = smul.addr %s309, 4
        %s311 = scalar_lea.vmem %s0, %s310
        %s312 = smul.u32 4, %s16
      $region56: #{residual_forward.1} parent=51 // pred_fallthru
        _
    $region52: #{residual_forward.1} parent=5 // pred_fallthru
      _
    %p313 = scmp.le.s32.totalorder 1, %s16
    %p314 = scmp.lt.s32.totalorder %s16, 3
    %p315 = pnand %p313, %p314
    %p316 = pneg %p315
    // Predicated region
    $region57: #{residual_forward.1} parent=5 // pred_check
      _
    $region58: #{residual_forward.1} parent=5 // pred_check_branch
      %318 = sbr.rel (%p315) target = $region60
    $region59: #{residual_forward.1} parent=5 // pred_region
      %s319 = ssub.s32 %s16, 1
      %s320 = smul.u32 4, %s21
      %p321 = scmp.lt.s32.totalorder %s320, 7
      %s322 = scalar_select %p321, %s320, 7
      %s323 = smul.addr %s322, 2
      %s324 = smul.addr %s323, 4
      %s325 = scalar_lea.vmem %s0, %s324
      %p326 = pneg %p42
      %p327 = pneg %p39
      %p328 = pneg %p63
      %p329 = pneg %p60
      %p330 = pneg %p84
      %p331 = pneg %p81
      %p332 = pneg %p105
      %p333 = pneg %p102
      %p334 = pneg %p126
      %p335 = pneg %p123
      %p336 = pneg %p147
      %p337 = pneg %p144
      %p338 = pneg %p168
      %p339 = pneg %p165
      %p340 = pneg %p189
      %p341 = pneg %p186
      %p342 = pneg %p210
      %p343 = pneg %p207
      %p344 = pneg %p231
      %p345 = pneg %p228
      %p346 = pneg %p257
      %p347 = pneg %p254
      %s348 = smul.u32 4, %s21
      %p349 = scmp.lt.s32.totalorder %s348, 7
      %s350 = scalar_select %p349, %s348, 7
      %s351 = smul.addr %s350, 2
      %s352 = smul.addr %s351, 8
      %s353 = scalar_lea.vmem %s10, %s352
      %s354 = smul.u32 4, %s21
      %p355 = scmp.lt.s32.totalorder %s354, 7
      %s356 = scalar_select %p355, %s354, 7
      %s357 = smul.addr %s356, 2
      %s358 = smul.addr %s357, 4
      %s359 = scalar_lea.vmem %s0, %s358
      %s360 = smul.u32 4, %s21
      %s361 = smul.u32 4, %s21
      %p362 = scmp.lt.s32.totalorder %s361, 7
      %s363 = scalar_select %p362, %s361, 7
      %s364 = smul.addr %s363, 2
      %s365 = smul.addr %s364, 8
      %s366 = scalar_lea.vmem %s10, %s365
      %s367 = smul.u32 4, %s21
      %v368 = vld [vmem:[%s359] sm:$0xff]
      %v369 = vld [vmem:[%s359 + $0x8] sm:$0xff]
      %v370 = vld [vmem:[%s359 + $0x10] sm:$0xff]
      %v371 = vld [vmem:[%s359 + $0x18] sm:$0xff]
      %v372 = vld [vmem:[%s8] sm:$0xff]
      %v373 = vld [vmem:[%s9] sm:$0xff]
      %375 = vset.pattern.permute.xlu0 0
      %376 = vperm.xlu0 %375, %v373
      %v377 = vpop.permute.xlu0 %376
      %v380 = vcombine.high %v368, %v368
      %vm381 = vcmask 31744
      %v383 = vsel %vm381, %v372, 0
      %vm385 = vcmask 1043456
      %v386 = vsel %vm385, %v368, 0
      %v388 = vsel %vm385, %v380, 0
      %390 = vmatprep.subr.mxu0 0.0
      %391 = vmatpush1.msra.mxu0 0.0
      %392 = vmatprep.subr.mxu0 0.0
      %393 = vmatpush1.msra.mxu0 0.0
      %394 = vmatprep.subr.mxu0 0.0
      %395 = vmatpush1.msra.mxu0 0.0
      %396 = vmatprep.subr.mxu0 0.0
      %397 = vmatpush1.msra.mxu0 0.0
      %398 = vmatprep.subr.mxu0 0.0
      %399 = vmatpush1.msra.mxu0 0.0
      %400 = vmatprep.subr.mxu0 0.0
      %401 = vmatpush1.msra.mxu0 0.0
      %402 = vmatprep.subr.mxu0 0.0
      %403 = vmatpush1.msra.mxu0 0.0
      %404 = vmatprep.subr.mxu0 0.0
      %405 = vmatpush1.msra.mxu0 0.0
      %406 = vmatprep.subr.mxu0 0.0
      %407 = vmatpush1.msra.mxu0 0.0
      %408 = vmatprep.subr.mxu0 0.0
      %409 = vmatpush1.msra.mxu0 0.0
      %410 = vmatprep.subr.mxu0 0.0
      %411 = vmatpush1.msra.mxu0 0.0
      %412 = vmatprep.subr.mxu0 0.0
      %413 = vmatpush1.msra.mxu0 0.0
      %414 = vmatprep.subr.mxu0 0.0
      %415 = vmatpush1.msra.mxu0 0.0
      %416 = vmatprep.subr.mxu0 0.0
      %417 = vmatpush1.msra.mxu0 0.0
      %418 = vmatprep.subr.mxu0 0.0
      %419 = vmatpush1.msra.mxu0 0.0
      %420 = vmatprep.subr.mxu0 %v388
      %421 = vmatpush1.msra.mxu0 %v386
      %422 = vmatprep.subr.mxu0 0.0
      %423 = vmatpush2.msra.mxu0 0.0
      %424 = vmatprep.subr.mxu0 0.0
      %425 = vmatpush2.msra.mxu0 0.0
      %426 = vmatprep.subr.mxu0 0.0
      %427 = vmatpush2.msra.mxu0 0.0
      %428 = vmatprep.subr.mxu0 0.0
      %429 = vmatpush2.msra.mxu0 0.0
      %430 = vmatprep.subr.mxu0 0.0
      %431 = vmatpush2.msra.mxu0 0.0
      %432 = vmatprep.subr.mxu0 0.0
      %433 = vmatpush2.msra.mxu0 0.0
      %434 = vmatprep.subr.mxu0 0.0
      %435 = vmatpush2.msra.mxu0 0.0
      %436 = vmatprep.subr.mxu0 0.0
      %437 = vmatpush2.msra.mxu0 0.0
      %438 = vmatprep.subr.mxu0 0.0
      %439 = vmatpush2.msra.mxu0 0.0
      %440 = vmatprep.subr.mxu0 0.0
      %441 = vmatpush2.msra.mxu0 0.0
      %442 = vmatprep.subr.mxu0 0.0
      %443 = vmatpush2.msra.mxu0 0.0
      %444 = vmatprep.subr.mxu0 0.0
      %445 = vmatpush2.msra.mxu0 0.0
      %446 = vmatprep.subr.mxu0 0.0
      %447 = vmatpush2.msra.mxu0 0.0
      %448 = vmatprep.subr.mxu0 0.0
      %449 = vmatpush2.msra.mxu0 0.0
      %450 = vmatprep.subr.mxu0 0.0
      %451 = vmatpush2.msra.mxu0 0.0
      %452 = vmatprep.subr.mxu0 0.0
      %453 = vmatpush2.msra.mxu0 0.0
      %454 = vmatprep.mubr.f32.mxu0 0.0
      %455 = vmatmul.mubr.f32.gmra.mxu0 %v383
      %v456 = vpop.f32.mrf.mxu0
      %v457 = vadd.f32 %v377, %v456
      %v458 = vpop.f32.mrf.mxu0
      %v459 = vadd.f32 %v377, %v458
      %460 = vdwg.mxu0
      %v462 = vcombine.high %v369, %v369
      %v463 = vsel %vm385, %v369, 0
      %v465 = vsel %vm385, %v462, 0
      %467 = vmatprep.subr.mxu0 0.0
      %468 = vmatpush1.msra.mxu0 0.0
      %469 = vmatprep.subr.mxu0 0.0
      %470 = vmatpush1.msra.mxu0 0.0
      %471 = vmatprep.subr.mxu0 0.0
      %472 = vmatpush1.msra.mxu0 0.0
      %473 = vmatprep.subr.mxu0 0.0
      %474 = vmatpush1.msra.mxu0 0.0
      %475 = vmatprep.subr.mxu0 0.0
      %476 = vmatpush1.msra.mxu0 0.0
      %477 = vmatprep.subr.mxu0 0.0
      %478 = vmatpush1.msra.mxu0 0.0
      %479 = vmatprep.subr.mxu0 0.0
      %480 = vmatpush1.msra.mxu0 0.0
      %481 = vmatprep.subr.mxu0 0.0
      %482 = vmatpush1.msra.mxu0 0.0
      %483 = vmatprep.subr.mxu0 0.0
      %484 = vmatpush1.msra.mxu0 0.0
      %485 = vmatprep.subr.mxu0 0.0
      %486 = vmatpush1.msra.mxu0 0.0
      %487 = vmatprep.subr.mxu0 0.0
      %488 = vmatpush1.msra.mxu0 0.0
      %489 = vmatprep.subr.mxu0 0.0
      %490 = vmatpush1.msra.mxu0 0.0
      %491 = vmatprep.subr.mxu0 0.0
      %492 = vmatpush1.msra.mxu0 0.0
      %493 = vmatprep.subr.mxu0 0.0
      %494 = vmatpush1.msra.mxu0 0.0
      %495 = vmatprep.subr.mxu0 0.0
      %496 = vmatpush1.msra.mxu0 0.0
      %497 = vmatprep.subr.mxu0 %v465
      %498 = vmatpush1.msra.mxu0 %v463
      %499 = vmatprep.subr.mxu0 0.0
      %500 = vmatpush2.msra.mxu0 0.0
      %501 = vmatprep.subr.mxu0 0.0
      %502 = vmatpush2.msra.mxu0 0.0
      %503 = vmatprep.subr.mxu0 0.0
      %504 = vmatpush2.msra.mxu0 0.0
      %505 = vmatprep.subr.mxu0 0.0
      %506 = vmatpush2.msra.mxu0 0.0
      %507 = vmatprep.subr.mxu0 0.0
      %508 = vmatpush2.msra.mxu0 0.0
      %509 = vmatprep.subr.mxu0 0.0
      %510 = vmatpush2.msra.mxu0 0.0
      %511 = vmatprep.subr.mxu0 0.0
      %512 = vmatpush2.msra.mxu0 0.0
      %513 = vmatprep.subr.mxu0 0.0
      %514 = vmatpush2.msra.mxu0 0.0
      %515 = vmatprep.subr.mxu0 0.0
      %516 = vmatpush2.msra.mxu0 0.0
      %517 = vmatprep.subr.mxu0 0.0
      %518 = vmatpush2.msra.mxu0 0.0
      %519 = vmatprep.subr.mxu0 0.0
      %520 = vmatpush2.msra.mxu0 0.0
      %521 = vmatprep.subr.mxu0 0.0
      %522 = vmatpush2.msra.mxu0 0.0
      %523 = vmatprep.subr.mxu0 0.0
      %524 = vmatpush2.msra.mxu0 0.0
      %525 = vmatprep.subr.mxu0 0.0
      %526 = vmatpush2.msra.mxu0 0.0
      %527 = vmatprep.subr.mxu0 0.0
      %528 = vmatpush2.msra.mxu0 0.0
      %529 = vmatprep.subr.mxu0 0.0
      %530 = vmatpush2.msra.mxu0 0.0
      %531 = vmatprep.mubr.f32.mxu0 0.0
      %532 = vmatmul.mubr.f32.gmra.mxu0 %v383
      %v533 = vpop.f32.mrf.mxu0
      %v534 = vadd.f32 %v377, %v533
      %v535 = vpop.f32.mrf.mxu0
      %v536 = vadd.f32 %v377, %v535
      %537 = vdwg.mxu0
      %v539 = vcombine.high %v370, %v370
      %v540 = vsel %vm385, %v370, 0
      %v542 = vsel %vm385, %v539, 0
      %544 = vmatprep.subr.mxu0 0.0
      %545 = vmatpush1.msra.mxu0 0.0
      %546 = vmatprep.subr.mxu0 0.0
      %547 = vmatpush1.msra.mxu0 0.0
      %548 = vmatprep.subr.mxu0 0.0
      %549 = vmatpush1.msra.mxu0 0.0
      %550 = vmatprep.subr.mxu0 0.0
      %551 = vmatpush1.msra.mxu0 0.0
      %552 = vmatprep.subr.mxu0 0.0
      %553 = vmatpush1.msra.mxu0 0.0
      %554 = vmatprep.subr.mxu0 0.0
      %555 = vmatpush1.msra.mxu0 0.0
      %556 = vmatprep.subr.mxu0 0.0
      %557 = vmatpush1.msra.mxu0 0.0
      %558 = vmatprep.subr.mxu0 0.0
      %559 = vmatpush1.msra.mxu0 0.0
      %560 = vmatprep.subr.mxu0 0.0
      %561 = vmatpush1.msra.mxu0 0.0
      %562 = vmatprep.subr.mxu0 0.0
      %563 = vmatpush1.msra.mxu0 0.0
      %564 = vmatprep.subr.mxu0 0.0
      %565 = vmatpush1.msra.mxu0 0.0
      %566 = vmatprep.subr.mxu0 0.0
      %567 = vmatpush1.msra.mxu0 0.0
      %568 = vmatprep.subr.mxu0 0.0
      %569 = vmatpush1.msra.mxu0 0.0
      %570 = vmatprep.subr.mxu0 0.0
      %571 = vmatpush1.msra.mxu0 0.0
      %572 = vmatprep.subr.mxu0 0.0
      %573 = vmatpush1.msra.mxu0 0.0
      %574 = vmatprep.subr.mxu0 %v542
      %575 = vmatpush1.msra.mxu0 %v540
      %576 = vmatprep.subr.mxu0 0.0
      %577 = vmatpush2.msra.mxu0 0.0
      %578 = vmatprep.subr.mxu0 0.0
      %579 = vmatpush2.msra.mxu0 0.0
      %580 = vmatprep.subr.mxu0 0.0
      %581 = vmatpush2.msra.mxu0 0.0
      %582 = vmatprep.subr.mxu0 0.0
      %583 = vmatpush2.msra.mxu0 0.0
      %584 = vmatprep.subr.mxu0 0.0
      %585 = vmatpush2.msra.mxu0 0.0
      %586 = vmatprep.subr.mxu0 0.0
      %587 = vmatpush2.msra.mxu0 0.0
      %588 = vmatprep.subr.mxu0 0.0
      %589 = vmatpush2.msra.mxu0 0.0
      %590 = vmatprep.subr.mxu0 0.0
      %591 = vmatpush2.msra.mxu0 0.0
      %592 = vmatprep.subr.mxu0 0.0
      %593 = vmatpush2.msra.mxu0 0.0
      %594 = vmatprep.subr.mxu0 0.0
      %595 = vmatpush2.msra.mxu0 0.0
      %596 = vmatprep.subr.mxu0 0.0
      %597 = vmatpush2.msra.mxu0 0.0
      %598 = vmatprep.subr.mxu0 0.0
      %599 = vmatpush2.msra.mxu0 0.0
      %600 = vmatprep.subr.mxu0 0.0
      %601 = vmatpush2.msra.mxu0 0.0
      %602 = vmatprep.subr.mxu0 0.0
      %603 = vmatpush2.msra.mxu0 0.0
      %604 = vmatprep.subr.mxu0 0.0
      %605 = vmatpush2.msra.mxu0 0.0
      %606 = vmatprep.subr.mxu0 0.0
      %607 = vmatpush2.msra.mxu0 0.0
      %608 = vmatprep.mubr.f32.mxu0 0.0
      %609 = vmatmul.mubr.f32.gmra.mxu0 %v383
      %v610 = vpop.f32.mrf.mxu0
      %v611 = vadd.f32 %v377, %v610
      %v612 = vpop.f32.mrf.mxu0
      %v613 = vadd.f32 %v377, %v612
      %614 = vdwg.mxu0
      %v616 = vcombine.high %v371, %v371
      %v617 = vsel %vm385, %v371, 0
      %v619 = vsel %vm385, %v616, 0
      %621 = vmatprep.subr.mxu0 0.0
      %622 = vmatpush1.msra.mxu0 0.0
      %623 = vmatprep.subr.mxu0 0.0
      %624 = vmatpush1.msra.mxu0 0.0
      %625 = vmatprep.subr.mxu0 0.0
      %626 = vmatpush1.msra.mxu0 0.0
      %627 = vmatprep.subr.mxu0 0.0
      %628 = vmatpush1.msra.mxu0 0.0
      %629 = vmatprep.subr.mxu0 0.0
      %630 = vmatpush1.msra.mxu0 0.0
      %631 = vmatprep.subr.mxu0 0.0
      %632 = vmatpush1.msra.mxu0 0.0
      %633 = vmatprep.subr.mxu0 0.0
      %634 = vmatpush1.msra.mxu0 0.0
      %635 = vmatprep.subr.mxu0 0.0
      %636 = vmatpush1.msra.mxu0 0.0
      %637 = vmatprep.subr.mxu0 0.0
      %638 = vmatpush1.msra.mxu0 0.0
      %639 = vmatprep.subr.mxu0 0.0
      %640 = vmatpush1.msra.mxu0 0.0
      %641 = vmatprep.subr.mxu0 0.0
      %642 = vmatpush1.msra.mxu0 0.0
      %643 = vmatprep.subr.mxu0 0.0
      %644 = vmatpush1.msra.mxu0 0.0
      %645 = vmatprep.subr.mxu0 0.0
      %646 = vmatpush1.msra.mxu0 0.0
      %647 = vmatprep.subr.mxu0 0.0
      %648 = vmatpush1.msra.mxu0 0.0
      %649 = vmatprep.subr.mxu0 0.0
      %650 = vmatpush1.msra.mxu0 0.0
      %651 = vmatprep.subr.mxu0 %v619
      %652 = vmatpush1.msra.mxu0 %v617
      %653 = vmatprep.subr.mxu0 0.0
      %654 = vmatpush2.msra.mxu0 0.0
      %655 = vmatprep.subr.mxu0 0.0
      %656 = vmatpush2.msra.mxu0 0.0
      %657 = vmatprep.subr.mxu0 0.0
      %658 = vmatpush2.msra.mxu0 0.0
      %659 = vmatprep.subr.mxu0 0.0
      %660 = vmatpush2.msra.mxu0 0.0
      %661 = vmatprep.subr.mxu0 0.0
      %662 = vmatpush2.msra.mxu0 0.0
      %663 = vmatprep.subr.mxu0 0.0
      %664 = vmatpush2.msra.mxu0 0.0
      %665 = vmatprep.subr.mxu0 0.0
      %666 = vmatpush2.msra.mxu0 0.0
      %667 = vmatprep.subr.mxu0 0.0
      %668 = vmatpush2.msra.mxu0 0.0
      %669 = vmatprep.subr.mxu0 0.0
      %670 = vmatpush2.msra.mxu0 0.0
      %671 = vmatprep.subr.mxu0 0.0
      %672 = vmatpush2.msra.mxu0 0.0
      %673 = vmatprep.subr.mxu0 0.0
      %674 = vmatpush2.msra.mxu0 0.0
      %675 = vmatprep.subr.mxu0 0.0
      %676 = vmatpush2.msra.mxu0 0.0
      %677 = vmatprep.subr.mxu0 0.0
      %678 = vmatpush2.msra.mxu0 0.0
      %679 = vmatprep.subr.mxu0 0.0
      %680 = vmatpush2.msra.mxu0 0.0
      %681 = vmatprep.subr.mxu0 0.0
      %682 = vmatpush2.msra.mxu0 0.0
      %683 = vmatprep.subr.mxu0 0.0
      %684 = vmatpush2.msra.mxu0 0.0
      %685 = vmatprep.mubr.f32.mxu0 0.0
      %686 = vmatmul.mubr.f32.gmra.mxu0 %v383
      %v687 = vpop.f32.mrf.mxu0
      %v688 = vadd.f32 %v377, %v687
      %v689 = vpop.f32.mrf.mxu0
      %v690 = vadd.f32 %v377, %v689
      %691 = vdwg.mxu0
      %v696 = vsel %vm385, %v368, 0.0
      %v697 = vsel %vm385, %v380, 0.0
      %v698 = vadd.f32 %v696, %v697
      %699 = vadd.xlane.f32.xlu0 %v698
      %v700 = vpop.xlane.xlu0 %699
      %v701 = vsel %vm385, %v369, 0.0
      %v702 = vsel %vm385, %v462, 0.0
      %v703 = vadd.f32 %v701, %v702
      %704 = vadd.xlane.f32.xlu0 %v703
      %v705 = vpop.xlane.xlu0 %704
      %v706 = vsel %vm385, %v370, 0.0
      %v707 = vsel %vm385, %v539, 0.0
      %v708 = vadd.f32 %v706, %v707
      %709 = vadd.xlane.f32.xlu0 %v708
      %v710 = vpop.xlane.xlu0 %709
      %v711 = vsel %vm385, %v371, 0.0
      %v712 = vsel %vm385, %v616, 0.0
      %v713 = vadd.f32 %v711, %v712
      %714 = vadd.xlane.f32.xlu0 %v713
      %v715 = vpop.xlane.xlu0 %714
      %v716 = vmul.f32 %v700, 0.00390625
      %v717 = vmul.f32 %v705, 0.00390625
      %v718 = vmul.f32 %v710, 0.00390625
      %v719 = vmul.f32 %v715, 0.00390625
      %v725 = vunpack.c.l.s4 839922192
      %v726 = vunpack.c.0.s8 %v725
      %v727 = vlaneseq
      %v728 = vshrl.u32 %v727, 7
      %v729 = vsub.s32 %v726, %v728
      %v730 = vrot.slane %v716, %v729
      %v732 = vunpack.c.l.s4 839922192
      %v733 = vunpack.c.0.s8 %v732
      %v734 = vlaneseq
      %v735 = vshrl.u32 %v734, 7
      %v736 = vsub.s32 %v733, %v735
      %v737 = vrot.slane %v717, %v736
      %v739 = vunpack.c.l.s4 839922192
      %v740 = vunpack.c.0.s8 %v739
      %v741 = vlaneseq
      %v742 = vshrl.u32 %v741, 7
      %v743 = vsub.s32 %v740, %v742
      %v744 = vrot.slane %v718, %v743
      %v746 = vunpack.c.l.s4 839922192
      %v747 = vunpack.c.0.s8 %v746
      %v748 = vlaneseq
      %v749 = vshrl.u32 %v748, 7
      %v750 = vsub.s32 %v747, %v749
      %v751 = vrot.slane %v719, %v750
      %v756 = vsub.f32 %v368, %v730
      %v757 = vsub.f32 %v369, %v737
      %v758 = vsub.f32 %v370, %v744
      %v759 = vsub.f32 %v371, %v751
      %v760 = vmul.f32 %v756, %v756
      %v761 = vmul.f32 %v757, %v757
      %v762 = vmul.f32 %v758, %v758
      %v763 = vmul.f32 %v759, %v759
      %v768 = vcombine.high %v760, %v760
      %v769 = vcombine.high %v761, %v761
      %v770 = vcombine.high %v762, %v762
      %v771 = vcombine.high %v763, %v763
      %v776 = vsel %vm385, %v760, 0.0
      %v777 = vsel %vm385, %v768, 0.0
      %v778 = vadd.f32 %v776, %v777
      %779 = vadd.xlane.f32.xlu0 %v778
      %v780 = vpop.xlane.xlu0 %779
      %v781 = vsel %vm385, %v761, 0.0
      %v782 = vsel %vm385, %v769, 0.0
      %v783 = vadd.f32 %v781, %v782
      %784 = vadd.xlane.f32.xlu0 %v783
      %v785 = vpop.xlane.xlu0 %784
      %v786 = vsel %vm385, %v762, 0.0
      %v787 = vsel %vm385, %v770, 0.0
      %v788 = vadd.f32 %v786, %v787
      %789 = vadd.xlane.f32.xlu0 %v788
      %v790 = vpop.xlane.xlu0 %789
      %v791 = vsel %vm385, %v763, 0.0
      %v792 = vsel %vm385, %v771, 0.0
      %v793 = vadd.f32 %v791, %v792
      %794 = vadd.xlane.f32.xlu0 %v793
      %v795 = vpop.xlane.xlu0 %794
      %v796 = vmul.f32 %v780, 0.00390625
      %v797 = vmul.f32 %v785, 0.00390625
      %v798 = vmul.f32 %v790, 0.00390625
      %v799 = vmul.f32 %v795, 0.00390625
      %v800 = vadd.f32 %v796, 1e-05
      %v801 = vadd.f32 %v797, 1e-05
      %v802 = vadd.f32 %v798, 1e-05
      %v803 = vadd.f32 %v799, 1e-05
      %v804 = vrsqrt.pop %v800
      %v805 = vrsqrt.pop %v801
      %v806 = vrsqrt.pop %v802
      %v807 = vrsqrt.pop %v803
      %v813 = vunpack.c.l.s4 839922192
      %v814 = vunpack.c.0.s8 %v813
      %v815 = vlaneseq
      %v816 = vshrl.u32 %v815, 7
      %v817 = vsub.s32 %v814, %v816
      %v818 = vrot.slane %v804, %v817
      %v820 = vunpack.c.l.s4 839922192
      %v821 = vunpack.c.0.s8 %v820
      %v822 = vlaneseq
      %v823 = vshrl.u32 %v822, 7
      %v824 = vsub.s32 %v821, %v823
      %v825 = vrot.slane %v805, %v824
      %v827 = vunpack.c.l.s4 839922192
      %v828 = vunpack.c.0.s8 %v827
      %v829 = vlaneseq
      %v830 = vshrl.u32 %v829, 7
      %v831 = vsub.s32 %v828, %v830
      %v832 = vrot.slane %v806, %v831
      %v834 = vunpack.c.l.s4 839922192
      %v835 = vunpack.c.0.s8 %v834
      %v836 = vlaneseq
      %v837 = vshrl.u32 %v836, 7
      %v838 = vsub.s32 %v835, %v837
      %v839 = vrot.slane %v807, %v838
      %v844 = vmul.f32 %v756, %v818
      %v845 = vmul.f32 %v757, %v825
      %v846 = vmul.f32 %v758, %v832
      %v847 = vmul.f32 %v759, %v839
      %vm848 = vcmp.ge.f32.partialorder %v844, 0.0
      %vm849 = vcmp.ge.f32.partialorder %v845, 0.0
      %vm850 = vcmp.ge.f32.partialorder %v846, 0.0
      %vm851 = vcmp.ge.f32.partialorder %v847, 0.0
      %v852 = vmul.f32 %v844, 0.01
      %v853 = vmul.f32 %v845, 0.01
      %v854 = vmul.f32 %v846, 0.01
      %v855 = vmul.f32 %v847, 0.01
      %v856 = vsel %vm848, %v844, %v852
      %v857 = vsel %vm849, %v845, %v853
      %v858 = vsel %vm850, %v846, %v854
      %v859 = vsel %vm851, %v847, %v855
      %v860 = vld [vmem:[%s2] sm:$0xf]
      %v861 = vld [vmem:[%s3] sm:$0xf]
      %863 = vset.pattern.permute.xlu0 0
      %864 = vperm.xlu0 %863, %v861
      %v865 = vpop.permute.xlu0 %864
      %v868 = vcombine.high %v856, %v856
      %v870 = vsel %vm381, %v860, 0
      %v872 = vsel %vm385, %v856, 0
      %v874 = vsel %vm385, %v868, 0
      %876 = vmatprep.subr.mxu0 0.0
      %877 = vmatpush1.msra.mxu0 0.0
      %878 = vmatprep.subr.mxu0 0.0
      %879 = vmatpush1.msra.mxu0 0.0
      %880 = vmatprep.subr.mxu0 0.0
      %881 = vmatpush1.msra.mxu0 0.0
      %882 = vmatprep.subr.mxu0 0.0
      %883 = vmatpush1.msra.mxu0 0.0
      %884 = vmatprep.subr.mxu0 0.0
      %885 = vmatpush1.msra.mxu0 0.0
      %886 = vmatprep.subr.mxu0 0.0
      %887 = vmatpush1.msra.mxu0 0.0
      %888 = vmatprep.subr.mxu0 0.0
      %889 = vmatpush1.msra.mxu0 0.0
      %890 = vmatprep.subr.mxu0 0.0
      %891 = vmatpush1.msra.mxu0 0.0
      %892 = vmatprep.subr.mxu0 0.0
      %893 = vmatpush1.msra.mxu0 0.0
      %894 = vmatprep.subr.mxu0 0.0
      %895 = vmatpush1.msra.mxu0 0.0
      %896 = vmatprep.subr.mxu0 0.0
      %897 = vmatpush1.msra.mxu0 0.0
      %898 = vmatprep.subr.mxu0 0.0
      %899 = vmatpush1.msra.mxu0 0.0
      %900 = vmatprep.subr.mxu0 0.0
      %901 = vmatpush1.msra.mxu0 0.0
      %902 = vmatprep.subr.mxu0 0.0
      %903 = vmatpush1.msra.mxu0 0.0
      %904 = vmatprep.subr.mxu0 0.0
      %905 = vmatpush1.msra.mxu0 0.0
      %906 = vmatprep.subr.mxu0 %v874
      %907 = vmatpush1.msra.mxu0 %v872
      %908 = vmatprep.subr.mxu0 0.0
      %909 = vmatpush2.msra.mxu0 0.0
      %910 = vmatprep.subr.mxu0 0.0
      %911 = vmatpush2.msra.mxu0 0.0
      %912 = vmatprep.subr.mxu0 0.0
      %913 = vmatpush2.msra.mxu0 0.0
      %914 = vmatprep.subr.mxu0 0.0
      %915 = vmatpush2.msra.mxu0 0.0
      %916 = vmatprep.subr.mxu0 0.0
      %917 = vmatpush2.msra.mxu0 0.0
      %918 = vmatprep.subr.mxu0 0.0
      %919 = vmatpush2.msra.mxu0 0.0
      %920 = vmatprep.subr.mxu0 0.0
      %921 = vmatpush2.msra.mxu0 0.0
      %922 = vmatprep.subr.mxu0 0.0
      %923 = vmatpush2.msra.mxu0 0.0
      %924 = vmatprep.subr.mxu0 0.0
      %925 = vmatpush2.msra.mxu0 0.0
      %926 = vmatprep.subr.mxu0 0.0
      %927 = vmatpush2.msra.mxu0 0.0
      %928 = vmatprep.subr.mxu0 0.0
      %929 = vmatpush2.msra.mxu0 0.0
      %930 = vmatprep.subr.mxu0 0.0
      %931 = vmatpush2.msra.mxu0 0.0
      %932 = vmatprep.subr.mxu0 0.0
      %933 = vmatpush2.msra.mxu0 0.0
      %934 = vmatprep.subr.mxu0 0.0
      %935 = vmatpush2.msra.mxu0 0.0
      %936 = vmatprep.subr.mxu0 0.0
      %937 = vmatpush2.msra.mxu0 0.0
      %938 = vmatprep.subr.mxu0 0.0
      %939 = vmatpush2.msra.mxu0 0.0
      %940 = vmatprep.mubr.f32.mxu0 0.0
      %941 = vmatmul.mubr.f32.gmra.mxu0 %v870
      %v942 = vpop.f32.mrf.mxu0
      %v943 = vadd.f32 %v865, %v942
      %v944 = vpop.f32.mrf.mxu0
      %v945 = vadd.f32 %v865, %v944
      %946 = vdwg.mxu0
      %v948 = vcombine.high %v857, %v857
      %v949 = vsel %vm385, %v857, 0
      %v951 = vsel %vm385, %v948, 0
      %953 = vmatprep.subr.mxu0 0.0
      %954 = vmatpush1.msra.mxu0 0.0
      %955 = vmatprep.subr.mxu0 0.0
      %956 = vmatpush1.msra.mxu0 0.0
      %957 = vmatprep.subr.mxu0 0.0
      %958 = vmatpush1.msra.mxu0 0.0
      %959 = vmatprep.subr.mxu0 0.0
      %960 = vmatpush1.msra.mxu0 0.0
      %961 = vmatprep.subr.mxu0 0.0
      %962 = vmatpush1.msra.mxu0 0.0
      %963 = vmatprep.subr.mxu0 0.0
      %964 = vmatpush1.msra.mxu0 0.0
      %965 = vmatprep.subr.mxu0 0.0
      %966 = vmatpush1.msra.mxu0 0.0
      %967 = vmatprep.subr.mxu0 0.0
      %968 = vmatpush1.msra.mxu0 0.0
      %969 = vmatprep.subr.mxu0 0.0
      %970 = vmatpush1.msra.mxu0 0.0
      %971 = vmatprep.subr.mxu0 0.0
      %972 = vmatpush1.msra.mxu0 0.0
      %973 = vmatprep.subr.mxu0 0.0
      %974 = vmatpush1.msra.mxu0 0.0
      %975 = vmatprep.subr.mxu0 0.0
      %976 = vmatpush1.msra.mxu0 0.0
      %977 = vmatprep.subr.mxu0 0.0
      %978 = vmatpush1.msra.mxu0 0.0
      %979 = vmatprep.subr.mxu0 0.0
      %980 = vmatpush1.msra.mxu0 0.0
      %981 = vmatprep.subr.mxu0 0.0
      %982 = vmatpush1.msra.mxu0 0.0
      %983 = vmatprep.subr.mxu0 %v951
      %984 = vmatpush1.msra.mxu0 %v949
      %985 = vmatprep.subr.mxu0 0.0
      %986 = vmatpush2.msra.mxu0 0.0
      %987 = vmatprep.subr.mxu0 0.0
      %988 = vmatpush2.msra.mxu0 0.0
      %989 = vmatprep.subr.mxu0 0.0
      %990 = vmatpush2.msra.mxu0 0.0
      %991 = vmatprep.subr.mxu0 0.0
      %992 = vmatpush2.msra.mxu0 0.0
      %993 = vmatprep.subr.mxu0 0.0
      %994 = vmatpush2.msra.mxu0 0.0
      %995 = vmatprep.subr.mxu0 0.0
      %996 = vmatpush2.msra.mxu0 0.0
      %997 = vmatprep.subr.mxu0 0.0
      %998 = vmatpush2.msra.mxu0 0.0
      %999 = vmatprep.subr.mxu0 0.0
      %1000 = vmatpush2.msra.mxu0 0.0
      %1001 = vmatprep.subr.mxu0 0.0
      %1002 = vmatpush2.msra.mxu0 0.0
      %1003 = vmatprep.subr.mxu0 0.0
      %1004 = vmatpush2.msra.mxu0 0.0
      %1005 = vmatprep.subr.mxu0 0.0
      %1006 = vmatpush2.msra.mxu0 0.0
      %1007 = vmatprep.subr.mxu0 0.0
      %1008 = vmatpush2.msra.mxu0 0.0
      %1009 = vmatprep.subr.mxu0 0.0
      %1010 = vmatpush2.msra.mxu0 0.0
      %1011 = vmatprep.subr.mxu0 0.0
      %1012 = vmatpush2.msra.mxu0 0.0
      %1013 = vmatprep.subr.mxu0 0.0
      %1014 = vmatpush2.msra.mxu0 0.0
      %1015 = vmatprep.subr.mxu0 0.0
      %1016 = vmatpush2.msra.mxu0 0.0
      %1017 = vmatprep.mubr.f32.mxu0 0.0
      %1018 = vmatmul.mubr.f32.gmra.mxu0 %v870
      %v1019 = vpop.f32.mrf.mxu0
      %v1020 = vadd.f32 %v865, %v1019
      %v1021 = vpop.f32.mrf.mxu0
      %v1022 = vadd.f32 %v865, %v1021
      %1023 = vdwg.mxu0
      %v1025 = vcombine.high %v858, %v858
      %v1026 = vsel %vm385, %v858, 0
      %v1028 = vsel %vm385, %v1025, 0
      %1030 = vmatprep.subr.mxu0 0.0
      %1031 = vmatpush1.msra.mxu0 0.0
      %1032 = vmatprep.subr.mxu0 0.0
      %1033 = vmatpush1.msra.mxu0 0.0
      %1034 = vmatprep.subr.mxu0 0.0
      %1035 = vmatpush1.msra.mxu0 0.0
      %1036 = vmatprep.subr.mxu0 0.0
      %1037 = vmatpush1.msra.mxu0 0.0
      %1038 = vmatprep.subr.mxu0 0.0
      %1039 = vmatpush1.msra.mxu0 0.0
      %1040 = vmatprep.subr.mxu0 0.0
      %1041 = vmatpush1.msra.mxu0 0.0
      %1042 = vmatprep.subr.mxu0 0.0
      %1043 = vmatpush1.msra.mxu0 0.0
      %1044 = vmatprep.subr.mxu0 0.0
      %1045 = vmatpush1.msra.mxu0 0.0
      %1046 = vmatprep.subr.mxu0 0.0
      %1047 = vmatpush1.msra.mxu0 0.0
      %1048 = vmatprep.subr.mxu0 0.0
      %1049 = vmatpush1.msra.mxu0 0.0
      %1050 = vmatprep.subr.mxu0 0.0
      %1051 = vmatpush1.msra.mxu0 0.0
      %1052 = vmatprep.subr.mxu0 0.0
      %1053 = vmatpush1.msra.mxu0 0.0
      %1054 = vmatprep.subr.mxu0 0.0
      %1055 = vmatpush1.msra.mxu0 0.0
      %1056 = vmatprep.subr.mxu0 0.0
      %1057 = vmatpush1.msra.mxu0 0.0
      %1058 = vmatprep.subr.mxu0 0.0
      %1059 = vmatpush1.msra.mxu0 0.0
      %1060 = vmatprep.subr.mxu0 %v1028
      %1061 = vmatpush1.msra.mxu0 %v1026
      %1062 = vmatprep.subr.mxu0 0.0
      %1063 = vmatpush2.msra.mxu0 0.0
      %1064 = vmatprep.subr.mxu0 0.0
      %1065 = vmatpush2.msra.mxu0 0.0
      %1066 = vmatprep.subr.mxu0 0.0
      %1067 = vmatpush2.msra.mxu0 0.0
      %1068 = vmatprep.subr.mxu0 0.0
      %1069 = vmatpush2.msra.mxu0 0.0
      %1070 = vmatprep.subr.mxu0 0.0
      %1071 = vmatpush2.msra.mxu0 0.0
      %1072 = vmatprep.subr.mxu0 0.0
      %1073 = vmatpush2.msra.mxu0 0.0
      %1074 = vmatprep.subr.mxu0 0.0
      %1075 = vmatpush2.msra.mxu0 0.0
      %1076 = vmatprep.subr.mxu0 0.0
      %1077 = vmatpush2.msra.mxu0 0.0
      %1078 = vmatprep.subr.mxu0 0.0
      %1079 = vmatpush2.msra.mxu0 0.0
      %1080 = vmatprep.subr.mxu0 0.0
      %1081 = vmatpush2.msra.mxu0 0.0
      %1082 = vmatprep.subr.mxu0 0.0
      %1083 = vmatpush2.msra.mxu0 0.0
      %1084 = vmatprep.subr.mxu0 0.0
      %1085 = vmatpush2.msra.mxu0 0.0
      %1086 = vmatprep.subr.mxu0 0.0
      %1087 = vmatpush2.msra.mxu0 0.0
      %1088 = vmatprep.subr.mxu0 0.0
      %1089 = vmatpush2.msra.mxu0 0.0
      %1090 = vmatprep.subr.mxu0 0.0
      %1091 = vmatpush2.msra.mxu0 0.0
      %1092 = vmatprep.subr.mxu0 0.0
      %1093 = vmatpush2.msra.mxu0 0.0
      %1094 = vmatprep.mubr.f32.mxu0 0.0
      %1095 = vmatmul.mubr.f32.gmra.mxu0 %v870
      %v1096 = vpop.f32.mrf.mxu0
      %v1097 = vadd.f32 %v865, %v1096
      %v1098 = vpop.f32.mrf.mxu0
      %v1099 = vadd.f32 %v865, %v1098
      %1100 = vdwg.mxu0
      %v1102 = vcombine.high %v859, %v859
      %v1103 = vsel %vm385, %v859, 0
      %v1105 = vsel %vm385, %v1102, 0
      %1107 = vmatprep.subr.mxu0 0.0
      %1108 = vmatpush1.msra.mxu0 0.0
      %1109 = vmatprep.subr.mxu0 0.0
      %1110 = vmatpush1.msra.mxu0 0.0
      %1111 = vmatprep.subr.mxu0 0.0
      %1112 = vmatpush1.msra.mxu0 0.0
      %1113 = vmatprep.subr.mxu0 0.0
      %1114 = vmatpush1.msra.mxu0 0.0
      %1115 = vmatprep.subr.mxu0 0.0
      %1116 = vmatpush1.msra.mxu0 0.0
      %1117 = vmatprep.subr.mxu0 0.0
      %1118 = vmatpush1.msra.mxu0 0.0
      %1119 = vmatprep.subr.mxu0 0.0
      %1120 = vmatpush1.msra.mxu0 0.0
      %1121 = vmatprep.subr.mxu0 0.0
      %1122 = vmatpush1.msra.mxu0 0.0
      %1123 = vmatprep.subr.mxu0 0.0
      %1124 = vmatpush1.msra.mxu0 0.0
      %1125 = vmatprep.subr.mxu0 0.0
      %1126 = vmatpush1.msra.mxu0 0.0
      %1127 = vmatprep.subr.mxu0 0.0
      %1128 = vmatpush1.msra.mxu0 0.0
      %1129 = vmatprep.subr.mxu0 0.0
      %1130 = vmatpush1.msra.mxu0 0.0
      %1131 = vmatprep.subr.mxu0 0.0
      %1132 = vmatpush1.msra.mxu0 0.0
      %1133 = vmatprep.subr.mxu0 0.0
      %1134 = vmatpush1.msra.mxu0 0.0
      %1135 = vmatprep.subr.mxu0 0.0
      %1136 = vmatpush1.msra.mxu0 0.0
      %1137 = vmatprep.subr.mxu0 %v1105
      %1138 = vmatpush1.msra.mxu0 %v1103
      %1139 = vmatprep.subr.mxu0 0.0
      %1140 = vmatpush2.msra.mxu0 0.0
      %1141 = vmatprep.subr.mxu0 0.0
      %1142 = vmatpush2.msra.mxu0 0.0
      %1143 = vmatprep.subr.mxu0 0.0
      %1144 = vmatpush2.msra.mxu0 0.0
      %1145 = vmatprep.subr.mxu0 0.0
      %1146 = vmatpush2.msra.mxu0 0.0
      %1147 = vmatprep.subr.mxu0 0.0
      %1148 = vmatpush2.msra.mxu0 0.0
      %1149 = vmatprep.subr.mxu0 0.0
      %1150 = vmatpush2.msra.mxu0 0.0
      %1151 = vmatprep.subr.mxu0 0.0
      %1152 = vmatpush2.msra.mxu0 0.0
      %1153 = vmatprep.subr.mxu0 0.0
      %1154 = vmatpush2.msra.mxu0 0.0
      %1155 = vmatprep.subr.mxu0 0.0
      %1156 = vmatpush2.msra.mxu0 0.0
      %1157 = vmatprep.subr.mxu0 0.0
      %1158 = vmatpush2.msra.mxu0 0.0
      %1159 = vmatprep.subr.mxu0 0.0
      %1160 = vmatpush2.msra.mxu0 0.0
      %1161 = vmatprep.subr.mxu0 0.0
      %1162 = vmatpush2.msra.mxu0 0.0
      %1163 = vmatprep.subr.mxu0 0.0
      %1164 = vmatpush2.msra.mxu0 0.0
      %1165 = vmatprep.subr.mxu0 0.0
      %1166 = vmatpush2.msra.mxu0 0.0
      %1167 = vmatprep.subr.mxu0 0.0
      %1168 = vmatpush2.msra.mxu0 0.0
      %1169 = vmatprep.subr.mxu0 0.0
      %1170 = vmatpush2.msra.mxu0 0.0
      %1171 = vmatprep.mubr.f32.mxu0 0.0
      %1172 = vmatmul.mubr.f32.gmra.mxu0 %v870
      %v1173 = vpop.f32.mrf.mxu0
      %v1174 = vadd.f32 %v865, %v1173
      %v1175 = vpop.f32.mrf.mxu0
      %v1176 = vadd.f32 %v865, %v1175
      %1177 = vdwg.mxu0
      %v1178 = vsel %vm385, %v943, 0.0
      %v1179 = vsel %vm385, %v945, 0.0
      %v1180 = vadd.f32 %v1178, %v1179
      %1181 = vadd.xlane.f32.xlu0 %v1180
      %v1182 = vpop.xlane.xlu0 %1181
      %v1183 = vsel %vm385, %v1020, 0.0
      %v1184 = vsel %vm385, %v1022, 0.0
      %v1185 = vadd.f32 %v1183, %v1184
      %1186 = vadd.xlane.f32.xlu0 %v1185
      %v1187 = vpop.xlane.xlu0 %1186
      %v1188 = vsel %vm385, %v1097, 0.0
      %v1189 = vsel %vm385, %v1099, 0.0
      %v1190 = vadd.f32 %v1188, %v1189
      %1191 = vadd.xlane.f32.xlu0 %v1190
      %v1192 = vpop.xlane.xlu0 %1191
      %v1193 = vsel %vm385, %v1174, 0.0
      %v1194 = vsel %vm385, %v1176, 0.0
      %v1195 = vadd.f32 %v1193, %v1194
      %1196 = vadd.xlane.f32.xlu0 %v1195
      %v1197 = vpop.xlane.xlu0 %1196
      %v1198 = vmul.f32 %v1182, 0.00390625
      %v1199 = vmul.f32 %v1187, 0.00390625
      %v1200 = vmul.f32 %v1192, 0.00390625
      %v1201 = vmul.f32 %v1197, 0.00390625
      %v1202 = vsub.f32 %v943, %v1198
      %v1203 = vsub.f32 %v945, %v1198
      %v1204 = vsub.f32 %v1020, %v1199
      %v1205 = vsub.f32 %v1022, %v1199
      %v1206 = vsub.f32 %v1097, %v1200
      %v1207 = vsub.f32 %v1099, %v1200
      %v1208 = vsub.f32 %v1174, %v1201
      %v1209 = vsub.f32 %v1176, %v1201
      %v1210 = vmul.f32 %v1202, %v1202
      %v1211 = vmul.f32 %v1203, %v1203
      %v1212 = vmul.f32 %v1204, %v1204
      %v1213 = vmul.f32 %v1205, %v1205
      %v1214 = vmul.f32 %v1206, %v1206
      %v1215 = vmul.f32 %v1207, %v1207
      %v1216 = vmul.f32 %v1208, %v1208
      %v1217 = vmul.f32 %v1209, %v1209
      %v1218 = vsel %vm385, %v1210, 0.0
      %v1219 = vsel %vm385, %v1211, 0.0
      %v1220 = vadd.f32 %v1218, %v1219
      %1221 = vadd.xlane.f32.xlu0 %v1220
      %v1222 = vpop.xlane.xlu0 %1221
      %v1223 = vsel %vm385, %v1212, 0.0
      %v1224 = vsel %vm385, %v1213, 0.0
      %v1225 = vadd.f32 %v1223, %v1224
      %1226 = vadd.xlane.f32.xlu0 %v1225
      %v1227 = vpop.xlane.xlu0 %1226
      %v1228 = vsel %vm385, %v1214, 0.0
      %v1229 = vsel %vm385, %v1215, 0.0
      %v1230 = vadd.f32 %v1228, %v1229
      %1231 = vadd.xlane.f32.xlu0 %v1230
      %v1232 = vpop.xlane.xlu0 %1231
      %v1233 = vsel %vm385, %v1216, 0.0
      %v1234 = vsel %vm385, %v1217, 0.0
      %v1235 = vadd.f32 %v1233, %v1234
      %1236 = vadd.xlane.f32.xlu0 %v1235
      %v1237 = vpop.xlane.xlu0 %1236
      %v1238 = vmul.f32 %v1222, 0.00390625
      %v1239 = vmul.f32 %v1227, 0.00390625
      %v1240 = vmul.f32 %v1232, 0.00390625
      %v1241 = vmul.f32 %v1237, 0.00390625
      %v1242 = vadd.f32 %v1238, 1e-05
      %v1243 = vadd.f32 %v1239, 1e-05
      %v1244 = vadd.f32 %v1240, 1e-05
      %v1245 = vadd.f32 %v1241, 1e-05
      %v1246 = vrsqrt.pop %v1242
      %v1247 = vrsqrt.pop %v1243
      %v1248 = vrsqrt.pop %v1244
      %v1249 = vrsqrt.pop %v1245
      %v1250 = vmul.f32 %v1202, %v1246
      %v1251 = vmul.f32 %v1203, %v1246
      %v1252 = vmul.f32 %v1204, %v1247
      %v1253 = vmul.f32 %v1205, %v1247
      %v1254 = vmul.f32 %v1206, %v1248
      %v1255 = vmul.f32 %v1207, %v1248
      %v1256 = vmul.f32 %v1208, %v1249
      %v1257 = vmul.f32 %v1209, %v1249
      %vm1258 = vcmp.ge.f32.partialorder %v1250, 0.0
      %vm1259 = vcmp.ge.f32.partialorder %v1251, 0.0
      %vm1260 = vcmp.ge.f32.partialorder %v1252, 0.0
      %vm1261 = vcmp.ge.f32.partialorder %v1253, 0.0
      %vm1262 = vcmp.ge.f32.partialorder %v1254, 0.0
      %vm1263 = vcmp.ge.f32.partialorder %v1255, 0.0
      %vm1264 = vcmp.ge.f32.partialorder %v1256, 0.0
      %vm1265 = vcmp.ge.f32.partialorder %v1257, 0.0
      %v1266 = vmul.f32 %v1250, 0.01
      %v1267 = vmul.f32 %v1251, 0.01
      %v1268 = vmul.f32 %v1252, 0.01
      %v1269 = vmul.f32 %v1253, 0.01
      %v1270 = vmul.f32 %v1254, 0.01
      %v1271 = vmul.f32 %v1255, 0.01
      %v1272 = vmul.f32 %v1256, 0.01
      %v1273 = vmul.f32 %v1257, 0.01
      %v1274 = vsel %vm1258, %v1250, %v1266
      %v1275 = vsel %vm1259, %v1251, %v1267
      %v1276 = vsel %vm1260, %v1252, %v1268
      %v1277 = vsel %vm1261, %v1253, %v1269
      %v1278 = vsel %vm1262, %v1254, %v1270
      %v1279 = vsel %vm1263, %v1255, %v1271
      %v1280 = vsel %vm1264, %v1256, %v1272
      %v1281 = vsel %vm1265, %v1257, %v1273
      %v1282 = vld [vmem:[%s4] sm:$0xf]
      %v1283 = vld [vmem:[%s4 + $0x4] sm:$0xf]
      %v1284 = vld [vmem:[%s4 + $0x8] sm:$0xf]
      %v1285 = vld [vmem:[%s4 + $0xc] sm:$0xf]
      %v1286 = vld [vmem:[%s4 + $0x10] sm:$0xf]
      %v1287 = vld [vmem:[%s4 + $0x14] sm:$0xf]
      %v1288 = vld [vmem:[%s4 + $0x18] sm:$0xf]
      %v1289 = vld [vmem:[%s4 + $0x1c] sm:$0xf]
      %v1290 = vld [vmem:[%s4 + $0x20] sm:$0xf]
      %v1291 = vld [vmem:[%s1] sm:$0xff]
      %v1292 = vld [vmem:[%s1 + $0x8] sm:$0xff]
      %v1293 = vld [vmem:[%s1 + $0x10] sm:$0x1]
      %v1294 = vld [vmem:[%s1 + $0x18] sm:$0x1]
      %v1295 = vld [vmem:[%s5] sm:$0xf]
      %1297 = vset.pattern.permute.xlu0 0
      %1298 = vperm.xlu0 %1297, %v1295
      %v1299 = vpop.permute.xlu0 %1298
      %v1302 = vsel %vm381, %v1286, 0
      %v1305 = vsel %vm385, %v1274, 0
      %v1308 = vsel %vm385, %v1275, 0
      %1310 = vmatprep.subr.mxu0 0.0
      %1311 = vmatpush1.msra.mxu0 0.0
      %1312 = vmatprep.subr.mxu0 0.0
      %1313 = vmatpush1.msra.mxu0 0.0
      %1314 = vmatprep.subr.mxu0 0.0
      %1315 = vmatpush1.msra.mxu0 0.0
      %1316 = vmatprep.subr.mxu0 0.0
      %1317 = vmatpush1.msra.mxu0 0.0
      %1318 = vmatprep.subr.mxu0 0.0
      %1319 = vmatpush1.msra.mxu0 0.0
      %1320 = vmatprep.subr.mxu0 0.0
      %1321 = vmatpush1.msra.mxu0 0.0
      %1322 = vmatprep.subr.mxu0 0.0
      %1323 = vmatpush1.msra.mxu0 0.0
      %1324 = vmatprep.subr.mxu0 0.0
      %1325 = vmatpush1.msra.mxu0 0.0
      %1326 = vmatprep.subr.mxu0 0.0
      %1327 = vmatpush1.msra.mxu0 0.0
      %1328 = vmatprep.subr.mxu0 0.0
      %1329 = vmatpush1.msra.mxu0 0.0
      %1330 = vmatprep.subr.mxu0 0.0
      %1331 = vmatpush1.msra.mxu0 0.0
      %1332 = vmatprep.subr.mxu0 0.0
      %1333 = vmatpush1.msra.mxu0 0.0
      %1334 = vmatprep.subr.mxu0 0.0
      %1335 = vmatpush1.msra.mxu0 0.0
      %1336 = vmatprep.subr.mxu0 0.0
      %1337 = vmatpush1.msra.mxu0 0.0
      %1338 = vmatprep.subr.mxu0 0.0
      %1339 = vmatpush1.msra.mxu0 0.0
      %1340 = vmatprep.subr.mxu0 %v1308
      %1341 = vmatpush1.msra.mxu0 %v1305
      %1342 = vmatprep.subr.mxu0 0.0
      %1343 = vmatpush2.msra.mxu0 0.0
      %1344 = vmatprep.subr.mxu0 0.0
      %1345 = vmatpush2.msra.mxu0 0.0
      %1346 = vmatprep.subr.mxu0 0.0
      %1347 = vmatpush2.msra.mxu0 0.0
      %1348 = vmatprep.subr.mxu0 0.0
      %1349 = vmatpush2.msra.mxu0 0.0
      %1350 = vmatprep.subr.mxu0 0.0
      %1351 = vmatpush2.msra.mxu0 0.0
      %1352 = vmatprep.subr.mxu0 0.0
      %1353 = vmatpush2.msra.mxu0 0.0
      %1354 = vmatprep.subr.mxu0 0.0
      %1355 = vmatpush2.msra.mxu0 0.0
      %1356 = vmatprep.subr.mxu0 0.0
      %1357 = vmatpush2.msra.mxu0 0.0
      %1358 = vmatprep.subr.mxu0 0.0
      %1359 = vmatpush2.msra.mxu0 0.0
      %1360 = vmatprep.subr.mxu0 0.0
      %1361 = vmatpush2.msra.mxu0 0.0
      %1362 = vmatprep.subr.mxu0 0.0
      %1363 = vmatpush2.msra.mxu0 0.0
      %1364 = vmatprep.subr.mxu0 0.0
      %1365 = vmatpush2.msra.mxu0 0.0
      %1366 = vmatprep.subr.mxu0 0.0
      %1367 = vmatpush2.msra.mxu0 0.0
      %1368 = vmatprep.subr.mxu0 0.0
      %1369 = vmatpush2.msra.mxu0 0.0
      %1370 = vmatprep.subr.mxu0 0.0
      %1371 = vmatpush2.msra.mxu0 0.0
      %1372 = vmatprep.subr.mxu0 0.0
      %1373 = vmatpush2.msra.mxu0 0.0
      %1374 = vmatprep.mubr.f32.mxu0 0.0
      %1375 = vmatmul.mubr.f32.gmra.mxu0 %v1302
      %v1376 = vpop.f32.mrf.mxu0
      %v1377 = vadd.f32 %v1299, %v1376
      %v1378 = vpop.f32.mrf.mxu0
      %v1379 = vadd.f32 %v1299, %v1378
      %1380 = vdwg.mxu0
      %v1382 = vsel %vm385, %v1276, 0
      %v1385 = vsel %vm385, %v1277, 0
      %1387 = vmatprep.subr.mxu0 0.0
      %1388 = vmatpush1.msra.mxu0 0.0
      %1389 = vmatprep.subr.mxu0 0.0
      %1390 = vmatpush1.msra.mxu0 0.0
      %1391 = vmatprep.subr.mxu0 0.0
      %1392 = vmatpush1.msra.mxu0 0.0
      %1393 = vmatprep.subr.mxu0 0.0
      %1394 = vmatpush1.msra.mxu0 0.0
      %1395 = vmatprep.subr.mxu0 0.0
      %1396 = vmatpush1.msra.mxu0 0.0
      %1397 = vmatprep.subr.mxu0 0.0
      %1398 = vmatpush1.msra.mxu0 0.0
      %1399 = vmatprep.subr.mxu0 0.0
      %1400 = vmatpush1.msra.mxu0 0.0
      %1401 = vmatprep.subr.mxu0 0.0
      %1402 = vmatpush1.msra.mxu0 0.0
      %1403 = vmatprep.subr.mxu0 0.0
      %1404 = vmatpush1.msra.mxu0 0.0
      %1405 = vmatprep.subr.mxu0 0.0
      %1406 = vmatpush1.msra.mxu0 0.0
      %1407 = vmatprep.subr.mxu0 0.0
      %1408 = vmatpush1.msra.mxu0 0.0
      %1409 = vmatprep.subr.mxu0 0.0
      %1410 = vmatpush1.msra.mxu0 0.0
      %1411 = vmatprep.subr.mxu0 0.0
      %1412 = vmatpush1.msra.mxu0 0.0
      %1413 = vmatprep.subr.mxu0 0.0
      %1414 = vmatpush1.msra.mxu0 0.0
      %1415 = vmatprep.subr.mxu0 0.0
      %1416 = vmatpush1.msra.mxu0 0.0
      %1417 = vmatprep.subr.mxu0 %v1385
      %1418 = vmatpush1.msra.mxu0 %v1382
      %1419 = vmatprep.subr.mxu0 0.0
      %1420 = vmatpush2.msra.mxu0 0.0
      %1421 = vmatprep.subr.mxu0 0.0
      %1422 = vmatpush2.msra.mxu0 0.0
      %1423 = vmatprep.subr.mxu0 0.0
      %1424 = vmatpush2.msra.mxu0 0.0
      %1425 = vmatprep.subr.mxu0 0.0
      %1426 = vmatpush2.msra.mxu0 0.0
      %1427 = vmatprep.subr.mxu0 0.0
      %1428 = vmatpush2.msra.mxu0 0.0
      %1429 = vmatprep.subr.mxu0 0.0
      %1430 = vmatpush2.msra.mxu0 0.0
      %1431 = vmatprep.subr.mxu0 0.0
      %1432 = vmatpush2.msra.mxu0 0.0
      %1433 = vmatprep.subr.mxu0 0.0
      %1434 = vmatpush2.msra.mxu0 0.0
      %1435 = vmatprep.subr.mxu0 0.0
      %1436 = vmatpush2.msra.mxu0 0.0
      %1437 = vmatprep.subr.mxu0 0.0
      %1438 = vmatpush2.msra.mxu0 0.0
      %1439 = vmatprep.subr.mxu0 0.0
      %1440 = vmatpush2.msra.mxu0 0.0
      %1441 = vmatprep.subr.mxu0 0.0
      %1442 = vmatpush2.msra.mxu0 0.0
      %1443 = vmatprep.subr.mxu0 0.0
      %1444 = vmatpush2.msra.mxu0 0.0
      %1445 = vmatprep.subr.mxu0 0.0
      %1446 = vmatpush2.msra.mxu0 0.0
      %1447 = vmatprep.subr.mxu0 0.0
      %1448 = vmatpush2.msra.mxu0 0.0
      %1449 = vmatprep.subr.mxu0 0.0
      %1450 = vmatpush2.msra.mxu0 0.0
      %1451 = vmatprep.mubr.f32.mxu0 0.0
      %1452 = vmatmul.mubr.f32.gmra.mxu0 %v1302
      %v1453 = vpop.f32.mrf.mxu0
      %v1454 = vadd.f32 %v1299, %v1453
      %v1455 = vpop.f32.mrf.mxu0
      %v1456 = vadd.f32 %v1299, %v1455
      %1457 = vdwg.mxu0
      %v1459 = vsel %vm385, %v1278, 0
      %v1462 = vsel %vm385, %v1279, 0
      %1464 = vmatprep.subr.mxu0 0.0
      %1465 = vmatpush1.msra.mxu0 0.0
      %1466 = vmatprep.subr.mxu0 0.0
      %1467 = vmatpush1.msra.mxu0 0.0
      %1468 = vmatprep.subr.mxu0 0.0
      %1469 = vmatpush1.msra.mxu0 0.0
      %1470 = vmatprep.subr.mxu0 0.0
      %1471 = vmatpush1.msra.mxu0 0.0
      %1472 = vmatprep.subr.mxu0 0.0
      %1473 = vmatpush1.msra.mxu0 0.0
      %1474 = vmatprep.subr.mxu0 0.0
      %1475 = vmatpush1.msra.mxu0 0.0
      %1476 = vmatprep.subr.mxu0 0.0
      %1477 = vmatpush1.msra.mxu0 0.0
      %1478 = vmatprep.subr.mxu0 0.0
      %1479 = vmatpush1.msra.mxu0 0.0
      %1480 = vmatprep.subr.mxu0 0.0
      %1481 = vmatpush1.msra.mxu0 0.0
      %1482 = vmatprep.subr.mxu0 0.0
      %1483 = vmatpush1.msra.mxu0 0.0
      %1484 = vmatprep.subr.mxu0 0.0
      %1485 = vmatpush1.msra.mxu0 0.0
      %1486 = vmatprep.subr.mxu0 0.0
      %1487 = vmatpush1.msra.mxu0 0.0
      %1488 = vmatprep.subr.mxu0 0.0
      %1489 = vmatpush1.msra.mxu0 0.0
      %1490 = vmatprep.subr.mxu0 0.0
      %1491 = vmatpush1.msra.mxu0 0.0
      %1492 = vmatprep.subr.mxu0 0.0
      %1493 = vmatpush1.msra.mxu0 0.0
      %1494 = vmatprep.subr.mxu0 %v1462
      %1495 = vmatpush1.msra.mxu0 %v1459
      %1496 = vmatprep.subr.mxu0 0.0
      %1497 = vmatpush2.msra.mxu0 0.0
      %1498 = vmatprep.subr.mxu0 0.0
      %1499 = vmatpush2.msra.mxu0 0.0
      %1500 = vmatprep.subr.mxu0 0.0
      %1501 = vmatpush2.msra.mxu0 0.0
      %1502 = vmatprep.subr.mxu0 0.0
      %1503 = vmatpush2.msra.mxu0 0.0
      %1504 = vmatprep.subr.mxu0 0.0
      %1505 = vmatpush2.msra.mxu0 0.0
      %1506 = vmatprep.subr.mxu0 0.0
      %1507 = vmatpush2.msra.mxu0 0.0
      %1508 = vmatprep.subr.mxu0 0.0
      %1509 = vmatpush2.msra.mxu0 0.0
      %1510 = vmatprep.subr.mxu0 0.0
      %1511 = vmatpush2.msra.mxu0 0.0
      %1512 = vmatprep.subr.mxu0 0.0
      %1513 = vmatpush2.msra.mxu0 0.0
      %1514 = vmatprep.subr.mxu0 0.0
      %1515 = vmatpush2.msra.mxu0 0.0
      %1516 = vmatprep.subr.mxu0 0.0
      %1517 = vmatpush2.msra.mxu0 0.0
      %1518 = vmatprep.subr.mxu0 0.0
      %1519 = vmatpush2.msra.mxu0 0.0
      %1520 = vmatprep.subr.mxu0 0.0
      %1521 = vmatpush2.msra.mxu0 0.0
      %1522 = vmatprep.subr.mxu0 0.0
      %1523 = vmatpush2.msra.mxu0 0.0
      %1524 = vmatprep.subr.mxu0 0.0
      %1525 = vmatpush2.msra.mxu0 0.0
      %1526 = vmatprep.subr.mxu0 0.0
      %1527 = vmatpush2.msra.mxu0 0.0
      %1528 = vmatprep.mubr.f32.mxu0 0.0
      %1529 = vmatmul.mubr.f32.gmra.mxu0 %v1302
      %v1530 = vpop.f32.mrf.mxu0
      %v1531 = vadd.f32 %v1299, %v1530
      %v1532 = vpop.f32.mrf.mxu0
      %v1533 = vadd.f32 %v1299, %v1532
      %1534 = vdwg.mxu0
      %v1536 = vsel %vm385, %v1280, 0
      %v1539 = vsel %vm385, %v1281, 0
      %1541 = vmatprep.subr.mxu0 0.0
      %1542 = vmatpush1.msra.mxu0 0.0
      %1543 = vmatprep.subr.mxu0 0.0
      %1544 = vmatpush1.msra.mxu0 0.0
      %1545 = vmatprep.subr.mxu0 0.0
      %1546 = vmatpush1.msra.mxu0 0.0
      %1547 = vmatprep.subr.mxu0 0.0
      %1548 = vmatpush1.msra.mxu0 0.0
      %1549 = vmatprep.subr.mxu0 0.0
      %1550 = vmatpush1.msra.mxu0 0.0
      %1551 = vmatprep.subr.mxu0 0.0
      %1552 = vmatpush1.msra.mxu0 0.0
      %1553 = vmatprep.subr.mxu0 0.0
      %1554 = vmatpush1.msra.mxu0 0.0
      %1555 = vmatprep.subr.mxu0 0.0
      %1556 = vmatpush1.msra.mxu0 0.0
      %1557 = vmatprep.subr.mxu0 0.0
      %1558 = vmatpush1.msra.mxu0 0.0
      %1559 = vmatprep.subr.mxu0 0.0
      %1560 = vmatpush1.msra.mxu0 0.0
      %1561 = vmatprep.subr.mxu0 0.0
      %1562 = vmatpush1.msra.mxu0 0.0
      %1563 = vmatprep.subr.mxu0 0.0
      %1564 = vmatpush1.msra.mxu0 0.0
      %1565 = vmatprep.subr.mxu0 0.0
      %1566 = vmatpush1.msra.mxu0 0.0
      %1567 = vmatprep.subr.mxu0 0.0
      %1568 = vmatpush1.msra.mxu0 0.0
      %1569 = vmatprep.subr.mxu0 0.0
      %1570 = vmatpush1.msra.mxu0 0.0
      %1571 = vmatprep.subr.mxu0 %v1539
      %1572 = vmatpush1.msra.mxu0 %v1536
      %1573 = vmatprep.subr.mxu0 0.0
      %1574 = vmatpush2.msra.mxu0 0.0
      %1575 = vmatprep.subr.mxu0 0.0
      %1576 = vmatpush2.msra.mxu0 0.0
      %1577 = vmatprep.subr.mxu0 0.0
      %1578 = vmatpush2.msra.mxu0 0.0
      %1579 = vmatprep.subr.mxu0 0.0
      %1580 = vmatpush2.msra.mxu0 0.0
      %1581 = vmatprep.subr.mxu0 0.0
      %1582 = vmatpush2.msra.mxu0 0.0
      %1583 = vmatprep.subr.mxu0 0.0
      %1584 = vmatpush2.msra.mxu0 0.0
      %1585 = vmatprep.subr.mxu0 0.0
      %1586 = vmatpush2.msra.mxu0 0.0
      %1587 = vmatprep.subr.mxu0 0.0
      %1588 = vmatpush2.msra.mxu0 0.0
      %1589 = vmatprep.subr.mxu0 0.0
      %1590 = vmatpush2.msra.mxu0 0.0
      %1591 = vmatprep.subr.mxu0 0.0
      %1592 = vmatpush2.msra.mxu0 0.0
      %1593 = vmatprep.subr.mxu0 0.0
      %1594 = vmatpush2.msra.mxu0 0.0
      %1595 = vmatprep.subr.mxu0 0.0
      %1596 = vmatpush2.msra.mxu0 0.0
      %1597 = vmatprep.subr.mxu0 0.0
      %1598 = vmatpush2.msra.mxu0 0.0
      %1599 = vmatprep.subr.mxu0 0.0
      %1600 = vmatpush2.msra.mxu0 0.0
      %1601 = vmatprep.subr.mxu0 0.0
      %1602 = vmatpush2.msra.mxu0 0.0
      %1603 = vmatprep.subr.mxu0 0.0
      %1604 = vmatpush2.msra.mxu0 0.0
      %1605 = vmatprep.mubr.f32.mxu0 0.0
      %1606 = vmatmul.mubr.f32.gmra.mxu0 %v1302
      %v1607 = vpop.f32.mrf.mxu0
      %v1608 = vadd.f32 %v1299, %v1607
      %v1609 = vpop.f32.mrf.mxu0
      %v1610 = vadd.f32 %v1299, %v1609
      %1611 = vdwg.mxu0
      %1612 = vrot.lane.b32.xlu0 %v1274, 17
      %v1613 = vpop.permute.xlu0 %1612
      %1614 = vrot.lane.b32.xlu0 %v1275, 17
      %v1615 = vpop.permute.xlu0 %1614
      %v1616 = vlaneseq
      %v1617 = vand.u32 %v1616, 127
      %vm1618 = vcmp.lt.s32.totalorder %v1617, 17
      %v1619 = vsel %vm1618, %v1613, %v1615
      %v1620 = vsel %vm1618, %v1615, %v1613
      %v1621 = vlaneseq
      %v1622 = vshrl.u32 %v1621, 7
      %v1623 = vsub.s32 0, %v1622
      %v1624 = vrot.slane %v1291, %v1623
      %v1625 = vlaneseq
      %v1626 = vshrl.u32 %v1625, 7
      %v1627 = vsub.s32 0, %v1626
      %v1628 = vrot.slane %v1292, %v1627
      %v1629 = vmul.f32 %v1620, %v1624
      %v1630 = vmul.f32 %v1619, %v1628
      %v1632 = vsel %vm381, %v1282, 0
      %v1635 = vsel %vm385, %v1629, 0
      %v1638 = vsel %vm385, %v1630, 0
      %1640 = vmatprep.subr.mxu0 0.0
      %1641 = vmatpush1.msra.mxu0 0.0
      %1642 = vmatprep.subr.mxu0 0.0
      %1643 = vmatpush1.msra.mxu0 0.0
      %1644 = vmatprep.subr.mxu0 0.0
      %1645 = vmatpush1.msra.mxu0 0.0
      %1646 = vmatprep.subr.mxu0 0.0
      %1647 = vmatpush1.msra.mxu0 0.0
      %1648 = vmatprep.subr.mxu0 0.0
      %1649 = vmatpush1.msra.mxu0 0.0
      %1650 = vmatprep.subr.mxu0 0.0
      %1651 = vmatpush1.msra.mxu0 0.0
      %1652 = vmatprep.subr.mxu0 0.0
      %1653 = vmatpush1.msra.mxu0 0.0
      %1654 = vmatprep.subr.mxu0 0.0
      %1655 = vmatpush1.msra.mxu0 0.0
      %1656 = vmatprep.subr.mxu0 0.0
      %1657 = vmatpush1.msra.mxu0 0.0
      %1658 = vmatprep.subr.mxu0 0.0
      %1659 = vmatpush1.msra.mxu0 0.0
      %1660 = vmatprep.subr.mxu0 0.0
      %1661 = vmatpush1.msra.mxu0 0.0
      %1662 = vmatprep.subr.mxu0 0.0
      %1663 = vmatpush1.msra.mxu0 0.0
      %1664 = vmatprep.subr.mxu0 0.0
      %1665 = vmatpush1.msra.mxu0 0.0
      %1666 = vmatprep.subr.mxu0 0.0
      %1667 = vmatpush1.msra.mxu0 0.0
      %1668 = vmatprep.subr.mxu0 0.0
      %1669 = vmatpush1.msra.mxu0 0.0
      %1670 = vmatprep.subr.mxu0 %v1638
      %1671 = vmatpush1.msra.mxu0 %v1635
      %1672 = vmatprep.subr.mxu0 0.0
      %1673 = vmatpush2.msra.mxu0 0.0
      %1674 = vmatprep.subr.mxu0 0.0
      %1675 = vmatpush2.msra.mxu0 0.0
      %1676 = vmatprep.subr.mxu0 0.0
      %1677 = vmatpush2.msra.mxu0 0.0
      %1678 = vmatprep.subr.mxu0 0.0
      %1679 = vmatpush2.msra.mxu0 0.0
      %1680 = vmatprep.subr.mxu0 0.0
      %1681 = vmatpush2.msra.mxu0 0.0
      %1682 = vmatprep.subr.mxu0 0.0
      %1683 = vmatpush2.msra.mxu0 0.0
      %1684 = vmatprep.subr.mxu0 0.0
      %1685 = vmatpush2.msra.mxu0 0.0
      %1686 = vmatprep.subr.mxu0 0.0
      %1687 = vmatpush2.msra.mxu0 0.0
      %1688 = vmatprep.subr.mxu0 0.0
      %1689 = vmatpush2.msra.mxu0 0.0
      %1690 = vmatprep.subr.mxu0 0.0
      %1691 = vmatpush2.msra.mxu0 0.0
      %1692 = vmatprep.subr.mxu0 0.0
      %1693 = vmatpush2.msra.mxu0 0.0
      %1694 = vmatprep.subr.mxu0 0.0
      %1695 = vmatpush2.msra.mxu0 0.0
      %1696 = vmatprep.subr.mxu0 0.0
      %1697 = vmatpush2.msra.mxu0 0.0
      %1698 = vmatprep.subr.mxu0 0.0
      %1699 = vmatpush2.msra.mxu0 0.0
      %1700 = vmatprep.subr.mxu0 0.0
      %1701 = vmatpush2.msra.mxu0 0.0
      %1702 = vmatprep.subr.mxu0 0.0
      %1703 = vmatpush2.msra.mxu0 0.0
      %1704 = vmatprep.mubr.f32.mxu0 0.0
      %1705 = vmatmul.mubr.f32.gmra.mxu0 %v1632
      %v1706 = vpop.f32.mrf.mxu0
      %v1707 = vadd.f32 0.0, %v1706
      %v1708 = vpop.f32.mrf.mxu0
      %v1709 = vadd.f32 0.0, %v1708
      %1710 = vdwg.mxu0
      %v1711 = vadd.f32 %v1377, %v1707
      %v1712 = vadd.f32 %v1379, %v1709
      %1713 = vrot.lane.b32.xlu0 %v1276, 17
      %v1714 = vpop.permute.xlu0 %1713
      %1715 = vrot.lane.b32.xlu0 %v1277, 17
      %v1716 = vpop.permute.xlu0 %1715
      %v1717 = vsel %vm1618, %v1714, %v1716
      %v1718 = vsel %vm1618, %v1716, %v1714
      %v1719 = vmul.f32 %v1718, %v1624
      %v1720 = vmul.f32 %v1717, %v1628
      %v1722 = vsel %vm385, %v1719, 0
      %v1725 = vsel %vm385, %v1720, 0
      %1727 = vmatprep.subr.mxu0 0.0
      %1728 = vmatpush1.msra.mxu0 0.0
      %1729 = vmatprep.subr.mxu0 0.0
      %1730 = vmatpush1.msra.mxu0 0.0
      %1731 = vmatprep.subr.mxu0 0.0
      %1732 = vmatpush1.msra.mxu0 0.0
      %1733 = vmatprep.subr.mxu0 0.0
      %1734 = vmatpush1.msra.mxu0 0.0
      %1735 = vmatprep.subr.mxu0 0.0
      %1736 = vmatpush1.msra.mxu0 0.0
      %1737 = vmatprep.subr.mxu0 0.0
      %1738 = vmatpush1.msra.mxu0 0.0
      %1739 = vmatprep.subr.mxu0 0.0
      %1740 = vmatpush1.msra.mxu0 0.0
      %1741 = vmatprep.subr.mxu0 0.0
      %1742 = vmatpush1.msra.mxu0 0.0
      %1743 = vmatprep.subr.mxu0 0.0
      %1744 = vmatpush1.msra.mxu0 0.0
      %1745 = vmatprep.subr.mxu0 0.0
      %1746 = vmatpush1.msra.mxu0 0.0
      %1747 = vmatprep.subr.mxu0 0.0
      %1748 = vmatpush1.msra.mxu0 0.0
      %1749 = vmatprep.subr.mxu0 0.0
      %1750 = vmatpush1.msra.mxu0 0.0
      %1751 = vmatprep.subr.mxu0 0.0
      %1752 = vmatpush1.msra.mxu0 0.0
      %1753 = vmatprep.subr.mxu0 0.0
      %1754 = vmatpush1.msra.mxu0 0.0
      %1755 = vmatprep.subr.mxu0 0.0
      %1756 = vmatpush1.msra.mxu0 0.0
      %1757 = vmatprep.subr.mxu0 %v1725
      %1758 = vmatpush1.msra.mxu0 %v1722
      %1759 = vmatprep.subr.mxu0 0.0
      %1760 = vmatpush2.msra.mxu0 0.0
      %1761 = vmatprep.subr.mxu0 0.0
      %1762 = vmatpush2.msra.mxu0 0.0
      %1763 = vmatprep.subr.mxu0 0.0
      %1764 = vmatpush2.msra.mxu0 0.0
      %1765 = vmatprep.subr.mxu0 0.0
      %1766 = vmatpush2.msra.mxu0 0.0
      %1767 = vmatprep.subr.mxu0 0.0
      %1768 = vmatpush2.msra.mxu0 0.0
      %1769 = vmatprep.subr.mxu0 0.0
      %1770 = vmatpush2.msra.mxu0 0.0
      %1771 = vmatprep.subr.mxu0 0.0
      %1772 = vmatpush2.msra.mxu0 0.0
      %1773 = vmatprep.subr.mxu0 0.0
      %1774 = vmatpush2.msra.mxu0 0.0
      %1775 = vmatprep.subr.mxu0 0.0
      %1776 = vmatpush2.msra.mxu0 0.0
      %1777 = vmatprep.subr.mxu0 0.0
      %1778 = vmatpush2.msra.mxu0 0.0
      %1779 = vmatprep.subr.mxu0 0.0
      %1780 = vmatpush2.msra.mxu0 0.0
      %1781 = vmatprep.subr.mxu0 0.0
      %1782 = vmatpush2.msra.mxu0 0.0
      %1783 = vmatprep.subr.mxu0 0.0
      %1784 = vmatpush2.msra.mxu0 0.0
      %1785 = vmatprep.subr.mxu0 0.0
      %1786 = vmatpush2.msra.mxu0 0.0
      %1787 = vmatprep.subr.mxu0 0.0
      %1788 = vmatpush2.msra.mxu0 0.0
      %1789 = vmatprep.subr.mxu0 0.0
      %1790 = vmatpush2.msra.mxu0 0.0
      %1791 = vmatprep.mubr.f32.mxu0 0.0
      %1792 = vmatmul.mubr.f32.gmra.mxu0 %v1632
      %v1793 = vpop.f32.mrf.mxu0
      %v1794 = vadd.f32 0.0, %v1793
      %v1795 = vpop.f32.mrf.mxu0
      %v1796 = vadd.f32 0.0, %v1795
      %1797 = vdwg.mxu0
      %v1798 = vadd.f32 %v1454, %v1794
      %v1799 = vadd.f32 %v1456, %v1796
      %1800 = vrot.lane.b32.xlu0 %v1278, 17
      %v1801 = vpop.permute.xlu0 %1800
      %1802 = vrot.lane.b32.xlu0 %v1279, 17
      %v1803 = vpop.permute.xlu0 %1802
      %v1804 = vsel %vm1618, %v1801, %v1803
      %v1805 = vsel %vm1618, %v1803, %v1801
      %v1806 = vmul.f32 %v1805, %v1624
      %v1807 = vmul.f32 %v1804, %v1628
      %v1809 = vsel %vm385, %v1806, 0
      %v1812 = vsel %vm385, %v1807, 0
      %1814 = vmatprep.subr.mxu0 0.0
      %1815 = vmatpush1.msra.mxu0 0.0
      %1816 = vmatprep.subr.mxu0 0.0
      %1817 = vmatpush1.msra.mxu0 0.0
      %1818 = vmatprep.subr.mxu0 0.0
      %1819 = vmatpush1.msra.mxu0 0.0
      %1820 = vmatprep.subr.mxu0 0.0
      %1821 = vmatpush1.msra.mxu0 0.0
      %1822 = vmatprep.subr.mxu0 0.0
      %1823 = vmatpush1.msra.mxu0 0.0
      %1824 = vmatprep.subr.mxu0 0.0
      %1825 = vmatpush1.msra.mxu0 0.0
      %1826 = vmatprep.subr.mxu0 0.0
      %1827 = vmatpush1.msra.mxu0 0.0
      %1828 = vmatprep.subr.mxu0 0.0
      %1829 = vmatpush1.msra.mxu0 0.0
      %1830 = vmatprep.subr.mxu0 0.0
      %1831 = vmatpush1.msra.mxu0 0.0
      %1832 = vmatprep.subr.mxu0 0.0
      %1833 = vmatpush1.msra.mxu0 0.0
      %1834 = vmatprep.subr.mxu0 0.0
      %1835 = vmatpush1.msra.mxu0 0.0
      %1836 = vmatprep.subr.mxu0 0.0
      %1837 = vmatpush1.msra.mxu0 0.0
      %1838 = vmatprep.subr.mxu0 0.0
      %1839 = vmatpush1.msra.mxu0 0.0
      %1840 = vmatprep.subr.mxu0 0.0
      %1841 = vmatpush1.msra.mxu0 0.0
      %1842 = vmatprep.subr.mxu0 0.0
      %1843 = vmatpush1.msra.mxu0 0.0
      %1844 = vmatprep.subr.mxu0 %v1812
      %1845 = vmatpush1.msra.mxu0 %v1809
      %1846 = vmatprep.subr.mxu0 0.0
      %1847 = vmatpush2.msra.mxu0 0.0
      %1848 = vmatprep.subr.mxu0 0.0
      %1849 = vmatpush2.msra.mxu0 0.0
      %1850 = vmatprep.subr.mxu0 0.0
      %1851 = vmatpush2.msra.mxu0 0.0
      %1852 = vmatprep.subr.mxu0 0.0
      %1853 = vmatpush2.msra.mxu0 0.0
      %1854 = vmatprep.subr.mxu0 0.0
      %1855 = vmatpush2.msra.mxu0 0.0
      %1856 = vmatprep.subr.mxu0 0.0
      %1857 = vmatpush2.msra.mxu0 0.0
      %1858 = vmatprep.subr.mxu0 0.0
      %1859 = vmatpush2.msra.mxu0 0.0
      %1860 = vmatprep.subr.mxu0 0.0
      %1861 = vmatpush2.msra.mxu0 0.0
      %1862 = vmatprep.subr.mxu0 0.0
      %1863 = vmatpush2.msra.mxu0 0.0
      %1864 = vmatprep.subr.mxu0 0.0
      %1865 = vmatpush2.msra.mxu0 0.0
      %1866 = vmatprep.subr.mxu0 0.0
      %1867 = vmatpush2.msra.mxu0 0.0
      %1868 = vmatprep.subr.mxu0 0.0
      %1869 = vmatpush2.msra.mxu0 0.0
      %1870 = vmatprep.subr.mxu0 0.0
      %1871 = vmatpush2.msra.mxu0 0.0
      %1872 = vmatprep.subr.mxu0 0.0
      %1873 = vmatpush2.msra.mxu0 0.0
      %1874 = vmatprep.subr.mxu0 0.0
      %1875 = vmatpush2.msra.mxu0 0.0
      %1876 = vmatprep.subr.mxu0 0.0
      %1877 = vmatpush2.msra.mxu0 0.0
      %1878 = vmatprep.mubr.f32.mxu0 0.0
      %1879 = vmatmul.mubr.f32.gmra.mxu0 %v1632
      %v1880 = vpop.f32.mrf.mxu0
      %v1881 = vadd.f32 0.0, %v1880
      %v1882 = vpop.f32.mrf.mxu0
      %v1883 = vadd.f32 0.0, %v1882
      %1884 = vdwg.mxu0
      %v1885 = vadd.f32 %v1531, %v1881
      %v1886 = vadd.f32 %v1533, %v1883
      %1887 = vrot.lane.b32.xlu0 %v1280, 17
      %v1888 = vpop.permute.xlu0 %1887
      %1889 = vrot.lane.b32.xlu0 %v1281, 17
      %v1890 = vpop.permute.xlu0 %1889
      %v1891 = vsel %vm1618, %v1888, %v1890
      %v1892 = vsel %vm1618, %v1890, %v1888
      %v1893 = vmul.f32 %v1892, %v1624
      %v1894 = vmul.f32 %v1891, %v1628
      %v1896 = vsel %vm385, %v1893, 0
      %v1899 = vsel %vm385, %v1894, 0
      %1901 = vmatprep.subr.mxu0 0.0
      %1902 = vmatpush1.msra.mxu0 0.0
      %1903 = vmatprep.subr.mxu0 0.0
      %1904 = vmatpush1.msra.mxu0 0.0
      %1905 = vmatprep.subr.mxu0 0.0
      %1906 = vmatpush1.msra.mxu0 0.0
      %1907 = vmatprep.subr.mxu0 0.0
      %1908 = vmatpush1.msra.mxu0 0.0
      %1909 = vmatprep.subr.mxu0 0.0
      %1910 = vmatpush1.msra.mxu0 0.0
      %1911 = vmatprep.subr.mxu0 0.0
      %1912 = vmatpush1.msra.mxu0 0.0
      %1913 = vmatprep.subr.mxu0 0.0
      %1914 = vmatpush1.msra.mxu0 0.0
      %1915 = vmatprep.subr.mxu0 0.0
      %1916 = vmatpush1.msra.mxu0 0.0
      %1917 = vmatprep.subr.mxu0 0.0
      %1918 = vmatpush1.msra.mxu0 0.0
      %1919 = vmatprep.subr.mxu0 0.0
      %1920 = vmatpush1.msra.mxu0 0.0
      %1921 = vmatprep.subr.mxu0 0.0
      %1922 = vmatpush1.msra.mxu0 0.0
      %1923 = vmatprep.subr.mxu0 0.0
      %1924 = vmatpush1.msra.mxu0 0.0
      %1925 = vmatprep.subr.mxu0 0.0
      %1926 = vmatpush1.msra.mxu0 0.0
      %1927 = vmatprep.subr.mxu0 0.0
      %1928 = vmatpush1.msra.mxu0 0.0
      %1929 = vmatprep.subr.mxu0 0.0
      %1930 = vmatpush1.msra.mxu0 0.0
      %1931 = vmatprep.subr.mxu0 %v1899
      %1932 = vmatpush1.msra.mxu0 %v1896
      %1933 = vmatprep.subr.mxu0 0.0
      %1934 = vmatpush2.msra.mxu0 0.0
      %1935 = vmatprep.subr.mxu0 0.0
      %1936 = vmatpush2.msra.mxu0 0.0
      %1937 = vmatprep.subr.mxu0 0.0
      %1938 = vmatpush2.msra.mxu0 0.0
      %1939 = vmatprep.subr.mxu0 0.0
      %1940 = vmatpush2.msra.mxu0 0.0
      %1941 = vmatprep.subr.mxu0 0.0
      %1942 = vmatpush2.msra.mxu0 0.0
      %1943 = vmatprep.subr.mxu0 0.0
      %1944 = vmatpush2.msra.mxu0 0.0
      %1945 = vmatprep.subr.mxu0 0.0
      %1946 = vmatpush2.msra.mxu0 0.0
      %1947 = vmatprep.subr.mxu0 0.0
      %1948 = vmatpush2.msra.mxu0 0.0
      %1949 = vmatprep.subr.mxu0 0.0
      %1950 = vmatpush2.msra.mxu0 0.0
      %1951 = vmatprep.subr.mxu0 0.0
      %1952 = vmatpush2.msra.mxu0 0.0
      %1953 = vmatprep.subr.mxu0 0.0
      %1954 = vmatpush2.msra.mxu0 0.0
      %1955 = vmatprep.subr.mxu0 0.0
      %1956 = vmatpush2.msra.mxu0 0.0
      %1957 = vmatprep.subr.mxu0 0.0
      %1958 = vmatpush2.msra.mxu0 0.0
      %1959 = vmatprep.subr.mxu0 0.0
      %1960 = vmatpush2.msra.mxu0 0.0
      %1961 = vmatprep.subr.mxu0 0.0
      %1962 = vmatpush2.msra.mxu0 0.0
      %1963 = vmatprep.subr.mxu0 0.0
      %1964 = vmatpush2.msra.mxu0 0.0
      %1965 = vmatprep.mubr.f32.mxu0 0.0
      %1966 = vmatmul.mubr.f32.gmra.mxu0 %v1632
      %v1967 = vpop.f32.mrf.mxu0
      %v1968 = vadd.f32 0.0, %v1967
      %v1969 = vpop.f32.mrf.mxu0
      %v1970 = vadd.f32 0.0, %v1969
      %1971 = vdwg.mxu0
      %v1972 = vadd.f32 %v1608, %v1968
      %v1973 = vadd.f32 %v1610, %v1970
      %1974 = vrot.lane.b32.xlu0 %v1274, 16
      %v1975 = vpop.permute.xlu0 %1974
      %1976 = vrot.lane.b32.xlu0 %v1275, 16
      %v1977 = vpop.permute.xlu0 %1976
      %vm1978 = vcmp.lt.s32.totalorder %v1617, 16
      %v1979 = vsel %vm1978, %v1975, %v1977
      %v1980 = vsel %vm1978, %v1977, %v1975
      %v1981 = vlaneseq
      %v1982 = vshrl.u32 %v1981, 7
      %v1983 = vsub.s32 1, %v1982
      %v1984 = vrot.slane %v1291, %v1983
      %v1985 = vlaneseq
      %v1986 = vshrl.u32 %v1985, 7
      %v1987 = vsub.s32 1, %v1986
      %v1988 = vrot.slane %v1292, %v1987
      %v1989 = vmul.f32 %v1980, %v1984
      %v1990 = vmul.f32 %v1979, %v1988
      %v1992 = vsel %vm381, %v1283, 0
      %v1995 = vsel %vm385, %v1989, 0
      %v1998 = vsel %vm385, %v1990, 0
      %2000 = vmatprep.subr.mxu0 0.0
      %2001 = vmatpush1.msra.mxu0 0.0
      %2002 = vmatprep.subr.mxu0 0.0
      %2003 = vmatpush1.msra.mxu0 0.0
      %2004 = vmatprep.subr.mxu0 0.0
      %2005 = vmatpush1.msra.mxu0 0.0
      %2006 = vmatprep.subr.mxu0 0.0
      %2007 = vmatpush1.msra.mxu0 0.0
      %2008 = vmatprep.subr.mxu0 0.0
      %2009 = vmatpush1.msra.mxu0 0.0
      %2010 = vmatprep.subr.mxu0 0.0
      %2011 = vmatpush1.msra.mxu0 0.0
      %2012 = vmatprep.subr.mxu0 0.0
      %2013 = vmatpush1.msra.mxu0 0.0
      %2014 = vmatprep.subr.mxu0 0.0
      %2015 = vmatpush1.msra.mxu0 0.0
      %2016 = vmatprep.subr.mxu0 0.0
      %2017 = vmatpush1.msra.mxu0 0.0
      %2018 = vmatprep.subr.mxu0 0.0
      %2019 = vmatpush1.msra.mxu0 0.0
      %2020 = vmatprep.subr.mxu0 0.0
      %2021 = vmatpush1.msra.mxu0 0.0
      %2022 = vmatprep.subr.mxu0 0.0
      %2023 = vmatpush1.msra.mxu0 0.0
      %2024 = vmatprep.subr.mxu0 0.0
      %2025 = vmatpush1.msra.mxu0 0.0
      %2026 = vmatprep.subr.mxu0 0.0
      %2027 = vmatpush1.msra.mxu0 0.0
      %2028 = vmatprep.subr.mxu0 0.0
      %2029 = vmatpush1.msra.mxu0 0.0
      %2030 = vmatprep.subr.mxu0 %v1998
      %2031 = vmatpush1.msra.mxu0 %v1995
      %2032 = vmatprep.subr.mxu0 0.0
      %2033 = vmatpush2.msra.mxu0 0.0
      %2034 = vmatprep.subr.mxu0 0.0
      %2035 = vmatpush2.msra.mxu0 0.0
      %2036 = vmatprep.subr.mxu0 0.0
      %2037 = vmatpush2.msra.mxu0 0.0
      %2038 = vmatprep.subr.mxu0 0.0
      %2039 = vmatpush2.msra.mxu0 0.0
      %2040 = vmatprep.subr.mxu0 0.0
      %2041 = vmatpush2.msra.mxu0 0.0
      %2042 = vmatprep.subr.mxu0 0.0
      %2043 = vmatpush2.msra.mxu0 0.0
      %2044 = vmatprep.subr.mxu0 0.0
      %2045 = vmatpush2.msra.mxu0 0.0
      %2046 = vmatprep.subr.mxu0 0.0
      %2047 = vmatpush2.msra.mxu0 0.0
      %2048 = vmatprep.subr.mxu0 0.0
      %2049 = vmatpush2.msra.mxu0 0.0
      %2050 = vmatprep.subr.mxu0 0.0
      %2051 = vmatpush2.msra.mxu0 0.0
      %2052 = vmatprep.subr.mxu0 0.0
      %2053 = vmatpush2.msra.mxu0 0.0
      %2054 = vmatprep.subr.mxu0 0.0
      %2055 = vmatpush2.msra.mxu0 0.0
      %2056 = vmatprep.subr.mxu0 0.0
      %2057 = vmatpush2.msra.mxu0 0.0
      %2058 = vmatprep.subr.mxu0 0.0
      %2059 = vmatpush2.msra.mxu0 0.0
      %2060 = vmatprep.subr.mxu0 0.0
      %2061 = vmatpush2.msra.mxu0 0.0
      %2062 = vmatprep.subr.mxu0 0.0
      %2063 = vmatpush2.msra.mxu0 0.0
      %2064 = vmatprep.mubr.f32.mxu0 0.0
      %2065 = vmatmul.mubr.f32.gmra.mxu0 %v1992
      %v2066 = vpop.f32.mrf.mxu0
      %v2067 = vadd.f32 0.0, %v2066
      %v2068 = vpop.f32.mrf.mxu0
      %v2069 = vadd.f32 0.0, %v2068
      %2070 = vdwg.mxu0
      %v2071 = vadd.f32 %v1711, %v2067
      %v2072 = vadd.f32 %v1712, %v2069
      %2073 = vrot.lane.b32.xlu0 %v1276, 16
      %v2074 = vpop.permute.xlu0 %2073
      %2075 = vrot.lane.b32.xlu0 %v1277, 16
      %v2076 = vpop.permute.xlu0 %2075
      %v2077 = vsel %vm1978, %v2074, %v2076
      %v2078 = vsel %vm1978, %v2076, %v2074
      %v2079 = vmul.f32 %v2078, %v1984
      %v2080 = vmul.f32 %v2077, %v1988
      %v2082 = vsel %vm385, %v2079, 0
      %v2085 = vsel %vm385, %v2080, 0
      %2087 = vmatprep.subr.mxu0 0.0
      %2088 = vmatpush1.msra.mxu0 0.0
      %2089 = vmatprep.subr.mxu0 0.0
      %2090 = vmatpush1.msra.mxu0 0.0
      %2091 = vmatprep.subr.mxu0 0.0
      %2092 = vmatpush1.msra.mxu0 0.0
      %2093 = vmatprep.subr.mxu0 0.0
      %2094 = vmatpush1.msra.mxu0 0.0
      %2095 = vmatprep.subr.mxu0 0.0
      %2096 = vmatpush1.msra.mxu0 0.0
      %2097 = vmatprep.subr.mxu0 0.0
      %2098 = vmatpush1.msra.mxu0 0.0
      %2099 = vmatprep.subr.mxu0 0.0
      %2100 = vmatpush1.msra.mxu0 0.0
      %2101 = vmatprep.subr.mxu0 0.0
      %2102 = vmatpush1.msra.mxu0 0.0
      %2103 = vmatprep.subr.mxu0 0.0
      %2104 = vmatpush1.msra.mxu0 0.0
      %2105 = vmatprep.subr.mxu0 0.0
      %2106 = vmatpush1.msra.mxu0 0.0
      %2107 = vmatprep.subr.mxu0 0.0
      %2108 = vmatpush1.msra.mxu0 0.0
      %2109 = vmatprep.subr.mxu0 0.0
      %2110 = vmatpush1.msra.mxu0 0.0
      %2111 = vmatprep.subr.mxu0 0.0
      %2112 = vmatpush1.msra.mxu0 0.0
      %2113 = vmatprep.subr.mxu0 0.0
      %2114 = vmatpush1.msra.mxu0 0.0
      %2115 = vmatprep.subr.mxu0 0.0
      %2116 = vmatpush1.msra.mxu0 0.0
      %2117 = vmatprep.subr.mxu0 %v2085
      %2118 = vmatpush1.msra.mxu0 %v2082
      %2119 = vmatprep.subr.mxu0 0.0
      %2120 = vmatpush2.msra.mxu0 0.0
      %2121 = vmatprep.subr.mxu0 0.0
      %2122 = vmatpush2.msra.mxu0 0.0
      %2123 = vmatprep.subr.mxu0 0.0
      %2124 = vmatpush2.msra.mxu0 0.0
      %2125 = vmatprep.subr.mxu0 0.0
      %2126 = vmatpush2.msra.mxu0 0.0
      %2127 = vmatprep.subr.mxu0 0.0
      %2128 = vmatpush2.msra.mxu0 0.0
      %2129 = vmatprep.subr.mxu0 0.0
      %2130 = vmatpush2.msra.mxu0 0.0
      %2131 = vmatprep.subr.mxu0 0.0
      %2132 = vmatpush2.msra.mxu0 0.0
      %2133 = vmatprep.subr.mxu0 0.0
      %2134 = vmatpush2.msra.mxu0 0.0
      %2135 = vmatprep.subr.mxu0 0.0
      %2136 = vmatpush2.msra.mxu0 0.0
      %2137 = vmatprep.subr.mxu0 0.0
      %2138 = vmatpush2.msra.mxu0 0.0
      %2139 = vmatprep.subr.mxu0 0.0
      %2140 = vmatpush2.msra.mxu0 0.0
      %2141 = vmatprep.subr.mxu0 0.0
      %2142 = vmatpush2.msra.mxu0 0.0
      %2143 = vmatprep.subr.mxu0 0.0
      %2144 = vmatpush2.msra.mxu0 0.0
      %2145 = vmatprep.subr.mxu0 0.0
      %2146 = vmatpush2.msra.mxu0 0.0
      %2147 = vmatprep.subr.mxu0 0.0
      %2148 = vmatpush2.msra.mxu0 0.0
      %2149 = vmatprep.subr.mxu0 0.0
      %2150 = vmatpush2.msra.mxu0 0.0
      %2151 = vmatprep.mubr.f32.mxu0 0.0
      %2152 = vmatmul.mubr.f32.gmra.mxu0 %v1992
      %v2153 = vpop.f32.mrf.mxu0
      %v2154 = vadd.f32 0.0, %v2153
      %v2155 = vpop.f32.mrf.mxu0
      %v2156 = vadd.f32 0.0, %v2155
      %2157 = vdwg.mxu0
      %v2158 = vadd.f32 %v1798, %v2154
      %v2159 = vadd.f32 %v1799, %v2156
      %2160 = vrot.lane.b32.xlu0 %v1278, 16
      %v2161 = vpop.permute.xlu0 %2160
      %2162 = vrot.lane.b32.xlu0 %v1279, 16
      %v2163 = vpop.permute.xlu0 %2162
      %v2164 = vsel %vm1978, %v2161, %v2163
      %v2165 = vsel %vm1978, %v2163, %v2161
      %v2166 = vmul.f32 %v2165, %v1984
      %v2167 = vmul.f32 %v2164, %v1988
      %v2169 = vsel %vm385, %v2166, 0
      %v2172 = vsel %vm385, %v2167, 0
      %2174 = vmatprep.subr.mxu0 0.0
      %2175 = vmatpush1.msra.mxu0 0.0
      %2176 = vmatprep.subr.mxu0 0.0
      %2177 = vmatpush1.msra.mxu0 0.0
      %2178 = vmatprep.subr.mxu0 0.0
      %2179 = vmatpush1.msra.mxu0 0.0
      %2180 = vmatprep.subr.mxu0 0.0
      %2181 = vmatpush1.msra.mxu0 0.0
      %2182 = vmatprep.subr.mxu0 0.0
      %2183 = vmatpush1.msra.mxu0 0.0
      %2184 = vmatprep.subr.mxu0 0.0
      %2185 = vmatpush1.msra.mxu0 0.0
      %2186 = vmatprep.subr.mxu0 0.0
      %2187 = vmatpush1.msra.mxu0 0.0
      %2188 = vmatprep.subr.mxu0 0.0
      %2189 = vmatpush1.msra.mxu0 0.0
      %2190 = vmatprep.subr.mxu0 0.0
      %2191 = vmatpush1.msra.mxu0 0.0
      %2192 = vmatprep.subr.mxu0 0.0
      %2193 = vmatpush1.msra.mxu0 0.0
      %2194 = vmatprep.subr.mxu0 0.0
      %2195 = vmatpush1.msra.mxu0 0.0
      %2196 = vmatprep.subr.mxu0 0.0
      %2197 = vmatpush1.msra.mxu0 0.0
      %2198 = vmatprep.subr.mxu0 0.0
      %2199 = vmatpush1.msra.mxu0 0.0
      %2200 = vmatprep.subr.mxu0 0.0
      %2201 = vmatpush1.msra.mxu0 0.0
      %2202 = vmatprep.subr.mxu0 0.0
      %2203 = vmatpush1.msra.mxu0 0.0
      %2204 = vmatprep.subr.mxu0 %v2172
      %2205 = vmatpush1.msra.mxu0 %v2169
      %2206 = vmatprep.subr.mxu0 0.0
      %2207 = vmatpush2.msra.mxu0 0.0
      %2208 = vmatprep.subr.mxu0 0.0
      %2209 = vmatpush2.msra.mxu0 0.0
      %2210 = vmatprep.subr.mxu0 0.0
      %2211 = vmatpush2.msra.mxu0 0.0
      %2212 = vmatprep.subr.mxu0 0.0
      %2213 = vmatpush2.msra.mxu0 0.0
      %2214 = vmatprep.subr.mxu0 0.0
      %2215 = vmatpush2.msra.mxu0 0.0
      %2216 = vmatprep.subr.mxu0 0.0
      %2217 = vmatpush2.msra.mxu0 0.0
      %2218 = vmatprep.subr.mxu0 0.0
      %2219 = vmatpush2.msra.mxu0 0.0
      %2220 = vmatprep.subr.mxu0 0.0
      %2221 = vmatpush2.msra.mxu0 0.0
      %2222 = vmatprep.subr.mxu0 0.0
      %2223 = vmatpush2.msra.mxu0 0.0
      %2224 = vmatprep.subr.mxu0 0.0
      %2225 = vmatpush2.msra.mxu0 0.0
      %2226 = vmatprep.subr.mxu0 0.0
      %2227 = vmatpush2.msra.mxu0 0.0
      %2228 = vmatprep.subr.mxu0 0.0
      %2229 = vmatpush2.msra.mxu0 0.0
      %2230 = vmatprep.subr.mxu0 0.0
      %2231 = vmatpush2.msra.mxu0 0.0
      %2232 = vmatprep.subr.mxu0 0.0
      %2233 = vmatpush2.msra.mxu0 0.0
      %2234 = vmatprep.subr.mxu0 0.0
      %2235 = vmatpush2.msra.mxu0 0.0
      %2236 = vmatprep.subr.mxu0 0.0
      %2237 = vmatpush2.msra.mxu0 0.0
      %2238 = vmatprep.mubr.f32.mxu0 0.0
      %2239 = vmatmul.mubr.f32.gmra.mxu0 %v1992
      %v2240 = vpop.f32.mrf.mxu0
      %v2241 = vadd.f32 0.0, %v2240
      %v2242 = vpop.f32.mrf.mxu0
      %v2243 = vadd.f32 0.0, %v2242
      %2244 = vdwg.mxu0
      %v2245 = vadd.f32 %v1885, %v2241
      %v2246 = vadd.f32 %v1886, %v2243
      %2247 = vrot.lane.b32.xlu0 %v1280, 16
      %v2248 = vpop.permute.xlu0 %2247
      %2249 = vrot.lane.b32.xlu0 %v1281, 16
      %v2250 = vpop.permute.xlu0 %2249
      %v2251 = vsel %vm1978, %v2248, %v2250
      %v2252 = vsel %vm1978, %v2250, %v2248
      %v2253 = vmul.f32 %v2252, %v1984
      %v2254 = vmul.f32 %v2251, %v1988
      %v2256 = vsel %vm385, %v2253, 0
      %v2259 = vsel %vm385, %v2254, 0
      %2261 = vmatprep.subr.mxu0 0.0
      %2262 = vmatpush1.msra.mxu0 0.0
      %2263 = vmatprep.subr.mxu0 0.0
      %2264 = vmatpush1.msra.mxu0 0.0
      %2265 = vmatprep.subr.mxu0 0.0
      %2266 = vmatpush1.msra.mxu0 0.0
      %2267 = vmatprep.subr.mxu0 0.0
      %2268 = vmatpush1.msra.mxu0 0.0
      %2269 = vmatprep.subr.mxu0 0.0
      %2270 = vmatpush1.msra.mxu0 0.0
      %2271 = vmatprep.subr.mxu0 0.0
      %2272 = vmatpush1.msra.mxu0 0.0
      %2273 = vmatprep.subr.mxu0 0.0
      %2274 = vmatpush1.msra.mxu0 0.0
      %2275 = vmatprep.subr.mxu0 0.0
      %2276 = vmatpush1.msra.mxu0 0.0
      %2277 = vmatprep.subr.mxu0 0.0
      %2278 = vmatpush1.msra.mxu0 0.0
      %2279 = vmatprep.subr.mxu0 0.0
      %2280 = vmatpush1.msra.mxu0 0.0
      %2281 = vmatprep.subr.mxu0 0.0
      %2282 = vmatpush1.msra.mxu0 0.0
      %2283 = vmatprep.subr.mxu0 0.0
      %2284 = vmatpush1.msra.mxu0 0.0
      %2285 = vmatprep.subr.mxu0 0.0
      %2286 = vmatpush1.msra.mxu0 0.0
      %2287 = vmatprep.subr.mxu0 0.0
      %2288 = vmatpush1.msra.mxu0 0.0
      %2289 = vmatprep.subr.mxu0 0.0
      %2290 = vmatpush1.msra.mxu0 0.0
      %2291 = vmatprep.subr.mxu0 %v2259
      %2292 = vmatpush1.msra.mxu0 %v2256
      %2293 = vmatprep.subr.mxu0 0.0
      %2294 = vmatpush2.msra.mxu0 0.0
      %2295 = vmatprep.subr.mxu0 0.0
      %2296 = vmatpush2.msra.mxu0 0.0
      %2297 = vmatprep.subr.mxu0 0.0
      %2298 = vmatpush2.msra.mxu0 0.0
      %2299 = vmatprep.subr.mxu0 0.0
      %2300 = vmatpush2.msra.mxu0 0.0
      %2301 = vmatprep.subr.mxu0 0.0
      %2302 = vmatpush2.msra.mxu0 0.0
      %2303 = vmatprep.subr.mxu0 0.0
      %2304 = vmatpush2.msra.mxu0 0.0
      %2305 = vmatprep.subr.mxu0 0.0
      %2306 = vmatpush2.msra.mxu0 0.0
      %2307 = vmatprep.subr.mxu0 0.0
      %2308 = vmatpush2.msra.mxu0 0.0
      %2309 = vmatprep.subr.mxu0 0.0
      %2310 = vmatpush2.msra.mxu0 0.0
      %2311 = vmatprep.subr.mxu0 0.0
      %2312 = vmatpush2.msra.mxu0 0.0
      %2313 = vmatprep.subr.mxu0 0.0
      %2314 = vmatpush2.msra.mxu0 0.0
      %2315 = vmatprep.subr.mxu0 0.0
      %2316 = vmatpush2.msra.mxu0 0.0
      %2317 = vmatprep.subr.mxu0 0.0
      %2318 = vmatpush2.msra.mxu0 0.0
      %2319 = vmatprep.subr.mxu0 0.0
      %2320 = vmatpush2.msra.mxu0 0.0
      %2321 = vmatprep.subr.mxu0 0.0
      %2322 = vmatpush2.msra.mxu0 0.0
      %2323 = vmatprep.subr.mxu0 0.0
      %2324 = vmatpush2.msra.mxu0 0.0
      %2325 = vmatprep.mubr.f32.mxu0 0.0
      %2326 = vmatmul.mubr.f32.gmra.mxu0 %v1992
      %v2327 = vpop.f32.mrf.mxu0
      %v2328 = vadd.f32 0.0, %v2327
      %v2329 = vpop.f32.mrf.mxu0
      %v2330 = vadd.f32 0.0, %v2329
      %2331 = vdwg.mxu0
      %v2332 = vadd.f32 %v1972, %v2328
      %v2333 = vadd.f32 %v1973, %v2330
      %2334 = vrot.lane.b32.xlu0 %v1274, 15
      %v2335 = vpop.permute.xlu0 %2334
      %2336 = vrot.lane.b32.xlu0 %v1275, 15
      %v2337 = vpop.permute.xlu0 %2336
      %vm2338 = vcmp.lt.s32.totalorder %v1617, 15
      %v2339 = vsel %vm2338, %v2335, %v2337
      %v2340 = vsel %vm2338, %v2337, %v2335
      %v2341 = vlaneseq
      %v2342 = vshrl.u32 %v2341, 7
      %v2343 = vsub.s32 2, %v2342
      %v2344 = vrot.slane %v1291, %v2343
      %v2345 = vlaneseq
      %v2346 = vshrl.u32 %v2345, 7
      %v2347 = vsub.s32 2, %v2346
      %v2348 = vrot.slane %v1292, %v2347
      %v2349 = vmul.f32 %v2340, %v2344
      %v2350 = vmul.f32 %v2339, %v2348
      %v2352 = vsel %vm381, %v1284, 0
      %v2355 = vsel %vm385, %v2349, 0
      %v2358 = vsel %vm385, %v2350, 0
      %2360 = vmatprep.subr.mxu0 0.0
      %2361 = vmatpush1.msra.mxu0 0.0
      %2362 = vmatprep.subr.mxu0 0.0
      %2363 = vmatpush1.msra.mxu0 0.0
      %2364 = vmatprep.subr.mxu0 0.0
      %2365 = vmatpush1.msra.mxu0 0.0
      %2366 = vmatprep.subr.mxu0 0.0
      %2367 = vmatpush1.msra.mxu0 0.0
      %2368 = vmatprep.subr.mxu0 0.0
      %2369 = vmatpush1.msra.mxu0 0.0
      %2370 = vmatprep.subr.mxu0 0.0
      %2371 = vmatpush1.msra.mxu0 0.0
      %2372 = vmatprep.subr.mxu0 0.0
      %2373 = vmatpush1.msra.mxu0 0.0
      %2374 = vmatprep.subr.mxu0 0.0
      %2375 = vmatpush1.msra.mxu0 0.0
      %2376 = vmatprep.subr.mxu0 0.0
      %2377 = vmatpush1.msra.mxu0 0.0
      %2378 = vmatprep.subr.mxu0 0.0
      %2379 = vmatpush1.msra.mxu0 0.0
      %2380 = vmatprep.subr.mxu0 0.0
      %2381 = vmatpush1.msra.mxu0 0.0
      %2382 = vmatprep.subr.mxu0 0.0
      %2383 = vmatpush1.msra.mxu0 0.0
      %2384 = vmatprep.subr.mxu0 0.0
      %2385 = vmatpush1.msra.mxu0 0.0
      %2386 = vmatprep.subr.mxu0 0.0
      %2387 = vmatpush1.msra.mxu0 0.0
      %2388 = vmatprep.subr.mxu0 0.0
      %2389 = vmatpush1.msra.mxu0 0.0
      %2390 = vmatprep.subr.mxu0 %v2358
      %2391 = vmatpush1.msra.mxu0 %v2355
      %2392 = vmatprep.subr.mxu0 0.0
      %2393 = vmatpush2.msra.mxu0 0.0
      %2394 = vmatprep.subr.mxu0 0.0
      %2395 = vmatpush2.msra.mxu0 0.0
      %2396 = vmatprep.subr.mxu0 0.0
      %2397 = vmatpush2.msra.mxu0 0.0
      %2398 = vmatprep.subr.mxu0 0.0
      %2399 = vmatpush2.msra.mxu0 0.0
      %2400 = vmatprep.subr.mxu0 0.0
      %2401 = vmatpush2.msra.mxu0 0.0
      %2402 = vmatprep.subr.mxu0 0.0
      %2403 = vmatpush2.msra.mxu0 0.0
      %2404 = vmatprep.subr.mxu0 0.0
      %2405 = vmatpush2.msra.mxu0 0.0
      %2406 = vmatprep.subr.mxu0 0.0
      %2407 = vmatpush2.msra.mxu0 0.0
      %2408 = vmatprep.subr.mxu0 0.0
      %2409 = vmatpush2.msra.mxu0 0.0
      %2410 = vmatprep.subr.mxu0 0.0
      %2411 = vmatpush2.msra.mxu0 0.0
      %2412 = vmatprep.subr.mxu0 0.0
      %2413 = vmatpush2.msra.mxu0 0.0
      %2414 = vmatprep.subr.mxu0 0.0
      %2415 = vmatpush2.msra.mxu0 0.0
      %2416 = vmatprep.subr.mxu0 0.0
      %2417 = vmatpush2.msra.mxu0 0.0
      %2418 = vmatprep.subr.mxu0 0.0
      %2419 = vmatpush2.msra.mxu0 0.0
      %2420 = vmatprep.subr.mxu0 0.0
      %2421 = vmatpush2.msra.mxu0 0.0
      %2422 = vmatprep.subr.mxu0 0.0
      %2423 = vmatpush2.msra.mxu0 0.0
      %2424 = vmatprep.mubr.f32.mxu0 0.0
      %2425 = vmatmul.mubr.f32.gmra.mxu0 %v2352
      %v2426 = vpop.f32.mrf.mxu0
      %v2427 = vadd.f32 0.0, %v2426
      %v2428 = vpop.f32.mrf.mxu0
      %v2429 = vadd.f32 0.0, %v2428
      %2430 = vdwg.mxu0
      %v2431 = vadd.f32 %v2071, %v2427
      %v2432 = vadd.f32 %v2072, %v2429
      %2433 = vrot.lane.b32.xlu0 %v1276, 15
      %v2434 = vpop.permute.xlu0 %2433
      %2435 = vrot.lane.b32.xlu0 %v1277, 15
      %v2436 = vpop.permute.xlu0 %2435
      %v2437 = vsel %vm2338, %v2434, %v2436
      %v2438 = vsel %vm2338, %v2436, %v2434
      %v2439 = vmul.f32 %v2438, %v2344
      %v2440 = vmul.f32 %v2437, %v2348
      %v2442 = vsel %vm385, %v2439, 0
      %v2445 = vsel %vm385, %v2440, 0
      %2447 = vmatprep.subr.mxu0 0.0
      %2448 = vmatpush1.msra.mxu0 0.0
      %2449 = vmatprep.subr.mxu0 0.0
      %2450 = vmatpush1.msra.mxu0 0.0
      %2451 = vmatprep.subr.mxu0 0.0
      %2452 = vmatpush1.msra.mxu0 0.0
      %2453 = vmatprep.subr.mxu0 0.0
      %2454 = vmatpush1.msra.mxu0 0.0
      %2455 = vmatprep.subr.mxu0 0.0
      %2456 = vmatpush1.msra.mxu0 0.0
      %2457 = vmatprep.subr.mxu0 0.0
      %2458 = vmatpush1.msra.mxu0 0.0
      %2459 = vmatprep.subr.mxu0 0.0
      %2460 = vmatpush1.msra.mxu0 0.0
      %2461 = vmatprep.subr.mxu0 0.0
      %2462 = vmatpush1.msra.mxu0 0.0
      %2463 = vmatprep.subr.mxu0 0.0
      %2464 = vmatpush1.msra.mxu0 0.0
      %2465 = vmatprep.subr.mxu0 0.0
      %2466 = vmatpush1.msra.mxu0 0.0
      %2467 = vmatprep.subr.mxu0 0.0
      %2468 = vmatpush1.msra.mxu0 0.0
      %2469 = vmatprep.subr.mxu0 0.0
      %2470 = vmatpush1.msra.mxu0 0.0
      %2471 = vmatprep.subr.mxu0 0.0
      %2472 = vmatpush1.msra.mxu0 0.0
      %2473 = vmatprep.subr.mxu0 0.0
      %2474 = vmatpush1.msra.mxu0 0.0
      %2475 = vmatprep.subr.mxu0 0.0
      %2476 = vmatpush1.msra.mxu0 0.0
      %2477 = vmatprep.subr.mxu0 %v2445
      %2478 = vmatpush1.msra.mxu0 %v2442
      %2479 = vmatprep.subr.mxu0 0.0
      %2480 = vmatpush2.msra.mxu0 0.0
      %2481 = vmatprep.subr.mxu0 0.0
      %2482 = vmatpush2.msra.mxu0 0.0
      %2483 = vmatprep.subr.mxu0 0.0
      %2484 = vmatpush2.msra.mxu0 0.0
      %2485 = vmatprep.subr.mxu0 0.0
      %2486 = vmatpush2.msra.mxu0 0.0
      %2487 = vmatprep.subr.mxu0 0.0
      %2488 = vmatpush2.msra.mxu0 0.0
      %2489 = vmatprep.subr.mxu0 0.0
      %2490 = vmatpush2.msra.mxu0 0.0
      %2491 = vmatprep.subr.mxu0 0.0
      %2492 = vmatpush2.msra.mxu0 0.0
      %2493 = vmatprep.subr.mxu0 0.0
      %2494 = vmatpush2.msra.mxu0 0.0
      %2495 = vmatprep.subr.mxu0 0.0
      %2496 = vmatpush2.msra.mxu0 0.0
      %2497 = vmatprep.subr.mxu0 0.0
      %2498 = vmatpush2.msra.mxu0 0.0
      %2499 = vmatprep.subr.mxu0 0.0
      %2500 = vmatpush2.msra.mxu0 0.0
      %2501 = vmatprep.subr.mxu0 0.0
      %2502 = vmatpush2.msra.mxu0 0.0
      %2503 = vmatprep.subr.mxu0 0.0
      %2504 = vmatpush2.msra.mxu0 0.0
      %2505 = vmatprep.subr.mxu0 0.0
      %2506 = vmatpush2.msra.mxu0 0.0
      %2507 = vmatprep.subr.mxu0 0.0
      %2508 = vmatpush2.msra.mxu0 0.0
      %2509 = vmatprep.subr.mxu0 0.0
      %2510 = vmatpush2.msra.mxu0 0.0
      %2511 = vmatprep.mubr.f32.mxu0 0.0
      %2512 = vmatmul.mubr.f32.gmra.mxu0 %v2352
      %v2513 = vpop.f32.mrf.mxu0
      %v2514 = vadd.f32 0.0, %v2513
      %v2515 = vpop.f32.mrf.mxu0
      %v2516 = vadd.f32 0.0, %v2515
      %2517 = vdwg.mxu0
      %v2518 = vadd.f32 %v2158, %v2514
      %v2519 = vadd.f32 %v2159, %v2516
      %2520 = vrot.lane.b32.xlu0 %v1278, 15
      %v2521 = vpop.permute.xlu0 %2520
      %2522 = vrot.lane.b32.xlu0 %v1279, 15
      %v2523 = vpop.permute.xlu0 %2522
      %v2524 = vsel %vm2338, %v2521, %v2523
      %v2525 = vsel %vm2338, %v2523, %v2521
      %v2526 = vmul.f32 %v2525, %v2344
      %v2527 = vmul.f32 %v2524, %v2348
      %v2529 = vsel %vm385, %v2526, 0
      %v2532 = vsel %vm385, %v2527, 0
      %2534 = vmatprep.subr.mxu0 0.0
      %2535 = vmatpush1.msra.mxu0 0.0
      %2536 = vmatprep.subr.mxu0 0.0
      %2537 = vmatpush1.msra.mxu0 0.0
      %2538 = vmatprep.subr.mxu0 0.0
      %2539 = vmatpush1.msra.mxu0 0.0
      %2540 = vmatprep.subr.mxu0 0.0
      %2541 = vmatpush1.msra.mxu0 0.0
      %2542 = vmatprep.subr.mxu0 0.0
      %2543 = vmatpush1.msra.mxu0 0.0
      %2544 = vmatprep.subr.mxu0 0.0
      %2545 = vmatpush1.msra.mxu0 0.0
      %2546 = vmatprep.subr.mxu0 0.0
      %2547 = vmatpush1.msra.mxu0 0.0
      %2548 = vmatprep.subr.mxu0 0.0
      %2549 = vmatpush1.msra.mxu0 0.0
      %2550 = vmatprep.subr.mxu0 0.0
      %2551 = vmatpush1.msra.mxu0 0.0
      %2552 = vmatprep.subr.mxu0 0.0
      %2553 = vmatpush1.msra.mxu0 0.0
      %2554 = vmatprep.subr.mxu0 0.0
      %2555 = vmatpush1.msra.mxu0 0.0
      %2556 = vmatprep.subr.mxu0 0.0
      %2557 = vmatpush1.msra.mxu0 0.0
      %2558 = vmatprep.subr.mxu0 0.0
      %2559 = vmatpush1.msra.mxu0 0.0
      %2560 = vmatprep.subr.mxu0 0.0
      %2561 = vmatpush1.msra.mxu0 0.0
      %2562 = vmatprep.subr.mxu0 0.0
      %2563 = vmatpush1.msra.mxu0 0.0
      %2564 = vmatprep.subr.mxu0 %v2532
      %2565 = vmatpush1.msra.mxu0 %v2529
      %2566 = vmatprep.subr.mxu0 0.0
      %2567 = vmatpush2.msra.mxu0 0.0
      %2568 = vmatprep.subr.mxu0 0.0
      %2569 = vmatpush2.msra.mxu0 0.0
      %2570 = vmatprep.subr.mxu0 0.0
      %2571 = vmatpush2.msra.mxu0 0.0
      %2572 = vmatprep.subr.mxu0 0.0
      %2573 = vmatpush2.msra.mxu0 0.0
      %2574 = vmatprep.subr.mxu0 0.0
      %2575 = vmatpush2.msra.mxu0 0.0
      %2576 = vmatprep.subr.mxu0 0.0
      %2577 = vmatpush2.msra.mxu0 0.0
      %2578 = vmatprep.subr.mxu0 0.0
      %2579 = vmatpush2.msra.mxu0 0.0
      %2580 = vmatprep.subr.mxu0 0.0
      %2581 = vmatpush2.msra.mxu0 0.0
      %2582 = vmatprep.subr.mxu0 0.0
      %2583 = vmatpush2.msra.mxu0 0.0
      %2584 = vmatprep.subr.mxu0 0.0
      %2585 = vmatpush2.msra.mxu0 0.0
      %2586 = vmatprep.subr.mxu0 0.0
      %2587 = vmatpush2.msra.mxu0 0.0
      %2588 = vmatprep.subr.mxu0 0.0
      %2589 = vmatpush2.msra.mxu0 0.0
      %2590 = vmatprep.subr.mxu0 0.0
      %2591 = vmatpush2.msra.mxu0 0.0
      %2592 = vmatprep.subr.mxu0 0.0
      %2593 = vmatpush2.msra.mxu0 0.0
      %2594 = vmatprep.subr.mxu0 0.0
      %2595 = vmatpush2.msra.mxu0 0.0
      %2596 = vmatprep.subr.mxu0 0.0
      %2597 = vmatpush2.msra.mxu0 0.0
      %2598 = vmatprep.mubr.f32.mxu0 0.0
      %2599 = vmatmul.mubr.f32.gmra.mxu0 %v2352
      %v2600 = vpop.f32.mrf.mxu0
      %v2601 = vadd.f32 0.0, %v2600
      %v2602 = vpop.f32.mrf.mxu0
      %v2603 = vadd.f32 0.0, %v2602
      %2604 = vdwg.mxu0
      %v2605 = vadd.f32 %v2245, %v2601
      %v2606 = vadd.f32 %v2246, %v2603
      %2607 = vrot.lane.b32.xlu0 %v1280, 15
      %v2608 = vpop.permute.xlu0 %2607
      %2609 = vrot.lane.b32.xlu0 %v1281, 15
      %v2610 = vpop.permute.xlu0 %2609
      %v2611 = vsel %vm2338, %v2608, %v2610
      %v2612 = vsel %vm2338, %v2610, %v2608
      %v2613 = vmul.f32 %v2612, %v2344
      %v2614 = vmul.f32 %v2611, %v2348
      %v2616 = vsel %vm385, %v2613, 0
      %v2619 = vsel %vm385, %v2614, 0
      %2621 = vmatprep.subr.mxu0 0.0
      %2622 = vmatpush1.msra.mxu0 0.0
      %2623 = vmatprep.subr.mxu0 0.0
      %2624 = vmatpush1.msra.mxu0 0.0
      %2625 = vmatprep.subr.mxu0 0.0
      %2626 = vmatpush1.msra.mxu0 0.0
      %2627 = vmatprep.subr.mxu0 0.0
      %2628 = vmatpush1.msra.mxu0 0.0
      %2629 = vmatprep.subr.mxu0 0.0
      %2630 = vmatpush1.msra.mxu0 0.0
      %2631 = vmatprep.subr.mxu0 0.0
      %2632 = vmatpush1.msra.mxu0 0.0
      %2633 = vmatprep.subr.mxu0 0.0
      %2634 = vmatpush1.msra.mxu0 0.0
      %2635 = vmatprep.subr.mxu0 0.0
      %2636 = vmatpush1.msra.mxu0 0.0
      %2637 = vmatprep.subr.mxu0 0.0
      %2638 = vmatpush1.msra.mxu0 0.0
      %2639 = vmatprep.subr.mxu0 0.0
      %2640 = vmatpush1.msra.mxu0 0.0
      %2641 = vmatprep.subr.mxu0 0.0
      %2642 = vmatpush1.msra.mxu0 0.0
      %2643 = vmatprep.subr.mxu0 0.0
      %2644 = vmatpush1.msra.mxu0 0.0
      %2645 = vmatprep.subr.mxu0 0.0
      %2646 = vmatpush1.msra.mxu0 0.0
      %2647 = vmatprep.subr.mxu0 0.0
      %2648 = vmatpush1.msra.mxu0 0.0
      %2649 = vmatprep.subr.mxu0 0.0
      %2650 = vmatpush1.msra.mxu0 0.0
      %2651 = vmatprep.subr.mxu0 %v2619
      %2652 = vmatpush1.msra.mxu0 %v2616
      %2653 = vmatprep.subr.mxu0 0.0
      %2654 = vmatpush2.msra.mxu0 0.0
      %2655 = vmatprep.subr.mxu0 0.0
      %2656 = vmatpush2.msra.mxu0 0.0
      %2657 = vmatprep.subr.mxu0 0.0
      %2658 = vmatpush2.msra.mxu0 0.0
      %2659 = vmatprep.subr.mxu0 0.0
      %2660 = vmatpush2.msra.mxu0 0.0
      %2661 = vmatprep.subr.mxu0 0.0
      %2662 = vmatpush2.msra.mxu0 0.0
      %2663 = vmatprep.subr.mxu0 0.0
      %2664 = vmatpush2.msra.mxu0 0.0
      %2665 = vmatprep.subr.mxu0 0.0
      %2666 = vmatpush2.msra.mxu0 0.0
      %2667 = vmatprep.subr.mxu0 0.0
      %2668 = vmatpush2.msra.mxu0 0.0
      %2669 = vmatprep.subr.mxu0 0.0
      %2670 = vmatpush2.msra.mxu0 0.0
      %2671 = vmatprep.subr.mxu0 0.0
      %2672 = vmatpush2.msra.mxu0 0.0
      %2673 = vmatprep.subr.mxu0 0.0
      %2674 = vmatpush2.msra.mxu0 0.0
      %2675 = vmatprep.subr.mxu0 0.0
      %2676 = vmatpush2.msra.mxu0 0.0
      %2677 = vmatprep.subr.mxu0 0.0
      %2678 = vmatpush2.msra.mxu0 0.0
      %2679 = vmatprep.subr.mxu0 0.0
      %2680 = vmatpush2.msra.mxu0 0.0
      %2681 = vmatprep.subr.mxu0 0.0
      %2682 = vmatpush2.msra.mxu0 0.0
      %2683 = vmatprep.subr.mxu0 0.0
      %2684 = vmatpush2.msra.mxu0 0.0
      %2685 = vmatprep.mubr.f32.mxu0 0.0
      %2686 = vmatmul.mubr.f32.gmra.mxu0 %v2352
      %v2687 = vpop.f32.mrf.mxu0
      %v2688 = vadd.f32 0.0, %v2687
      %v2689 = vpop.f32.mrf.mxu0
      %v2690 = vadd.f32 0.0, %v2689
      %2691 = vdwg.mxu0
      %v2692 = vadd.f32 %v2332, %v2688
      %v2693 = vadd.f32 %v2333, %v2690
      %2694 = vrot.lane.b32.xlu0 %v1274, 1
      %v2695 = vpop.permute.xlu0 %2694
      %2696 = vrot.lane.b32.xlu0 %v1275, 1
      %v2697 = vpop.permute.xlu0 %2696
      %vm2698 = vcmp.lt.s32.totalorder %v1617, 1
      %v2699 = vsel %vm2698, %v2695, %v2697
      %v2700 = vsel %vm2698, %v2697, %v2695
      %v2701 = vlaneseq
      %v2702 = vshrl.u32 %v2701, 7
      %v2703 = vsub.s32 3, %v2702
      %v2704 = vrot.slane %v1291, %v2703
      %v2705 = vlaneseq
      %v2706 = vshrl.u32 %v2705, 7
      %v2707 = vsub.s32 3, %v2706
      %v2708 = vrot.slane %v1292, %v2707
      %v2709 = vmul.f32 %v2700, %v2704
      %v2710 = vmul.f32 %v2699, %v2708
      %v2712 = vsel %vm381, %v1285, 0
      %v2715 = vsel %vm385, %v2709, 0
      %v2718 = vsel %vm385, %v2710, 0
      %2720 = vmatprep.subr.mxu0 0.0
      %2721 = vmatpush1.msra.mxu0 0.0
      %2722 = vmatprep.subr.mxu0 0.0
      %2723 = vmatpush1.msra.mxu0 0.0
      %2724 = vmatprep.subr.mxu0 0.0
      %2725 = vmatpush1.msra.mxu0 0.0
      %2726 = vmatprep.subr.mxu0 0.0
      %2727 = vmatpush1.msra.mxu0 0.0
      %2728 = vmatprep.subr.mxu0 0.0
      %2729 = vmatpush1.msra.mxu0 0.0
      %2730 = vmatprep.subr.mxu0 0.0
      %2731 = vmatpush1.msra.mxu0 0.0
      %2732 = vmatprep.subr.mxu0 0.0
      %2733 = vmatpush1.msra.mxu0 0.0
      %2734 = vmatprep.subr.mxu0 0.0
      %2735 = vmatpush1.msra.mxu0 0.0
      %2736 = vmatprep.subr.mxu0 0.0
      %2737 = vmatpush1.msra.mxu0 0.0
      %2738 = vmatprep.subr.mxu0 0.0
      %2739 = vmatpush1.msra.mxu0 0.0
      %2740 = vmatprep.subr.mxu0 0.0
      %2741 = vmatpush1.msra.mxu0 0.0
      %2742 = vmatprep.subr.mxu0 0.0
      %2743 = vmatpush1.msra.mxu0 0.0
      %2744 = vmatprep.subr.mxu0 0.0
      %2745 = vmatpush1.msra.mxu0 0.0
      %2746 = vmatprep.subr.mxu0 0.0
      %2747 = vmatpush1.msra.mxu0 0.0
      %2748 = vmatprep.subr.mxu0 0.0
      %2749 = vmatpush1.msra.mxu0 0.0
      %2750 = vmatprep.subr.mxu0 %v2718
      %2751 = vmatpush1.msra.mxu0 %v2715
      %2752 = vmatprep.subr.mxu0 0.0
      %2753 = vmatpush2.msra.mxu0 0.0
      %2754 = vmatprep.subr.mxu0 0.0
      %2755 = vmatpush2.msra.mxu0 0.0
      %2756 = vmatprep.subr.mxu0 0.0
      %2757 = vmatpush2.msra.mxu0 0.0
      %2758 = vmatprep.subr.mxu0 0.0
      %2759 = vmatpush2.msra.mxu0 0.0
      %2760 = vmatprep.subr.mxu0 0.0
      %2761 = vmatpush2.msra.mxu0 0.0
      %2762 = vmatprep.subr.mxu0 0.0
      %2763 = vmatpush2.msra.mxu0 0.0
      %2764 = vmatprep.subr.mxu0 0.0
      %2765 = vmatpush2.msra.mxu0 0.0
      %2766 = vmatprep.subr.mxu0 0.0
      %2767 = vmatpush2.msra.mxu0 0.0
      %2768 = vmatprep.subr.mxu0 0.0
      %2769 = vmatpush2.msra.mxu0 0.0
      %2770 = vmatprep.subr.mxu0 0.0
      %2771 = vmatpush2.msra.mxu0 0.0
      %2772 = vmatprep.subr.mxu0 0.0
      %2773 = vmatpush2.msra.mxu0 0.0
      %2774 = vmatprep.subr.mxu0 0.0
      %2775 = vmatpush2.msra.mxu0 0.0
      %2776 = vmatprep.subr.mxu0 0.0
      %2777 = vmatpush2.msra.mxu0 0.0
      %2778 = vmatprep.subr.mxu0 0.0
      %2779 = vmatpush2.msra.mxu0 0.0
      %2780 = vmatprep.subr.mxu0 0.0
      %2781 = vmatpush2.msra.mxu0 0.0
      %2782 = vmatprep.subr.mxu0 0.0
      %2783 = vmatpush2.msra.mxu0 0.0
      %2784 = vmatprep.mubr.f32.mxu0 0.0
      %2785 = vmatmul.mubr.f32.gmra.mxu0 %v2712
      %v2786 = vpop.f32.mrf.mxu0
      %v2787 = vadd.f32 0.0, %v2786
      %v2788 = vpop.f32.mrf.mxu0
      %v2789 = vadd.f32 0.0, %v2788
      %2790 = vdwg.mxu0
      %v2791 = vadd.f32 %v2431, %v2787
      %v2792 = vadd.f32 %v2432, %v2789
      %2793 = vrot.lane.b32.xlu0 %v1276, 1
      %v2794 = vpop.permute.xlu0 %2793
      %2795 = vrot.lane.b32.xlu0 %v1277, 1
      %v2796 = vpop.permute.xlu0 %2795
      %v2797 = vsel %vm2698, %v2794, %v2796
      %v2798 = vsel %vm2698, %v2796, %v2794
      %v2799 = vmul.f32 %v2798, %v2704
      %v2800 = vmul.f32 %v2797, %v2708
      %v2802 = vsel %vm385, %v2799, 0
      %v2805 = vsel %vm385, %v2800, 0
      %2807 = vmatprep.subr.mxu0 0.0
      %2808 = vmatpush1.msra.mxu0 0.0
      %2809 = vmatprep.subr.mxu0 0.0
      %2810 = vmatpush1.msra.mxu0 0.0
      %2811 = vmatprep.subr.mxu0 0.0
      %2812 = vmatpush1.msra.mxu0 0.0
      %2813 = vmatprep.subr.mxu0 0.0
      %2814 = vmatpush1.msra.mxu0 0.0
      %2815 = vmatprep.subr.mxu0 0.0
      %2816 = vmatpush1.msra.mxu0 0.0
      %2817 = vmatprep.subr.mxu0 0.0
      %2818 = vmatpush1.msra.mxu0 0.0
      %2819 = vmatprep.subr.mxu0 0.0
      %2820 = vmatpush1.msra.mxu0 0.0
      %2821 = vmatprep.subr.mxu0 0.0
      %2822 = vmatpush1.msra.mxu0 0.0
      %2823 = vmatprep.subr.mxu0 0.0
      %2824 = vmatpush1.msra.mxu0 0.0
      %2825 = vmatprep.subr.mxu0 0.0
      %2826 = vmatpush1.msra.mxu0 0.0
      %2827 = vmatprep.subr.mxu0 0.0
      %2828 = vmatpush1.msra.mxu0 0.0
      %2829 = vmatprep.subr.mxu0 0.0
      %2830 = vmatpush1.msra.mxu0 0.0
      %2831 = vmatprep.subr.mxu0 0.0
      %2832 = vmatpush1.msra.mxu0 0.0
      %2833 = vmatprep.subr.mxu0 0.0
      %2834 = vmatpush1.msra.mxu0 0.0
      %2835 = vmatprep.subr.mxu0 0.0
      %2836 = vmatpush1.msra.mxu0 0.0
      %2837 = vmatprep.subr.mxu0 %v2805
      %2838 = vmatpush1.msra.mxu0 %v2802
      %2839 = vmatprep.subr.mxu0 0.0
      %2840 = vmatpush2.msra.mxu0 0.0
      %2841 = vmatprep.subr.mxu0 0.0
      %2842 = vmatpush2.msra.mxu0 0.0
      %2843 = vmatprep.subr.mxu0 0.0
      %2844 = vmatpush2.msra.mxu0 0.0
      %2845 = vmatprep.subr.mxu0 0.0
      %2846 = vmatpush2.msra.mxu0 0.0
      %2847 = vmatprep.subr.mxu0 0.0
      %2848 = vmatpush2.msra.mxu0 0.0
      %2849 = vmatprep.subr.mxu0 0.0
      %2850 = vmatpush2.msra.mxu0 0.0
      %2851 = vmatprep.subr.mxu0 0.0
      %2852 = vmatpush2.msra.mxu0 0.0
      %2853 = vmatprep.subr.mxu0 0.0
      %2854 = vmatpush2.msra.mxu0 0.0
      %2855 = vmatprep.subr.mxu0 0.0
      %2856 = vmatpush2.msra.mxu0 0.0
      %2857 = vmatprep.subr.mxu0 0.0
      %2858 = vmatpush2.msra.mxu0 0.0
      %2859 = vmatprep.subr.mxu0 0.0
      %2860 = vmatpush2.msra.mxu0 0.0
      %2861 = vmatprep.subr.mxu0 0.0
      %2862 = vmatpush2.msra.mxu0 0.0
      %2863 = vmatprep.subr.mxu0 0.0
      %2864 = vmatpush2.msra.mxu0 0.0
      %2865 = vmatprep.subr.mxu0 0.0
      %2866 = vmatpush2.msra.mxu0 0.0
      %2867 = vmatprep.subr.mxu0 0.0
      %2868 = vmatpush2.msra.mxu0 0.0
      %2869 = vmatprep.subr.mxu0 0.0
      %2870 = vmatpush2.msra.mxu0 0.0
      %2871 = vmatprep.mubr.f32.mxu0 0.0
      %2872 = vmatmul.mubr.f32.gmra.mxu0 %v2712
      %v2873 = vpop.f32.mrf.mxu0
      %v2874 = vadd.f32 0.0, %v2873
      %v2875 = vpop.f32.mrf.mxu0
      %v2876 = vadd.f32 0.0, %v2875
      %2877 = vdwg.mxu0
      %v2878 = vadd.f32 %v2518, %v2874
      %v2879 = vadd.f32 %v2519, %v2876
      %2880 = vrot.lane.b32.xlu0 %v1278, 1
      %v2881 = vpop.permute.xlu0 %2880
      %2882 = vrot.lane.b32.xlu0 %v1279, 1
      %v2883 = vpop.permute.xlu0 %2882
      %v2884 = vsel %vm2698, %v2881, %v2883
      %v2885 = vsel %vm2698, %v2883, %v2881
      %v2886 = vmul.f32 %v2885, %v2704
      %v2887 = vmul.f32 %v2884, %v2708
      %v2889 = vsel %vm385, %v2886, 0
      %v2892 = vsel %vm385, %v2887, 0
      %2894 = vmatprep.subr.mxu0 0.0
      %2895 = vmatpush1.msra.mxu0 0.0
      %2896 = vmatprep.subr.mxu0 0.0
      %2897 = vmatpush1.msra.mxu0 0.0
      %2898 = vmatprep.subr.mxu0 0.0
      %2899 = vmatpush1.msra.mxu0 0.0
      %2900 = vmatprep.subr.mxu0 0.0
      %2901 = vmatpush1.msra.mxu0 0.0
      %2902 = vmatprep.subr.mxu0 0.0
      %2903 = vmatpush1.msra.mxu0 0.0
      %2904 = vmatprep.subr.mxu0 0.0
      %2905 = vmatpush1.msra.mxu0 0.0
      %2906 = vmatprep.subr.mxu0 0.0
      %2907 = vmatpush1.msra.mxu0 0.0
      %2908 = vmatprep.subr.mxu0 0.0
      %2909 = vmatpush1.msra.mxu0 0.0
      %2910 = vmatprep.subr.mxu0 0.0
      %2911 = vmatpush1.msra.mxu0 0.0
      %2912 = vmatprep.subr.mxu0 0.0
      %2913 = vmatpush1.msra.mxu0 0.0
      %2914 = vmatprep.subr.mxu0 0.0
      %2915 = vmatpush1.msra.mxu0 0.0
      %2916 = vmatprep.subr.mxu0 0.0
      %2917 = vmatpush1.msra.mxu0 0.0
      %2918 = vmatprep.subr.mxu0 0.0
      %2919 = vmatpush1.msra.mxu0 0.0
      %2920 = vmatprep.subr.mxu0 0.0
      %2921 = vmatpush1.msra.mxu0 0.0
      %2922 = vmatprep.subr.mxu0 0.0
      %2923 = vmatpush1.msra.mxu0 0.0
      %2924 = vmatprep.subr.mxu0 %v2892
      %2925 = vmatpush1.msra.mxu0 %v2889
      %2926 = vmatprep.subr.mxu0 0.0
      %2927 = vmatpush2.msra.mxu0 0.0
      %2928 = vmatprep.subr.mxu0 0.0
      %2929 = vmatpush2.msra.mxu0 0.0
      %2930 = vmatprep.subr.mxu0 0.0
      %2931 = vmatpush2.msra.mxu0 0.0
      %2932 = vmatprep.subr.mxu0 0.0
      %2933 = vmatpush2.msra.mxu0 0.0
      %2934 = vmatprep.subr.mxu0 0.0
      %2935 = vmatpush2.msra.mxu0 0.0
      %2936 = vmatprep.subr.mxu0 0.0
      %2937 = vmatpush2.msra.mxu0 0.0
      %2938 = vmatprep.subr.mxu0 0.0
      %2939 = vmatpush2.msra.mxu0 0.0
      %2940 = vmatprep.subr.mxu0 0.0
      %2941 = vmatpush2.msra.mxu0 0.0
      %2942 = vmatprep.subr.mxu0 0.0
      %2943 = vmatpush2.msra.mxu0 0.0
      %2944 = vmatprep.subr.mxu0 0.0
      %2945 = vmatpush2.msra.mxu0 0.0
      %2946 = vmatprep.subr.mxu0 0.0
      %2947 = vmatpush2.msra.mxu0 0.0
      %2948 = vmatprep.subr.mxu0 0.0
      %2949 = vmatpush2.msra.mxu0 0.0
      %2950 = vmatprep.subr.mxu0 0.0
      %2951 = vmatpush2.msra.mxu0 0.0
      %2952 = vmatprep.subr.mxu0 0.0
      %2953 = vmatpush2.msra.mxu0 0.0
      %2954 = vmatprep.subr.mxu0 0.0
      %2955 = vmatpush2.msra.mxu0 0.0
      %2956 = vmatprep.subr.mxu0 0.0
      %2957 = vmatpush2.msra.mxu0 0.0
      %2958 = vmatprep.mubr.f32.mxu0 0.0
      %2959 = vmatmul.mubr.f32.gmra.mxu0 %v2712
      %v2960 = vpop.f32.mrf.mxu0
      %v2961 = vadd.f32 0.0, %v2960
      %v2962 = vpop.f32.mrf.mxu0
      %v2963 = vadd.f32 0.0, %v2962
      %2964 = vdwg.mxu0
      %v2965 = vadd.f32 %v2605, %v2961
      %v2966 = vadd.f32 %v2606, %v2963
      %2967 = vrot.lane.b32.xlu0 %v1280, 1
      %v2968 = vpop.permute.xlu0 %2967
      %2969 = vrot.lane.b32.xlu0 %v1281, 1
      %v2970 = vpop.permute.xlu0 %2969
      %v2971 = vsel %vm2698, %v2968, %v2970
      %v2972 = vsel %vm2698, %v2970, %v2968
      %v2973 = vmul.f32 %v2972, %v2704
      %v2974 = vmul.f32 %v2971, %v2708
      %v2976 = vsel %vm385, %v2973, 0
      %v2979 = vsel %vm385, %v2974, 0
      %2981 = vmatprep.subr.mxu0 0.0
      %2982 = vmatpush1.msra.mxu0 0.0
      %2983 = vmatprep.subr.mxu0 0.0
      %2984 = vmatpush1.msra.mxu0 0.0
      %2985 = vmatprep.subr.mxu0 0.0
      %2986 = vmatpush1.msra.mxu0 0.0
      %2987 = vmatprep.subr.mxu0 0.0
      %2988 = vmatpush1.msra.mxu0 0.0
      %2989 = vmatprep.subr.mxu0 0.0
      %2990 = vmatpush1.msra.mxu0 0.0
      %2991 = vmatprep.subr.mxu0 0.0
      %2992 = vmatpush1.msra.mxu0 0.0
      %2993 = vmatprep.subr.mxu0 0.0
      %2994 = vmatpush1.msra.mxu0 0.0
      %2995 = vmatprep.subr.mxu0 0.0
      %2996 = vmatpush1.msra.mxu0 0.0
      %2997 = vmatprep.subr.mxu0 0.0
      %2998 = vmatpush1.msra.mxu0 0.0
      %2999 = vmatprep.subr.mxu0 0.0
      %3000 = vmatpush1.msra.mxu0 0.0
      %3001 = vmatprep.subr.mxu0 0.0
      %3002 = vmatpush1.msra.mxu0 0.0
      %3003 = vmatprep.subr.mxu0 0.0
      %3004 = vmatpush1.msra.mxu0 0.0
      %3005 = vmatprep.subr.mxu0 0.0
      %3006 = vmatpush1.msra.mxu0 0.0
      %3007 = vmatprep.subr.mxu0 0.0
      %3008 = vmatpush1.msra.mxu0 0.0
      %3009 = vmatprep.subr.mxu0 0.0
      %3010 = vmatpush1.msra.mxu0 0.0
      %3011 = vmatprep.subr.mxu0 %v2979
      %3012 = vmatpush1.msra.mxu0 %v2976
      %3013 = vmatprep.subr.mxu0 0.0
      %3014 = vmatpush2.msra.mxu0 0.0
      %3015 = vmatprep.subr.mxu0 0.0
      %3016 = vmatpush2.msra.mxu0 0.0
      %3017 = vmatprep.subr.mxu0 0.0
      %3018 = vmatpush2.msra.mxu0 0.0
      %3019 = vmatprep.subr.mxu0 0.0
      %3020 = vmatpush2.msra.mxu0 0.0
      %3021 = vmatprep.subr.mxu0 0.0
      %3022 = vmatpush2.msra.mxu0 0.0
      %3023 = vmatprep.subr.mxu0 0.0
      %3024 = vmatpush2.msra.mxu0 0.0
      %3025 = vmatprep.subr.mxu0 0.0
      %3026 = vmatpush2.msra.mxu0 0.0
      %3027 = vmatprep.subr.mxu0 0.0
      %3028 = vmatpush2.msra.mxu0 0.0
      %3029 = vmatprep.subr.mxu0 0.0
      %3030 = vmatpush2.msra.mxu0 0.0
      %3031 = vmatprep.subr.mxu0 0.0
      %3032 = vmatpush2.msra.mxu0 0.0
      %3033 = vmatprep.subr.mxu0 0.0
      %3034 = vmatpush2.msra.mxu0 0.0
      %3035 = vmatprep.subr.mxu0 0.0
      %3036 = vmatpush2.msra.mxu0 0.0
      %3037 = vmatprep.subr.mxu0 0.0
      %3038 = vmatpush2.msra.mxu0 0.0
      %3039 = vmatprep.subr.mxu0 0.0
      %3040 = vmatpush2.msra.mxu0 0.0
      %3041 = vmatprep.subr.mxu0 0.0
      %3042 = vmatpush2.msra.mxu0 0.0
      %3043 = vmatprep.subr.mxu0 0.0
      %3044 = vmatpush2.msra.mxu0 0.0
      %3045 = vmatprep.mubr.f32.mxu0 0.0
      %3046 = vmatmul.mubr.f32.gmra.mxu0 %v2712
      %v3047 = vpop.f32.mrf.mxu0
      %v3048 = vadd.f32 0.0, %v3047
      %v3049 = vpop.f32.mrf.mxu0
      %v3050 = vadd.f32 0.0, %v3049
      %3051 = vdwg.mxu0
      %v3052 = vadd.f32 %v2692, %v3048
      %v3053 = vadd.f32 %v2693, %v3050
      %3054 = vrot.lane.b32.xlu0 %v1274, 127
      %v3055 = vpop.permute.xlu0 %3054
      %3056 = vrot.lane.b32.xlu0 %v1275, 127
      %v3057 = vpop.permute.xlu0 %3056
      %vm3058 = vcmp.lt.s32.totalorder %v1617, 127
      %v3059 = vsel %vm3058, %v3055, %v3057
      %v3060 = vsel %vm3058, %v3057, %v3055
      %v3061 = vlaneseq
      %v3062 = vshrl.u32 %v3061, 7
      %v3063 = vsub.s32 5, %v3062
      %v3064 = vrot.slane %v1291, %v3063
      %v3065 = vlaneseq
      %v3066 = vshrl.u32 %v3065, 7
      %v3067 = vsub.s32 5, %v3066
      %v3068 = vrot.slane %v1292, %v3067
      %v3069 = vmul.f32 %v3059, %v3064
      %v3070 = vmul.f32 %v3060, %v3068
      %v3072 = vsel %vm381, %v1287, 0
      %v3075 = vsel %vm385, %v3069, 0
      %v3078 = vsel %vm385, %v3070, 0
      %3080 = vmatprep.subr.mxu0 0.0
      %3081 = vmatpush1.msra.mxu0 0.0
      %3082 = vmatprep.subr.mxu0 0.0
      %3083 = vmatpush1.msra.mxu0 0.0
      %3084 = vmatprep.subr.mxu0 0.0
      %3085 = vmatpush1.msra.mxu0 0.0
      %3086 = vmatprep.subr.mxu0 0.0
      %3087 = vmatpush1.msra.mxu0 0.0
      %3088 = vmatprep.subr.mxu0 0.0
      %3089 = vmatpush1.msra.mxu0 0.0
      %3090 = vmatprep.subr.mxu0 0.0
      %3091 = vmatpush1.msra.mxu0 0.0
      %3092 = vmatprep.subr.mxu0 0.0
      %3093 = vmatpush1.msra.mxu0 0.0
      %3094 = vmatprep.subr.mxu0 0.0
      %3095 = vmatpush1.msra.mxu0 0.0
      %3096 = vmatprep.subr.mxu0 0.0
      %3097 = vmatpush1.msra.mxu0 0.0
      %3098 = vmatprep.subr.mxu0 0.0
      %3099 = vmatpush1.msra.mxu0 0.0
      %3100 = vmatprep.subr.mxu0 0.0
      %3101 = vmatpush1.msra.mxu0 0.0
      %3102 = vmatprep.subr.mxu0 0.0
      %3103 = vmatpush1.msra.mxu0 0.0
      %3104 = vmatprep.subr.mxu0 0.0
      %3105 = vmatpush1.msra.mxu0 0.0
      %3106 = vmatprep.subr.mxu0 0.0
      %3107 = vmatpush1.msra.mxu0 0.0
      %3108 = vmatprep.subr.mxu0 0.0
      %3109 = vmatpush1.msra.mxu0 0.0
      %3110 = vmatprep.subr.mxu0 %v3078
      %3111 = vmatpush1.msra.mxu0 %v3075
      %3112 = vmatprep.subr.mxu0 0.0
      %3113 = vmatpush2.msra.mxu0 0.0
      %3114 = vmatprep.subr.mxu0 0.0
      %3115 = vmatpush2.msra.mxu0 0.0
      %3116 = vmatprep.subr.mxu0 0.0
      %3117 = vmatpush2.msra.mxu0 0.0
      %3118 = vmatprep.subr.mxu0 0.0
      %3119 = vmatpush2.msra.mxu0 0.0
      %3120 = vmatprep.subr.mxu0 0.0
      %3121 = vmatpush2.msra.mxu0 0.0
      %3122 = vmatprep.subr.mxu0 0.0
      %3123 = vmatpush2.msra.mxu0 0.0
      %3124 = vmatprep.subr.mxu0 0.0
      %3125 = vmatpush2.msra.mxu0 0.0
      %3126 = vmatprep.subr.mxu0 0.0
      %3127 = vmatpush2.msra.mxu0 0.0
      %3128 = vmatprep.subr.mxu0 0.0
      %3129 = vmatpush2.msra.mxu0 0.0
      %3130 = vmatprep.subr.mxu0 0.0
      %3131 = vmatpush2.msra.mxu0 0.0
      %3132 = vmatprep.subr.mxu0 0.0
      %3133 = vmatpush2.msra.mxu0 0.0
      %3134 = vmatprep.subr.mxu0 0.0
      %3135 = vmatpush2.msra.mxu0 0.0
      %3136 = vmatprep.subr.mxu0 0.0
      %3137 = vmatpush2.msra.mxu0 0.0
      %3138 = vmatprep.subr.mxu0 0.0
      %3139 = vmatpush2.msra.mxu0 0.0
      %3140 = vmatprep.subr.mxu0 0.0
      %3141 = vmatpush2.msra.mxu0 0.0
      %3142 = vmatprep.subr.mxu0 0.0
      %3143 = vmatpush2.msra.mxu0 0.0
      %3144 = vmatprep.mubr.f32.mxu0 0.0
      %3145 = vmatmul.mubr.f32.gmra.mxu0 %v3072
      %v3146 = vpop.f32.mrf.mxu0
      %v3147 = vadd.f32 0.0, %v3146
      %v3148 = vpop.f32.mrf.mxu0
      %v3149 = vadd.f32 0.0, %v3148
      %3150 = vdwg.mxu0
      %v3151 = vadd.f32 %v2791, %v3147
      %v3152 = vadd.f32 %v2792, %v3149
      %3153 = vrot.lane.b32.xlu0 %v1276, 127
      %v3154 = vpop.permute.xlu0 %3153
      %3155 = vrot.lane.b32.xlu0 %v1277, 127
      %v3156 = vpop.permute.xlu0 %3155
      %v3157 = vsel %vm3058, %v3154, %v3156
      %v3158 = vsel %vm3058, %v3156, %v3154
      %v3159 = vmul.f32 %v3157, %v3064
      %v3160 = vmul.f32 %v3158, %v3068
      %v3162 = vsel %vm385, %v3159, 0
      %v3165 = vsel %vm385, %v3160, 0
      %3167 = vmatprep.subr.mxu0 0.0
      %3168 = vmatpush1.msra.mxu0 0.0
      %3169 = vmatprep.subr.mxu0 0.0
      %3170 = vmatpush1.msra.mxu0 0.0
      %3171 = vmatprep.subr.mxu0 0.0
      %3172 = vmatpush1.msra.mxu0 0.0
      %3173 = vmatprep.subr.mxu0 0.0
      %3174 = vmatpush1.msra.mxu0 0.0
      %3175 = vmatprep.subr.mxu0 0.0
      %3176 = vmatpush1.msra.mxu0 0.0
      %3177 = vmatprep.subr.mxu0 0.0
      %3178 = vmatpush1.msra.mxu0 0.0
      %3179 = vmatprep.subr.mxu0 0.0
      %3180 = vmatpush1.msra.mxu0 0.0
      %3181 = vmatprep.subr.mxu0 0.0
      %3182 = vmatpush1.msra.mxu0 0.0
      %3183 = vmatprep.subr.mxu0 0.0
      %3184 = vmatpush1.msra.mxu0 0.0
      %3185 = vmatprep.subr.mxu0 0.0
      %3186 = vmatpush1.msra.mxu0 0.0
      %3187 = vmatprep.subr.mxu0 0.0
      %3188 = vmatpush1.msra.mxu0 0.0
      %3189 = vmatprep.subr.mxu0 0.0
      %3190 = vmatpush1.msra.mxu0 0.0
      %3191 = vmatprep.subr.mxu0 0.0
      %3192 = vmatpush1.msra.mxu0 0.0
      %3193 = vmatprep.subr.mxu0 0.0
      %3194 = vmatpush1.msra.mxu0 0.0
      %3195 = vmatprep.subr.mxu0 0.0
      %3196 = vmatpush1.msra.mxu0 0.0
      %3197 = vmatprep.subr.mxu0 %v3165
      %3198 = vmatpush1.msra.mxu0 %v3162
      %3199 = vmatprep.subr.mxu0 0.0
      %3200 = vmatpush2.msra.mxu0 0.0
      %3201 = vmatprep.subr.mxu0 0.0
      %3202 = vmatpush2.msra.mxu0 0.0
      %3203 = vmatprep.subr.mxu0 0.0
      %3204 = vmatpush2.msra.mxu0 0.0
      %3205 = vmatprep.subr.mxu0 0.0
      %3206 = vmatpush2.msra.mxu0 0.0
      %3207 = vmatprep.subr.mxu0 0.0
      %3208 = vmatpush2.msra.mxu0 0.0
      %3209 = vmatprep.subr.mxu0 0.0
      %3210 = vmatpush2.msra.mxu0 0.0
      %3211 = vmatprep.subr.mxu0 0.0
      %3212 = vmatpush2.msra.mxu0 0.0
      %3213 = vmatprep.subr.mxu0 0.0
      %3214 = vmatpush2.msra.mxu0 0.0
      %3215 = vmatprep.subr.mxu0 0.0
      %3216 = vmatpush2.msra.mxu0 0.0
      %3217 = vmatprep.subr.mxu0 0.0
      %3218 = vmatpush2.msra.mxu0 0.0
      %3219 = vmatprep.subr.mxu0 0.0
      %3220 = vmatpush2.msra.mxu0 0.0
      %3221 = vmatprep.subr.mxu0 0.0
      %3222 = vmatpush2.msra.mxu0 0.0
      %3223 = vmatprep.subr.mxu0 0.0
      %3224 = vmatpush2.msra.mxu0 0.0
      %3225 = vmatprep.subr.mxu0 0.0
      %3226 = vmatpush2.msra.mxu0 0.0
      %3227 = vmatprep.subr.mxu0 0.0
      %3228 = vmatpush2.msra.mxu0 0.0
      %3229 = vmatprep.subr.mxu0 0.0
      %3230 = vmatpush2.msra.mxu0 0.0
      %3231 = vmatprep.mubr.f32.mxu0 0.0
      %3232 = vmatmul.mubr.f32.gmra.mxu0 %v3072
      %v3233 = vpop.f32.mrf.mxu0
      %v3234 = vadd.f32 0.0, %v3233
      %v3235 = vpop.f32.mrf.mxu0
      %v3236 = vadd.f32 0.0, %v3235
      %3237 = vdwg.mxu0
      %v3238 = vadd.f32 %v2878, %v3234
      %v3239 = vadd.f32 %v2879, %v3236
      %3240 = vrot.lane.b32.xlu0 %v1278, 127
      %v3241 = vpop.permute.xlu0 %3240
      %3242 = vrot.lane.b32.xlu0 %v1279, 127
      %v3243 = vpop.permute.xlu0 %3242
      %v3244 = vsel %vm3058, %v3241, %v3243
      %v3245 = vsel %vm3058, %v3243, %v3241
      %v3246 = vmul.f32 %v3244, %v3064
      %v3247 = vmul.f32 %v3245, %v3068
      %v3249 = vsel %vm385, %v3246, 0
      %v3252 = vsel %vm385, %v3247, 0
      %3254 = vmatprep.subr.mxu0 0.0
      %3255 = vmatpush1.msra.mxu0 0.0
      %3256 = vmatprep.subr.mxu0 0.0
      %3257 = vmatpush1.msra.mxu0 0.0
      %3258 = vmatprep.subr.mxu0 0.0
      %3259 = vmatpush1.msra.mxu0 0.0
      %3260 = vmatprep.subr.mxu0 0.0
      %3261 = vmatpush1.msra.mxu0 0.0
      %3262 = vmatprep.subr.mxu0 0.0
      %3263 = vmatpush1.msra.mxu0 0.0
      %3264 = vmatprep.subr.mxu0 0.0
      %3265 = vmatpush1.msra.mxu0 0.0
      %3266 = vmatprep.subr.mxu0 0.0
      %3267 = vmatpush1.msra.mxu0 0.0
      %3268 = vmatprep.subr.mxu0 0.0
      %3269 = vmatpush1.msra.mxu0 0.0
      %3270 = vmatprep.subr.mxu0 0.0
      %3271 = vmatpush1.msra.mxu0 0.0
      %3272 = vmatprep.subr.mxu0 0.0
      %3273 = vmatpush1.msra.mxu0 0.0
      %3274 = vmatprep.subr.mxu0 0.0
      %3275 = vmatpush1.msra.mxu0 0.0
      %3276 = vmatprep.subr.mxu0 0.0
      %3277 = vmatpush1.msra.mxu0 0.0
      %3278 = vmatprep.subr.mxu0 0.0
      %3279 = vmatpush1.msra.mxu0 0.0
      %3280 = vmatprep.subr.mxu0 0.0
      %3281 = vmatpush1.msra.mxu0 0.0
      %3282 = vmatprep.subr.mxu0 0.0
      %3283 = vmatpush1.msra.mxu0 0.0
      %3284 = vmatprep.subr.mxu0 %v3252
      %3285 = vmatpush1.msra.mxu0 %v3249
      %3286 = vmatprep.subr.mxu0 0.0
      %3287 = vmatpush2.msra.mxu0 0.0
      %3288 = vmatprep.subr.mxu0 0.0
      %3289 = vmatpush2.msra.mxu0 0.0
      %3290 = vmatprep.subr.mxu0 0.0
      %3291 = vmatpush2.msra.mxu0 0.0
      %3292 = vmatprep.subr.mxu0 0.0
      %3293 = vmatpush2.msra.mxu0 0.0
      %3294 = vmatprep.subr.mxu0 0.0
      %3295 = vmatpush2.msra.mxu0 0.0
      %3296 = vmatprep.subr.mxu0 0.0
      %3297 = vmatpush2.msra.mxu0 0.0
      %3298 = vmatprep.subr.mxu0 0.0
      %3299 = vmatpush2.msra.mxu0 0.0
      %3300 = vmatprep.subr.mxu0 0.0
      %3301 = vmatpush2.msra.mxu0 0.0
      %3302 = vmatprep.subr.mxu0 0.0
      %3303 = vmatpush2.msra.mxu0 0.0
      %3304 = vmatprep.subr.mxu0 0.0
      %3305 = vmatpush2.msra.mxu0 0.0
      %3306 = vmatprep.subr.mxu0 0.0
      %3307 = vmatpush2.msra.mxu0 0.0
      %3308 = vmatprep.subr.mxu0 0.0
      %3309 = vmatpush2.msra.mxu0 0.0
      %3310 = vmatprep.subr.mxu0 0.0
      %3311 = vmatpush2.msra.mxu0 0.0
      %3312 = vmatprep.subr.mxu0 0.0
      %3313 = vmatpush2.msra.mxu0 0.0
      %3314 = vmatprep.subr.mxu0 0.0
      %3315 = vmatpush2.msra.mxu0 0.0
      %3316 = vmatprep.subr.mxu0 0.0
      %3317 = vmatpush2.msra.mxu0 0.0
      %3318 = vmatprep.mubr.f32.mxu0 0.0
      %3319 = vmatmul.mubr.f32.gmra.mxu0 %v3072
      %v3320 = vpop.f32.mrf.mxu0
      %v3321 = vadd.f32 0.0, %v3320
      %v3322 = vpop.f32.mrf.mxu0
      %v3323 = vadd.f32 0.0, %v3322
      %3324 = vdwg.mxu0
      %v3325 = vadd.f32 %v2965, %v3321
      %v3326 = vadd.f32 %v2966, %v3323
      %3327 = vrot.lane.b32.xlu0 %v1280, 127
      %v3328 = vpop.permute.xlu0 %3327
      %3329 = vrot.lane.b32.xlu0 %v1281, 127
      %v3330 = vpop.permute.xlu0 %3329
      %v3331 = vsel %vm3058, %v3328, %v3330
      %v3332 = vsel %vm3058, %v3330, %v3328
      %v3333 = vmul.f32 %v3331, %v3064
      %v3334 = vmul.f32 %v3332, %v3068
      %v3336 = vsel %vm385, %v3333, 0
      %v3339 = vsel %vm385, %v3334, 0
      %3341 = vmatprep.subr.mxu0 0.0
      %3342 = vmatpush1.msra.mxu0 0.0
      %3343 = vmatprep.subr.mxu0 0.0
      %3344 = vmatpush1.msra.mxu0 0.0
      %3345 = vmatprep.subr.mxu0 0.0
      %3346 = vmatpush1.msra.mxu0 0.0
      %3347 = vmatprep.subr.mxu0 0.0
      %3348 = vmatpush1.msra.mxu0 0.0
      %3349 = vmatprep.subr.mxu0 0.0
      %3350 = vmatpush1.msra.mxu0 0.0
      %3351 = vmatprep.subr.mxu0 0.0
      %3352 = vmatpush1.msra.mxu0 0.0
      %3353 = vmatprep.subr.mxu0 0.0
      %3354 = vmatpush1.msra.mxu0 0.0
      %3355 = vmatprep.subr.mxu0 0.0
      %3356 = vmatpush1.msra.mxu0 0.0
      %3357 = vmatprep.subr.mxu0 0.0
      %3358 = vmatpush1.msra.mxu0 0.0
      %3359 = vmatprep.subr.mxu0 0.0
      %3360 = vmatpush1.msra.mxu0 0.0
      %3361 = vmatprep.subr.mxu0 0.0
      %3362 = vmatpush1.msra.mxu0 0.0
      %3363 = vmatprep.subr.mxu0 0.0
      %3364 = vmatpush1.msra.mxu0 0.0
      %3365 = vmatprep.subr.mxu0 0.0
      %3366 = vmatpush1.msra.mxu0 0.0
      %3367 = vmatprep.subr.mxu0 0.0
      %3368 = vmatpush1.msra.mxu0 0.0
      %3369 = vmatprep.subr.mxu0 0.0
      %3370 = vmatpush1.msra.mxu0 0.0
      %3371 = vmatprep.subr.mxu0 %v3339
      %3372 = vmatpush1.msra.mxu0 %v3336
      %3373 = vmatprep.subr.mxu0 0.0
      %3374 = vmatpush2.msra.mxu0 0.0
      %3375 = vmatprep.subr.mxu0 0.0
      %3376 = vmatpush2.msra.mxu0 0.0
      %3377 = vmatprep.subr.mxu0 0.0
      %3378 = vmatpush2.msra.mxu0 0.0
      %3379 = vmatprep.subr.mxu0 0.0
      %3380 = vmatpush2.msra.mxu0 0.0
      %3381 = vmatprep.subr.mxu0 0.0
      %3382 = vmatpush2.msra.mxu0 0.0
      %3383 = vmatprep.subr.mxu0 0.0
      %3384 = vmatpush2.msra.mxu0 0.0
      %3385 = vmatprep.subr.mxu0 0.0
      %3386 = vmatpush2.msra.mxu0 0.0
      %3387 = vmatprep.subr.mxu0 0.0
      %3388 = vmatpush2.msra.mxu0 0.0
      %3389 = vmatprep.subr.mxu0 0.0
      %3390 = vmatpush2.msra.mxu0 0.0
      %3391 = vmatprep.subr.mxu0 0.0
      %3392 = vmatpush2.msra.mxu0 0.0
      %3393 = vmatprep.subr.mxu0 0.0
      %3394 = vmatpush2.msra.mxu0 0.0
      %3395 = vmatprep.subr.mxu0 0.0
      %3396 = vmatpush2.msra.mxu0 0.0
      %3397 = vmatprep.subr.mxu0 0.0
      %3398 = vmatpush2.msra.mxu0 0.0
      %3399 = vmatprep.subr.mxu0 0.0
      %3400 = vmatpush2.msra.mxu0 0.0
      %3401 = vmatprep.subr.mxu0 0.0
      %3402 = vmatpush2.msra.mxu0 0.0
      %3403 = vmatprep.subr.mxu0 0.0
      %3404 = vmatpush2.msra.mxu0 0.0
      %3405 = vmatprep.mubr.f32.mxu0 0.0
      %3406 = vmatmul.mubr.f32.gmra.mxu0 %v3072
      %v3407 = vpop.f32.mrf.mxu0
      %v3408 = vadd.f32 0.0, %v3407
      %v3409 = vpop.f32.mrf.mxu0
      %v3410 = vadd.f32 0.0, %v3409
      %3411 = vdwg.mxu0
      %v3412 = vadd.f32 %v3052, %v3408
      %v3413 = vadd.f32 %v3053, %v3410
      %3414 = vrot.lane.b32.xlu0 %v1274, 113
      %v3415 = vpop.permute.xlu0 %3414
      %3416 = vrot.lane.b32.xlu0 %v1275, 113
      %v3417 = vpop.permute.xlu0 %3416
      %vm3418 = vcmp.lt.s32.totalorder %v1617, 113
      %v3419 = vsel %vm3418, %v3415, %v3417
      %v3420 = vsel %vm3418, %v3417, %v3415
      %v3421 = vlaneseq
      %v3422 = vshrl.u32 %v3421, 7
      %v3423 = vsub.s32 6, %v3422
      %v3424 = vrot.slane %v1291, %v3423
      %v3425 = vlaneseq
      %v3426 = vshrl.u32 %v3425, 7
      %v3427 = vsub.s32 6, %v3426
      %v3428 = vrot.slane %v1292, %v3427
      %v3429 = vmul.f32 %v3419, %v3424
      %v3430 = vmul.f32 %v3420, %v3428
      %v3432 = vsel %vm381, %v1288, 0
      %v3435 = vsel %vm385, %v3429, 0
      %v3438 = vsel %vm385, %v3430, 0
      %3440 = vmatprep.subr.mxu0 0.0
      %3441 = vmatpush1.msra.mxu0 0.0
      %3442 = vmatprep.subr.mxu0 0.0
      %3443 = vmatpush1.msra.mxu0 0.0
      %3444 = vmatprep.subr.mxu0 0.0
      %3445 = vmatpush1.msra.mxu0 0.0
      %3446 = vmatprep.subr.mxu0 0.0
      %3447 = vmatpush1.msra.mxu0 0.0
      %3448 = vmatprep.subr.mxu0 0.0
      %3449 = vmatpush1.msra.mxu0 0.0
      %3450 = vmatprep.subr.mxu0 0.0
      %3451 = vmatpush1.msra.mxu0 0.0
      %3452 = vmatprep.subr.mxu0 0.0
      %3453 = vmatpush1.msra.mxu0 0.0
      %3454 = vmatprep.subr.mxu0 0.0
      %3455 = vmatpush1.msra.mxu0 0.0
      %3456 = vmatprep.subr.mxu0 0.0
      %3457 = vmatpush1.msra.mxu0 0.0
      %3458 = vmatprep.subr.mxu0 0.0
      %3459 = vmatpush1.msra.mxu0 0.0
      %3460 = vmatprep.subr.mxu0 0.0
      %3461 = vmatpush1.msra.mxu0 0.0
      %3462 = vmatprep.subr.mxu0 0.0
      %3463 = vmatpush1.msra.mxu0 0.0
      %3464 = vmatprep.subr.mxu0 0.0
      %3465 = vmatpush1.msra.mxu0 0.0
      %3466 = vmatprep.subr.mxu0 0.0
      %3467 = vmatpush1.msra.mxu0 0.0
      %3468 = vmatprep.subr.mxu0 0.0
      %3469 = vmatpush1.msra.mxu0 0.0
      %3470 = vmatprep.subr.mxu0 %v3438
      %3471 = vmatpush1.msra.mxu0 %v3435
      %3472 = vmatprep.subr.mxu0 0.0
      %3473 = vmatpush2.msra.mxu0 0.0
      %3474 = vmatprep.subr.mxu0 0.0
      %3475 = vmatpush2.msra.mxu0 0.0
      %3476 = vmatprep.subr.mxu0 0.0
      %3477 = vmatpush2.msra.mxu0 0.0
      %3478 = vmatprep.subr.mxu0 0.0
      %3479 = vmatpush2.msra.mxu0 0.0
      %3480 = vmatprep.subr.mxu0 0.0
      %3481 = vmatpush2.msra.mxu0 0.0
      %3482 = vmatprep.subr.mxu0 0.0
      %3483 = vmatpush2.msra.mxu0 0.0
      %3484 = vmatprep.subr.mxu0 0.0
      %3485 = vmatpush2.msra.mxu0 0.0
      %3486 = vmatprep.subr.mxu0 0.0
      %3487 = vmatpush2.msra.mxu0 0.0
      %3488 = vmatprep.subr.mxu0 0.0
      %3489 = vmatpush2.msra.mxu0 0.0
      %3490 = vmatprep.subr.mxu0 0.0
      %3491 = vmatpush2.msra.mxu0 0.0
      %3492 = vmatprep.subr.mxu0 0.0
      %3493 = vmatpush2.msra.mxu0 0.0
      %3494 = vmatprep.subr.mxu0 0.0
      %3495 = vmatpush2.msra.mxu0 0.0
      %3496 = vmatprep.subr.mxu0 0.0
      %3497 = vmatpush2.msra.mxu0 0.0
      %3498 = vmatprep.subr.mxu0 0.0
      %3499 = vmatpush2.msra.mxu0 0.0
      %3500 = vmatprep.subr.mxu0 0.0
      %3501 = vmatpush2.msra.mxu0 0.0
      %3502 = vmatprep.subr.mxu0 0.0
      %3503 = vmatpush2.msra.mxu0 0.0
      %3504 = vmatprep.mubr.f32.mxu0 0.0
      %3505 = vmatmul.mubr.f32.gmra.mxu0 %v3432
      %v3506 = vpop.f32.mrf.mxu0
      %v3507 = vadd.f32 0.0, %v3506
      %v3508 = vpop.f32.mrf.mxu0
      %v3509 = vadd.f32 0.0, %v3508
      %3510 = vdwg.mxu0
      %v3511 = vadd.f32 %v3151, %v3507
      %v3512 = vadd.f32 %v3152, %v3509
      %3513 = vrot.lane.b32.xlu0 %v1276, 113
      %v3514 = vpop.permute.xlu0 %3513
      %3515 = vrot.lane.b32.xlu0 %v1277, 113
      %v3516 = vpop.permute.xlu0 %3515
      %v3517 = vsel %vm3418, %v3514, %v3516
      %v3518 = vsel %vm3418, %v3516, %v3514
      %v3519 = vmul.f32 %v3517, %v3424
      %v3520 = vmul.f32 %v3518, %v3428
      %v3522 = vsel %vm385, %v3519, 0
      %v3525 = vsel %vm385, %v3520, 0
      %3527 = vmatprep.subr.mxu0 0.0
      %3528 = vmatpush1.msra.mxu0 0.0
      %3529 = vmatprep.subr.mxu0 0.0
      %3530 = vmatpush1.msra.mxu0 0.0
      %3531 = vmatprep.subr.mxu0 0.0
      %3532 = vmatpush1.msra.mxu0 0.0
      %3533 = vmatprep.subr.mxu0 0.0
      %3534 = vmatpush1.msra.mxu0 0.0
      %3535 = vmatprep.subr.mxu0 0.0
      %3536 = vmatpush1.msra.mxu0 0.0
      %3537 = vmatprep.subr.mxu0 0.0
      %3538 = vmatpush1.msra.mxu0 0.0
      %3539 = vmatprep.subr.mxu0 0.0
      %3540 = vmatpush1.msra.mxu0 0.0
      %3541 = vmatprep.subr.mxu0 0.0
      %3542 = vmatpush1.msra.mxu0 0.0
      %3543 = vmatprep.subr.mxu0 0.0
      %3544 = vmatpush1.msra.mxu0 0.0
      %3545 = vmatprep.subr.mxu0 0.0
      %3546 = vmatpush1.msra.mxu0 0.0
      %3547 = vmatprep.subr.mxu0 0.0
      %3548 = vmatpush1.msra.mxu0 0.0
      %3549 = vmatprep.subr.mxu0 0.0
      %3550 = vmatpush1.msra.mxu0 0.0
      %3551 = vmatprep.subr.mxu0 0.0
      %3552 = vmatpush1.msra.mxu0 0.0
      %3553 = vmatprep.subr.mxu0 0.0
      %3554 = vmatpush1.msra.mxu0 0.0
      %3555 = vmatprep.subr.mxu0 0.0
      %3556 = vmatpush1.msra.mxu0 0.0
      %3557 = vmatprep.subr.mxu0 %v3525
      %3558 = vmatpush1.msra.mxu0 %v3522
      %3559 = vmatprep.subr.mxu0 0.0
      %3560 = vmatpush2.msra.mxu0 0.0
      %3561 = vmatprep.subr.mxu0 0.0
      %3562 = vmatpush2.msra.mxu0 0.0
      %3563 = vmatprep.subr.mxu0 0.0
      %3564 = vmatpush2.msra.mxu0 0.0
      %3565 = vmatprep.subr.mxu0 0.0
      %3566 = vmatpush2.msra.mxu0 0.0
      %3567 = vmatprep.subr.mxu0 0.0
      %3568 = vmatpush2.msra.mxu0 0.0
      %3569 = vmatprep.subr.mxu0 0.0
      %3570 = vmatpush2.msra.mxu0 0.0
      %3571 = vmatprep.subr.mxu0 0.0
      %3572 = vmatpush2.msra.mxu0 0.0
      %3573 = vmatprep.subr.mxu0 0.0
      %3574 = vmatpush2.msra.mxu0 0.0
      %3575 = vmatprep.subr.mxu0 0.0
      %3576 = vmatpush2.msra.mxu0 0.0
      %3577 = vmatprep.subr.mxu0 0.0
      %3578 = vmatpush2.msra.mxu0 0.0
      %3579 = vmatprep.subr.mxu0 0.0
      %3580 = vmatpush2.msra.mxu0 0.0
      %3581 = vmatprep.subr.mxu0 0.0
      %3582 = vmatpush2.msra.mxu0 0.0
      %3583 = vmatprep.subr.mxu0 0.0
      %3584 = vmatpush2.msra.mxu0 0.0
      %3585 = vmatprep.subr.mxu0 0.0
      %3586 = vmatpush2.msra.mxu0 0.0
      %3587 = vmatprep.subr.mxu0 0.0
      %3588 = vmatpush2.msra.mxu0 0.0
      %3589 = vmatprep.subr.mxu0 0.0
      %3590 = vmatpush2.msra.mxu0 0.0
      %3591 = vmatprep.mubr.f32.mxu0 0.0
      %3592 = vmatmul.mubr.f32.gmra.mxu0 %v3432
      %v3593 = vpop.f32.mrf.mxu0
      %v3594 = vadd.f32 0.0, %v3593
      %v3595 = vpop.f32.mrf.mxu0
      %v3596 = vadd.f32 0.0, %v3595
      %3597 = vdwg.mxu0
      %v3598 = vadd.f32 %v3238, %v3594
      %v3599 = vadd.f32 %v3239, %v3596
      %3600 = vrot.lane.b32.xlu0 %v1278, 113
      %v3601 = vpop.permute.xlu0 %3600
      %3602 = vrot.lane.b32.xlu0 %v1279, 113
      %v3603 = vpop.permute.xlu0 %3602
      %v3604 = vsel %vm3418, %v3601, %v3603
      %v3605 = vsel %vm3418, %v3603, %v3601
      %v3606 = vmul.f32 %v3604, %v3424
      %v3607 = vmul.f32 %v3605, %v3428
      %v3609 = vsel %vm385, %v3606, 0
      %v3612 = vsel %vm385, %v3607, 0
      %3614 = vmatprep.subr.mxu0 0.0
      %3615 = vmatpush1.msra.mxu0 0.0
      %3616 = vmatprep.subr.mxu0 0.0
      %3617 = vmatpush1.msra.mxu0 0.0
      %3618 = vmatprep.subr.mxu0 0.0
      %3619 = vmatpush1.msra.mxu0 0.0
      %3620 = vmatprep.subr.mxu0 0.0
      %3621 = vmatpush1.msra.mxu0 0.0
      %3622 = vmatprep.subr.mxu0 0.0
      %3623 = vmatpush1.msra.mxu0 0.0
      %3624 = vmatprep.subr.mxu0 0.0
      %3625 = vmatpush1.msra.mxu0 0.0
      %3626 = vmatprep.subr.mxu0 0.0
      %3627 = vmatpush1.msra.mxu0 0.0
      %3628 = vmatprep.subr.mxu0 0.0
      %3629 = vmatpush1.msra.mxu0 0.0
      %3630 = vmatprep.subr.mxu0 0.0
      %3631 = vmatpush1.msra.mxu0 0.0
      %3632 = vmatprep.subr.mxu0 0.0
      %3633 = vmatpush1.msra.mxu0 0.0
      %3634 = vmatprep.subr.mxu0 0.0
      %3635 = vmatpush1.msra.mxu0 0.0
      %3636 = vmatprep.subr.mxu0 0.0
      %3637 = vmatpush1.msra.mxu0 0.0
      %3638 = vmatprep.subr.mxu0 0.0
      %3639 = vmatpush1.msra.mxu0 0.0
      %3640 = vmatprep.subr.mxu0 0.0
      %3641 = vmatpush1.msra.mxu0 0.0
      %3642 = vmatprep.subr.mxu0 0.0
      %3643 = vmatpush1.msra.mxu0 0.0
      %3644 = vmatprep.subr.mxu0 %v3612
      %3645 = vmatpush1.msra.mxu0 %v3609
      %3646 = vmatprep.subr.mxu0 0.0
      %3647 = vmatpush2.msra.mxu0 0.0
      %3648 = vmatprep.subr.mxu0 0.0
      %3649 = vmatpush2.msra.mxu0 0.0
      %3650 = vmatprep.subr.mxu0 0.0
      %3651 = vmatpush2.msra.mxu0 0.0
      %3652 = vmatprep.subr.mxu0 0.0
      %3653 = vmatpush2.msra.mxu0 0.0
      %3654 = vmatprep.subr.mxu0 0.0
      %3655 = vmatpush2.msra.mxu0 0.0
      %3656 = vmatprep.subr.mxu0 0.0
      %3657 = vmatpush2.msra.mxu0 0.0
      %3658 = vmatprep.subr.mxu0 0.0
      %3659 = vmatpush2.msra.mxu0 0.0
      %3660 = vmatprep.subr.mxu0 0.0
      %3661 = vmatpush2.msra.mxu0 0.0
      %3662 = vmatprep.subr.mxu0 0.0
      %3663 = vmatpush2.msra.mxu0 0.0
      %3664 = vmatprep.subr.mxu0 0.0
      %3665 = vmatpush2.msra.mxu0 0.0
      %3666 = vmatprep.subr.mxu0 0.0
      %3667 = vmatpush2.msra.mxu0 0.0
      %3668 = vmatprep.subr.mxu0 0.0
      %3669 = vmatpush2.msra.mxu0 0.0
      %3670 = vmatprep.subr.mxu0 0.0
      %3671 = vmatpush2.msra.mxu0 0.0
      %3672 = vmatprep.subr.mxu0 0.0
      %3673 = vmatpush2.msra.mxu0 0.0
      %3674 = vmatprep.subr.mxu0 0.0
      %3675 = vmatpush2.msra.mxu0 0.0
      %3676 = vmatprep.subr.mxu0 0.0
      %3677 = vmatpush2.msra.mxu0 0.0
      %3678 = vmatprep.mubr.f32.mxu0 0.0
      %3679 = vmatmul.mubr.f32.gmra.mxu0 %v3432
      %v3680 = vpop.f32.mrf.mxu0
      %v3681 = vadd.f32 0.0, %v3680
      %v3682 = vpop.f32.mrf.mxu0
      %v3683 = vadd.f32 0.0, %v3682
      %3684 = vdwg.mxu0
      %v3685 = vadd.f32 %v3325, %v3681
      %v3686 = vadd.f32 %v3326, %v3683
      %3687 = vrot.lane.b32.xlu0 %v1280, 113
      %v3688 = vpop.permute.xlu0 %3687
      %3689 = vrot.lane.b32.xlu0 %v1281, 113
      %v3690 = vpop.permute.xlu0 %3689
      %v3691 = vsel %vm3418, %v3688, %v3690
      %v3692 = vsel %vm3418, %v3690, %v3688
      %v3693 = vmul.f32 %v3691, %v3424
      %v3694 = vmul.f32 %v3692, %v3428
      %v3696 = vsel %vm385, %v3693, 0
      %v3699 = vsel %vm385, %v3694, 0
      %3701 = vmatprep.subr.mxu0 0.0
      %3702 = vmatpush1.msra.mxu0 0.0
      %3703 = vmatprep.subr.mxu0 0.0
      %3704 = vmatpush1.msra.mxu0 0.0
      %3705 = vmatprep.subr.mxu0 0.0
      %3706 = vmatpush1.msra.mxu0 0.0
      %3707 = vmatprep.subr.mxu0 0.0
      %3708 = vmatpush1.msra.mxu0 0.0
      %3709 = vmatprep.subr.mxu0 0.0
      %3710 = vmatpush1.msra.mxu0 0.0
      %3711 = vmatprep.subr.mxu0 0.0
      %3712 = vmatpush1.msra.mxu0 0.0
      %3713 = vmatprep.subr.mxu0 0.0
      %3714 = vmatpush1.msra.mxu0 0.0
      %3715 = vmatprep.subr.mxu0 0.0
      %3716 = vmatpush1.msra.mxu0 0.0
      %3717 = vmatprep.subr.mxu0 0.0
      %3718 = vmatpush1.msra.mxu0 0.0
      %3719 = vmatprep.subr.mxu0 0.0
      %3720 = vmatpush1.msra.mxu0 0.0
      %3721 = vmatprep.subr.mxu0 0.0
      %3722 = vmatpush1.msra.mxu0 0.0
      %3723 = vmatprep.subr.mxu0 0.0
      %3724 = vmatpush1.msra.mxu0 0.0
      %3725 = vmatprep.subr.mxu0 0.0
      %3726 = vmatpush1.msra.mxu0 0.0
      %3727 = vmatprep.subr.mxu0 0.0
      %3728 = vmatpush1.msra.mxu0 0.0
      %3729 = vmatprep.subr.mxu0 0.0
      %3730 = vmatpush1.msra.mxu0 0.0
      %3731 = vmatprep.subr.mxu0 %v3699
      %3732 = vmatpush1.msra.mxu0 %v3696
      %3733 = vmatprep.subr.mxu0 0.0
      %3734 = vmatpush2.msra.mxu0 0.0
      %3735 = vmatprep.subr.mxu0 0.0
      %3736 = vmatpush2.msra.mxu0 0.0
      %3737 = vmatprep.subr.mxu0 0.0
      %3738 = vmatpush2.msra.mxu0 0.0
      %3739 = vmatprep.subr.mxu0 0.0
      %3740 = vmatpush2.msra.mxu0 0.0
      %3741 = vmatprep.subr.mxu0 0.0
      %3742 = vmatpush2.msra.mxu0 0.0
      %3743 = vmatprep.subr.mxu0 0.0
      %3744 = vmatpush2.msra.mxu0 0.0
      %3745 = vmatprep.subr.mxu0 0.0
      %3746 = vmatpush2.msra.mxu0 0.0
      %3747 = vmatprep.subr.mxu0 0.0
      %3748 = vmatpush2.msra.mxu0 0.0
      %3749 = vmatprep.subr.mxu0 0.0
      %3750 = vmatpush2.msra.mxu0 0.0
      %3751 = vmatprep.subr.mxu0 0.0
      %3752 = vmatpush2.msra.mxu0 0.0
      %3753 = vmatprep.subr.mxu0 0.0
      %3754 = vmatpush2.msra.mxu0 0.0
      %3755 = vmatprep.subr.mxu0 0.0
      %3756 = vmatpush2.msra.mxu0 0.0
      %3757 = vmatprep.subr.mxu0 0.0
      %3758 = vmatpush2.msra.mxu0 0.0
      %3759 = vmatprep.subr.mxu0 0.0
      %3760 = vmatpush2.msra.mxu0 0.0
      %3761 = vmatprep.subr.mxu0 0.0
      %3762 = vmatpush2.msra.mxu0 0.0
      %3763 = vmatprep.subr.mxu0 0.0
      %3764 = vmatpush2.msra.mxu0 0.0
      %3765 = vmatprep.mubr.f32.mxu0 0.0
      %3766 = vmatmul.mubr.f32.gmra.mxu0 %v3432
      %v3767 = vpop.f32.mrf.mxu0
      %v3768 = vadd.f32 0.0, %v3767
      %v3769 = vpop.f32.mrf.mxu0
      %v3770 = vadd.f32 0.0, %v3769
      %3771 = vdwg.mxu0
      %v3772 = vadd.f32 %v3412, %v3768
      %v3773 = vadd.f32 %v3413, %v3770
      %3774 = vrot.lane.b32.xlu0 %v1274, 112
      %v3775 = vpop.permute.xlu0 %3774
      %3776 = vrot.lane.b32.xlu0 %v1275, 112
      %v3777 = vpop.permute.xlu0 %3776
      %vm3778 = vcmp.lt.s32.totalorder %v1617, 112
      %v3779 = vsel %vm3778, %v3775, %v3777
      %v3780 = vsel %vm3778, %v3777, %v3775
      %v3781 = vlaneseq
      %v3782 = vshrl.u32 %v3781, 7
      %v3783 = vsub.s32 7, %v3782
      %v3784 = vrot.slane %v1291, %v3783
      %v3785 = vlaneseq
      %v3786 = vshrl.u32 %v3785, 7
      %v3787 = vsub.s32 7, %v3786
      %v3788 = vrot.slane %v1292, %v3787
      %v3789 = vmul.f32 %v3779, %v3784
      %v3790 = vmul.f32 %v3780, %v3788
      %v3792 = vsel %vm381, %v1289, 0
      %v3795 = vsel %vm385, %v3789, 0
      %v3798 = vsel %vm385, %v3790, 0
      %3800 = vmatprep.subr.mxu0 0.0
      %3801 = vmatpush1.msra.mxu0 0.0
      %3802 = vmatprep.subr.mxu0 0.0
      %3803 = vmatpush1.msra.mxu0 0.0
      %3804 = vmatprep.subr.mxu0 0.0
      %3805 = vmatpush1.msra.mxu0 0.0
      %3806 = vmatprep.subr.mxu0 0.0
      %3807 = vmatpush1.msra.mxu0 0.0
      %3808 = vmatprep.subr.mxu0 0.0
      %3809 = vmatpush1.msra.mxu0 0.0
      %3810 = vmatprep.subr.mxu0 0.0
      %3811 = vmatpush1.msra.mxu0 0.0
      %3812 = vmatprep.subr.mxu0 0.0
      %3813 = vmatpush1.msra.mxu0 0.0
      %3814 = vmatprep.subr.mxu0 0.0
      %3815 = vmatpush1.msra.mxu0 0.0
      %3816 = vmatprep.subr.mxu0 0.0
      %3817 = vmatpush1.msra.mxu0 0.0
      %3818 = vmatprep.subr.mxu0 0.0
      %3819 = vmatpush1.msra.mxu0 0.0
      %3820 = vmatprep.subr.mxu0 0.0
      %3821 = vmatpush1.msra.mxu0 0.0
      %3822 = vmatprep.subr.mxu0 0.0
      %3823 = vmatpush1.msra.mxu0 0.0
      %3824 = vmatprep.subr.mxu0 0.0
      %3825 = vmatpush1.msra.mxu0 0.0
      %3826 = vmatprep.subr.mxu0 0.0
      %3827 = vmatpush1.msra.mxu0 0.0
      %3828 = vmatprep.subr.mxu0 0.0
      %3829 = vmatpush1.msra.mxu0 0.0
      %3830 = vmatprep.subr.mxu0 %v3798
      %3831 = vmatpush1.msra.mxu0 %v3795
      %3832 = vmatprep.subr.mxu0 0.0
      %3833 = vmatpush2.msra.mxu0 0.0
      %3834 = vmatprep.subr.mxu0 0.0
      %3835 = vmatpush2.msra.mxu0 0.0
      %3836 = vmatprep.subr.mxu0 0.0
      %3837 = vmatpush2.msra.mxu0 0.0
      %3838 = vmatprep.subr.mxu0 0.0
      %3839 = vmatpush2.msra.mxu0 0.0
      %3840 = vmatprep.subr.mxu0 0.0
      %3841 = vmatpush2.msra.mxu0 0.0
      %3842 = vmatprep.subr.mxu0 0.0
      %3843 = vmatpush2.msra.mxu0 0.0
      %3844 = vmatprep.subr.mxu0 0.0
      %3845 = vmatpush2.msra.mxu0 0.0
      %3846 = vmatprep.subr.mxu0 0.0
      %3847 = vmatpush2.msra.mxu0 0.0
      %3848 = vmatprep.subr.mxu0 0.0
      %3849 = vmatpush2.msra.mxu0 0.0
      %3850 = vmatprep.subr.mxu0 0.0
      %3851 = vmatpush2.msra.mxu0 0.0
      %3852 = vmatprep.subr.mxu0 0.0
      %3853 = vmatpush2.msra.mxu0 0.0
      %3854 = vmatprep.subr.mxu0 0.0
      %3855 = vmatpush2.msra.mxu0 0.0
      %3856 = vmatprep.subr.mxu0 0.0
      %3857 = vmatpush2.msra.mxu0 0.0
      %3858 = vmatprep.subr.mxu0 0.0
      %3859 = vmatpush2.msra.mxu0 0.0
      %3860 = vmatprep.subr.mxu0 0.0
      %3861 = vmatpush2.msra.mxu0 0.0
      %3862 = vmatprep.subr.mxu0 0.0
      %3863 = vmatpush2.msra.mxu0 0.0
      %3864 = vmatprep.mubr.f32.mxu0 0.0
      %3865 = vmatmul.mubr.f32.gmra.mxu0 %v3792
      %v3866 = vpop.f32.mrf.mxu0
      %v3867 = vadd.f32 0.0, %v3866
      %v3868 = vpop.f32.mrf.mxu0
      %v3869 = vadd.f32 0.0, %v3868
      %3870 = vdwg.mxu0
      %v3871 = vadd.f32 %v3511, %v3867
      %v3872 = vadd.f32 %v3512, %v3869
      %3873 = vrot.lane.b32.xlu0 %v1276, 112
      %v3874 = vpop.permute.xlu0 %3873
      %3875 = vrot.lane.b32.xlu0 %v1277, 112
      %v3876 = vpop.permute.xlu0 %3875
      %v3877 = vsel %vm3778, %v3874, %v3876
      %v3878 = vsel %vm3778, %v3876, %v3874
      %v3879 = vmul.f32 %v3877, %v3784
      %v3880 = vmul.f32 %v3878, %v3788
      %v3882 = vsel %vm385, %v3879, 0
      %v3885 = vsel %vm385, %v3880, 0
      %3887 = vmatprep.subr.mxu0 0.0
      %3888 = vmatpush1.msra.mxu0 0.0
      %3889 = vmatprep.subr.mxu0 0.0
      %3890 = vmatpush1.msra.mxu0 0.0
      %3891 = vmatprep.subr.mxu0 0.0
      %3892 = vmatpush1.msra.mxu0 0.0
      %3893 = vmatprep.subr.mxu0 0.0
      %3894 = vmatpush1.msra.mxu0 0.0
      %3895 = vmatprep.subr.mxu0 0.0
      %3896 = vmatpush1.msra.mxu0 0.0
      %3897 = vmatprep.subr.mxu0 0.0
      %3898 = vmatpush1.msra.mxu0 0.0
      %3899 = vmatprep.subr.mxu0 0.0
      %3900 = vmatpush1.msra.mxu0 0.0
      %3901 = vmatprep.subr.mxu0 0.0
      %3902 = vmatpush1.msra.mxu0 0.0
      %3903 = vmatprep.subr.mxu0 0.0
      %3904 = vmatpush1.msra.mxu0 0.0
      %3905 = vmatprep.subr.mxu0 0.0
      %3906 = vmatpush1.msra.mxu0 0.0
      %3907 = vmatprep.subr.mxu0 0.0
      %3908 = vmatpush1.msra.mxu0 0.0
      %3909 = vmatprep.subr.mxu0 0.0
      %3910 = vmatpush1.msra.mxu0 0.0
      %3911 = vmatprep.subr.mxu0 0.0
      %3912 = vmatpush1.msra.mxu0 0.0
      %3913 = vmatprep.subr.mxu0 0.0
      %3914 = vmatpush1.msra.mxu0 0.0
      %3915 = vmatprep.subr.mxu0 0.0
      %3916 = vmatpush1.msra.mxu0 0.0
      %3917 = vmatprep.subr.mxu0 %v3885
      %3918 = vmatpush1.msra.mxu0 %v3882
      %3919 = vmatprep.subr.mxu0 0.0
      %3920 = vmatpush2.msra.mxu0 0.0
      %3921 = vmatprep.subr.mxu0 0.0
      %3922 = vmatpush2.msra.mxu0 0.0
      %3923 = vmatprep.subr.mxu0 0.0
      %3924 = vmatpush2.msra.mxu0 0.0
      %3925 = vmatprep.subr.mxu0 0.0
      %3926 = vmatpush2.msra.mxu0 0.0
      %3927 = vmatprep.subr.mxu0 0.0
      %3928 = vmatpush2.msra.mxu0 0.0
      %3929 = vmatprep.subr.mxu0 0.0
      %3930 = vmatpush2.msra.mxu0 0.0
      %3931 = vmatprep.subr.mxu0 0.0
      %3932 = vmatpush2.msra.mxu0 0.0
      %3933 = vmatprep.subr.mxu0 0.0
      %3934 = vmatpush2.msra.mxu0 0.0
      %3935 = vmatprep.subr.mxu0 0.0
      %3936 = vmatpush2.msra.mxu0 0.0
      %3937 = vmatprep.subr.mxu0 0.0
      %3938 = vmatpush2.msra.mxu0 0.0
      %3939 = vmatprep.subr.mxu0 0.0
      %3940 = vmatpush2.msra.mxu0 0.0
      %3941 = vmatprep.subr.mxu0 0.0
      %3942 = vmatpush2.msra.mxu0 0.0
      %3943 = vmatprep.subr.mxu0 0.0
      %3944 = vmatpush2.msra.mxu0 0.0
      %3945 = vmatprep.subr.mxu0 0.0
      %3946 = vmatpush2.msra.mxu0 0.0
      %3947 = vmatprep.subr.mxu0 0.0
      %3948 = vmatpush2.msra.mxu0 0.0
      %3949 = vmatprep.subr.mxu0 0.0
      %3950 = vmatpush2.msra.mxu0 0.0
      %3951 = vmatprep.mubr.f32.mxu0 0.0
      %3952 = vmatmul.mubr.f32.gmra.mxu0 %v3792
      %v3953 = vpop.f32.mrf.mxu0
      %v3954 = vadd.f32 0.0, %v3953
      %v3955 = vpop.f32.mrf.mxu0
      %v3956 = vadd.f32 0.0, %v3955
      %3957 = vdwg.mxu0
      %v3958 = vadd.f32 %v3598, %v3954
      %v3959 = vadd.f32 %v3599, %v3956
      %3960 = vrot.lane.b32.xlu0 %v1278, 112
      %v3961 = vpop.permute.xlu0 %3960
      %3962 = vrot.lane.b32.xlu0 %v1279, 112
      %v3963 = vpop.permute.xlu0 %3962
      %v3964 = vsel %vm3778, %v3961, %v3963
      %v3965 = vsel %vm3778, %v3963, %v3961
      %v3966 = vmul.f32 %v3964, %v3784
      %v3967 = vmul.f32 %v3965, %v3788
      %v3969 = vsel %vm385, %v3966, 0
      %v3972 = vsel %vm385, %v3967, 0
      %3974 = vmatprep.subr.mxu0 0.0
      %3975 = vmatpush1.msra.mxu0 0.0
      %3976 = vmatprep.subr.mxu0 0.0
      %3977 = vmatpush1.msra.mxu0 0.0
      %3978 = vmatprep.subr.mxu0 0.0
      %3979 = vmatpush1.msra.mxu0 0.0
      %3980 = vmatprep.subr.mxu0 0.0
      %3981 = vmatpush1.msra.mxu0 0.0
      %3982 = vmatprep.subr.mxu0 0.0
      %3983 = vmatpush1.msra.mxu0 0.0
      %3984 = vmatprep.subr.mxu0 0.0
      %3985 = vmatpush1.msra.mxu0 0.0
      %3986 = vmatprep.subr.mxu0 0.0
      %3987 = vmatpush1.msra.mxu0 0.0
      %3988 = vmatprep.subr.mxu0 0.0
      %3989 = vmatpush1.msra.mxu0 0.0
      %3990 = vmatprep.subr.mxu0 0.0
      %3991 = vmatpush1.msra.mxu0 0.0
      %3992 = vmatprep.subr.mxu0 0.0
      %3993 = vmatpush1.msra.mxu0 0.0
      %3994 = vmatprep.subr.mxu0 0.0
      %3995 = vmatpush1.msra.mxu0 0.0
      %3996 = vmatprep.subr.mxu0 0.0
      %3997 = vmatpush1.msra.mxu0 0.0
      %3998 = vmatprep.subr.mxu0 0.0
      %3999 = vmatpush1.msra.mxu0 0.0
      %4000 = vmatprep.subr.mxu0 0.0
      %4001 = vmatpush1.msra.mxu0 0.0
      %4002 = vmatprep.subr.mxu0 0.0
      %4003 = vmatpush1.msra.mxu0 0.0
      %4004 = vmatprep.subr.mxu0 %v3972
      %4005 = vmatpush1.msra.mxu0 %v3969
      %4006 = vmatprep.subr.mxu0 0.0
      %4007 = vmatpush2.msra.mxu0 0.0
      %4008 = vmatprep.subr.mxu0 0.0
      %4009 = vmatpush2.msra.mxu0 0.0
      %4010 = vmatprep.subr.mxu0 0.0
      %4011 = vmatpush2.msra.mxu0 0.0
      %4012 = vmatprep.subr.mxu0 0.0
      %4013 = vmatpush2.msra.mxu0 0.0
      %4014 = vmatprep.subr.mxu0 0.0
      %4015 = vmatpush2.msra.mxu0 0.0
      %4016 = vmatprep.subr.mxu0 0.0
      %4017 = vmatpush2.msra.mxu0 0.0
      %4018 = vmatprep.subr.mxu0 0.0
      %4019 = vmatpush2.msra.mxu0 0.0
      %4020 = vmatprep.subr.mxu0 0.0
      %4021 = vmatpush2.msra.mxu0 0.0
      %4022 = vmatprep.subr.mxu0 0.0
      %4023 = vmatpush2.msra.mxu0 0.0
      %4024 = vmatprep.subr.mxu0 0.0
      %4025 = vmatpush2.msra.mxu0 0.0
      %4026 = vmatprep.subr.mxu0 0.0
      %4027 = vmatpush2.msra.mxu0 0.0
      %4028 = vmatprep.subr.mxu0 0.0
      %4029 = vmatpush2.msra.mxu0 0.0
      %4030 = vmatprep.subr.mxu0 0.0
      %4031 = vmatpush2.msra.mxu0 0.0
      %4032 = vmatprep.subr.mxu0 0.0
      %4033 = vmatpush2.msra.mxu0 0.0
      %4034 = vmatprep.subr.mxu0 0.0
      %4035 = vmatpush2.msra.mxu0 0.0
      %4036 = vmatprep.subr.mxu0 0.0
      %4037 = vmatpush2.msra.mxu0 0.0
      %4038 = vmatprep.mubr.f32.mxu0 0.0
      %4039 = vmatmul.mubr.f32.gmra.mxu0 %v3792
      %v4040 = vpop.f32.mrf.mxu0
      %v4041 = vadd.f32 0.0, %v4040
      %v4042 = vpop.f32.mrf.mxu0
      %v4043 = vadd.f32 0.0, %v4042
      %4044 = vdwg.mxu0
      %v4045 = vadd.f32 %v3685, %v4041
      %v4046 = vadd.f32 %v3686, %v4043
      %4047 = vrot.lane.b32.xlu0 %v1280, 112
      %v4048 = vpop.permute.xlu0 %4047
      %4049 = vrot.lane.b32.xlu0 %v1281, 112
      %v4050 = vpop.permute.xlu0 %4049
      %v4051 = vsel %vm3778, %v4048, %v4050
      %v4052 = vsel %vm3778, %v4050, %v4048
      %v4053 = vmul.f32 %v4051, %v3784
      %v4054 = vmul.f32 %v4052, %v3788
      %v4056 = vsel %vm385, %v4053, 0
      %v4059 = vsel %vm385, %v4054, 0
      %4061 = vmatprep.subr.mxu0 0.0
      %4062 = vmatpush1.msra.mxu0 0.0
      %4063 = vmatprep.subr.mxu0 0.0
      %4064 = vmatpush1.msra.mxu0 0.0
      %4065 = vmatprep.subr.mxu0 0.0
      %4066 = vmatpush1.msra.mxu0 0.0
      %4067 = vmatprep.subr.mxu0 0.0
      %4068 = vmatpush1.msra.mxu0 0.0
      %4069 = vmatprep.subr.mxu0 0.0
      %4070 = vmatpush1.msra.mxu0 0.0
      %4071 = vmatprep.subr.mxu0 0.0
      %4072 = vmatpush1.msra.mxu0 0.0
      %4073 = vmatprep.subr.mxu0 0.0
      %4074 = vmatpush1.msra.mxu0 0.0
      %4075 = vmatprep.subr.mxu0 0.0
      %4076 = vmatpush1.msra.mxu0 0.0
      %4077 = vmatprep.subr.mxu0 0.0
      %4078 = vmatpush1.msra.mxu0 0.0
      %4079 = vmatprep.subr.mxu0 0.0
      %4080 = vmatpush1.msra.mxu0 0.0
      %4081 = vmatprep.subr.mxu0 0.0
      %4082 = vmatpush1.msra.mxu0 0.0
      %4083 = vmatprep.subr.mxu0 0.0
      %4084 = vmatpush1.msra.mxu0 0.0
      %4085 = vmatprep.subr.mxu0 0.0
      %4086 = vmatpush1.msra.mxu0 0.0
      %4087 = vmatprep.subr.mxu0 0.0
      %4088 = vmatpush1.msra.mxu0 0.0
      %4089 = vmatprep.subr.mxu0 0.0
      %4090 = vmatpush1.msra.mxu0 0.0
      %4091 = vmatprep.subr.mxu0 %v4059
      %4092 = vmatpush1.msra.mxu0 %v4056
      %4093 = vmatprep.subr.mxu0 0.0
      %4094 = vmatpush2.msra.mxu0 0.0
      %4095 = vmatprep.subr.mxu0 0.0
      %4096 = vmatpush2.msra.mxu0 0.0
      %4097 = vmatprep.subr.mxu0 0.0
      %4098 = vmatpush2.msra.mxu0 0.0
      %4099 = vmatprep.subr.mxu0 0.0
      %4100 = vmatpush2.msra.mxu0 0.0
      %4101 = vmatprep.subr.mxu0 0.0
      %4102 = vmatpush2.msra.mxu0 0.0
      %4103 = vmatprep.subr.mxu0 0.0
      %4104 = vmatpush2.msra.mxu0 0.0
      %4105 = vmatprep.subr.mxu0 0.0
      %4106 = vmatpush2.msra.mxu0 0.0
      %4107 = vmatprep.subr.mxu0 0.0
      %4108 = vmatpush2.msra.mxu0 0.0
      %4109 = vmatprep.subr.mxu0 0.0
      %4110 = vmatpush2.msra.mxu0 0.0
      %4111 = vmatprep.subr.mxu0 0.0
      %4112 = vmatpush2.msra.mxu0 0.0
      %4113 = vmatprep.subr.mxu0 0.0
      %4114 = vmatpush2.msra.mxu0 0.0
      %4115 = vmatprep.subr.mxu0 0.0
      %4116 = vmatpush2.msra.mxu0 0.0
      %4117 = vmatprep.subr.mxu0 0.0
      %4118 = vmatpush2.msra.mxu0 0.0
      %4119 = vmatprep.subr.mxu0 0.0
      %4120 = vmatpush2.msra.mxu0 0.0
      %4121 = vmatprep.subr.mxu0 0.0
      %4122 = vmatpush2.msra.mxu0 0.0
      %4123 = vmatprep.subr.mxu0 0.0
      %4124 = vmatpush2.msra.mxu0 0.0
      %4125 = vmatprep.mubr.f32.mxu0 0.0
      %4126 = vmatmul.mubr.f32.gmra.mxu0 %v3792
      %v4127 = vpop.f32.mrf.mxu0
      %v4128 = vadd.f32 0.0, %v4127
      %v4129 = vpop.f32.mrf.mxu0
      %v4130 = vadd.f32 0.0, %v4129
      %4131 = vdwg.mxu0
      %v4132 = vadd.f32 %v3772, %v4128
      %v4133 = vadd.f32 %v3773, %v4130
      %4134 = vrot.lane.b32.xlu0 %v1274, 111
      %v4135 = vpop.permute.xlu0 %4134
      %4136 = vrot.lane.b32.xlu0 %v1275, 111
      %v4137 = vpop.permute.xlu0 %4136
      %vm4138 = vcmp.lt.s32.totalorder %v1617, 111
      %v4139 = vsel %vm4138, %v4135, %v4137
      %v4140 = vsel %vm4138, %v4137, %v4135
      %v4141 = vlaneseq
      %v4142 = vshrl.u32 %v4141, 7
      %v4143 = vsub.s32 0, %v4142
      %v4144 = vrot.slane %v1293, %v4143
      %v4145 = vlaneseq
      %v4146 = vshrl.u32 %v4145, 7
      %v4147 = vsub.s32 0, %v4146
      %v4148 = vrot.slane %v1294, %v4147
      %v4149 = vmul.f32 %v4139, %v4144
      %v4150 = vmul.f32 %v4140, %v4148
      %v4152 = vsel %vm381, %v1290, 0
      %v4155 = vsel %vm385, %v4149, 0
      %v4158 = vsel %vm385, %v4150, 0
      %4160 = vmatprep.subr.mxu0 0.0
      %4161 = vmatpush1.msra.mxu0 0.0
      %4162 = vmatprep.subr.mxu0 0.0
      %4163 = vmatpush1.msra.mxu0 0.0
      %4164 = vmatprep.subr.mxu0 0.0
      %4165 = vmatpush1.msra.mxu0 0.0
      %4166 = vmatprep.subr.mxu0 0.0
      %4167 = vmatpush1.msra.mxu0 0.0
      %4168 = vmatprep.subr.mxu0 0.0
      %4169 = vmatpush1.msra.mxu0 0.0
      %4170 = vmatprep.subr.mxu0 0.0
      %4171 = vmatpush1.msra.mxu0 0.0
      %4172 = vmatprep.subr.mxu0 0.0
      %4173 = vmatpush1.msra.mxu0 0.0
      %4174 = vmatprep.subr.mxu0 0.0
      %4175 = vmatpush1.msra.mxu0 0.0
      %4176 = vmatprep.subr.mxu0 0.0
      %4177 = vmatpush1.msra.mxu0 0.0
      %4178 = vmatprep.subr.mxu0 0.0
      %4179 = vmatpush1.msra.mxu0 0.0
      %4180 = vmatprep.subr.mxu0 0.0
      %4181 = vmatpush1.msra.mxu0 0.0
      %4182 = vmatprep.subr.mxu0 0.0
      %4183 = vmatpush1.msra.mxu0 0.0
      %4184 = vmatprep.subr.mxu0 0.0
      %4185 = vmatpush1.msra.mxu0 0.0
      %4186 = vmatprep.subr.mxu0 0.0
      %4187 = vmatpush1.msra.mxu0 0.0
      %4188 = vmatprep.subr.mxu0 0.0
      %4189 = vmatpush1.msra.mxu0 0.0
      %4190 = vmatprep.subr.mxu0 %v4158
      %4191 = vmatpush1.msra.mxu0 %v4155
      %4192 = vmatprep.subr.mxu0 0.0
      %4193 = vmatpush2.msra.mxu0 0.0
      %4194 = vmatprep.subr.mxu0 0.0
      %4195 = vmatpush2.msra.mxu0 0.0
      %4196 = vmatprep.subr.mxu0 0.0
      %4197 = vmatpush2.msra.mxu0 0.0
      %4198 = vmatprep.subr.mxu0 0.0
      %4199 = vmatpush2.msra.mxu0 0.0
      %4200 = vmatprep.subr.mxu0 0.0
      %4201 = vmatpush2.msra.mxu0 0.0
      %4202 = vmatprep.subr.mxu0 0.0
      %4203 = vmatpush2.msra.mxu0 0.0
      %4204 = vmatprep.subr.mxu0 0.0
      %4205 = vmatpush2.msra.mxu0 0.0
      %4206 = vmatprep.subr.mxu0 0.0
      %4207 = vmatpush2.msra.mxu0 0.0
      %4208 = vmatprep.subr.mxu0 0.0
      %4209 = vmatpush2.msra.mxu0 0.0
      %4210 = vmatprep.subr.mxu0 0.0
      %4211 = vmatpush2.msra.mxu0 0.0
      %4212 = vmatprep.subr.mxu0 0.0
      %4213 = vmatpush2.msra.mxu0 0.0
      %4214 = vmatprep.subr.mxu0 0.0
      %4215 = vmatpush2.msra.mxu0 0.0
      %4216 = vmatprep.subr.mxu0 0.0
      %4217 = vmatpush2.msra.mxu0 0.0
      %4218 = vmatprep.subr.mxu0 0.0
      %4219 = vmatpush2.msra.mxu0 0.0
      %4220 = vmatprep.subr.mxu0 0.0
      %4221 = vmatpush2.msra.mxu0 0.0
      %4222 = vmatprep.subr.mxu0 0.0
      %4223 = vmatpush2.msra.mxu0 0.0
      %4224 = vmatprep.mubr.f32.mxu0 0.0
      %4225 = vmatmul.mubr.f32.gmra.mxu0 %v4152
      %v4226 = vpop.f32.mrf.mxu0
      %v4227 = vadd.f32 0.0, %v4226
      %v4228 = vpop.f32.mrf.mxu0
      %v4229 = vadd.f32 0.0, %v4228
      %4230 = vdwg.mxu0
      %v4231 = vadd.f32 %v3871, %v4227
      %v4232 = vadd.f32 %v3872, %v4229
      %4233 = vrot.lane.b32.xlu0 %v1276, 111
      %v4234 = vpop.permute.xlu0 %4233
      %4235 = vrot.lane.b32.xlu0 %v1277, 111
      %v4236 = vpop.permute.xlu0 %4235
      %v4237 = vsel %vm4138, %v4234, %v4236
      %v4238 = vsel %vm4138, %v4236, %v4234
      %v4239 = vmul.f32 %v4237, %v4144
      %v4240 = vmul.f32 %v4238, %v4148
      %v4242 = vsel %vm385, %v4239, 0
      %v4245 = vsel %vm385, %v4240, 0
      %4247 = vmatprep.subr.mxu0 0.0
      %4248 = vmatpush1.msra.mxu0 0.0
      %4249 = vmatprep.subr.mxu0 0.0
      %4250 = vmatpush1.msra.mxu0 0.0
      %4251 = vmatprep.subr.mxu0 0.0
      %4252 = vmatpush1.msra.mxu0 0.0
      %4253 = vmatprep.subr.mxu0 0.0
      %4254 = vmatpush1.msra.mxu0 0.0
      %4255 = vmatprep.subr.mxu0 0.0
      %4256 = vmatpush1.msra.mxu0 0.0
      %4257 = vmatprep.subr.mxu0 0.0
      %4258 = vmatpush1.msra.mxu0 0.0
      %4259 = vmatprep.subr.mxu0 0.0
      %4260 = vmatpush1.msra.mxu0 0.0
      %4261 = vmatprep.subr.mxu0 0.0
      %4262 = vmatpush1.msra.mxu0 0.0
      %4263 = vmatprep.subr.mxu0 0.0
      %4264 = vmatpush1.msra.mxu0 0.0
      %4265 = vmatprep.subr.mxu0 0.0
      %4266 = vmatpush1.msra.mxu0 0.0
      %4267 = vmatprep.subr.mxu0 0.0
      %4268 = vmatpush1.msra.mxu0 0.0
      %4269 = vmatprep.subr.mxu0 0.0
      %4270 = vmatpush1.msra.mxu0 0.0
      %4271 = vmatprep.subr.mxu0 0.0
      %4272 = vmatpush1.msra.mxu0 0.0
      %4273 = vmatprep.subr.mxu0 0.0
      %4274 = vmatpush1.msra.mxu0 0.0
      %4275 = vmatprep.subr.mxu0 0.0
      %4276 = vmatpush1.msra.mxu0 0.0
      %4277 = vmatprep.subr.mxu0 %v4245
      %4278 = vmatpush1.msra.mxu0 %v4242
      %4279 = vmatprep.subr.mxu0 0.0
      %4280 = vmatpush2.msra.mxu0 0.0
      %4281 = vmatprep.subr.mxu0 0.0
      %4282 = vmatpush2.msra.mxu0 0.0
      %4283 = vmatprep.subr.mxu0 0.0
      %4284 = vmatpush2.msra.mxu0 0.0
      %4285 = vmatprep.subr.mxu0 0.0
      %4286 = vmatpush2.msra.mxu0 0.0
      %4287 = vmatprep.subr.mxu0 0.0
      %4288 = vmatpush2.msra.mxu0 0.0
      %4289 = vmatprep.subr.mxu0 0.0
      %4290 = vmatpush2.msra.mxu0 0.0
      %4291 = vmatprep.subr.mxu0 0.0
      %4292 = vmatpush2.msra.mxu0 0.0
      %4293 = vmatprep.subr.mxu0 0.0
      %4294 = vmatpush2.msra.mxu0 0.0
      %4295 = vmatprep.subr.mxu0 0.0
      %4296 = vmatpush2.msra.mxu0 0.0
      %4297 = vmatprep.subr.mxu0 0.0
      %4298 = vmatpush2.msra.mxu0 0.0
      %4299 = vmatprep.subr.mxu0 0.0
      %4300 = vmatpush2.msra.mxu0 0.0
      %4301 = vmatprep.subr.mxu0 0.0
      %4302 = vmatpush2.msra.mxu0 0.0
      %4303 = vmatprep.subr.mxu0 0.0
      %4304 = vmatpush2.msra.mxu0 0.0
      %4305 = vmatprep.subr.mxu0 0.0
      %4306 = vmatpush2.msra.mxu0 0.0
      %4307 = vmatprep.subr.mxu0 0.0
      %4308 = vmatpush2.msra.mxu0 0.0
      %4309 = vmatprep.subr.mxu0 0.0
      %4310 = vmatpush2.msra.mxu0 0.0
      %4311 = vmatprep.mubr.f32.mxu0 0.0
      %4312 = vmatmul.mubr.f32.gmra.mxu0 %v4152
      %v4313 = vpop.f32.mrf.mxu0
      %v4314 = vadd.f32 0.0, %v4313
      %v4315 = vpop.f32.mrf.mxu0
      %v4316 = vadd.f32 0.0, %v4315
      %4317 = vdwg.mxu0
      %v4318 = vadd.f32 %v3958, %v4314
      %v4319 = vadd.f32 %v3959, %v4316
      %4320 = vrot.lane.b32.xlu0 %v1278, 111
      %v4321 = vpop.permute.xlu0 %4320
      %4322 = vrot.lane.b32.xlu0 %v1279, 111
      %v4323 = vpop.permute.xlu0 %4322
      %v4324 = vsel %vm4138, %v4321, %v4323
      %v4325 = vsel %vm4138, %v4323, %v4321
      %v4326 = vmul.f32 %v4324, %v4144
      %v4327 = vmul.f32 %v4325, %v4148
      %v4329 = vsel %vm385, %v4326, 0
      %v4332 = vsel %vm385, %v4327, 0
      %4334 = vmatprep.subr.mxu0 0.0
      %4335 = vmatpush1.msra.mxu0 0.0
      %4336 = vmatprep.subr.mxu0 0.0
      %4337 = vmatpush1.msra.mxu0 0.0
      %4338 = vmatprep.subr.mxu0 0.0
      %4339 = vmatpush1.msra.mxu0 0.0
      %4340 = vmatprep.subr.mxu0 0.0
      %4341 = vmatpush1.msra.mxu0 0.0
      %4342 = vmatprep.subr.mxu0 0.0
      %4343 = vmatpush1.msra.mxu0 0.0
      %4344 = vmatprep.subr.mxu0 0.0
      %4345 = vmatpush1.msra.mxu0 0.0
      %4346 = vmatprep.subr.mxu0 0.0
      %4347 = vmatpush1.msra.mxu0 0.0
      %4348 = vmatprep.subr.mxu0 0.0
      %4349 = vmatpush1.msra.mxu0 0.0
      %4350 = vmatprep.subr.mxu0 0.0
      %4351 = vmatpush1.msra.mxu0 0.0
      %4352 = vmatprep.subr.mxu0 0.0
      %4353 = vmatpush1.msra.mxu0 0.0
      %4354 = vmatprep.subr.mxu0 0.0
      %4355 = vmatpush1.msra.mxu0 0.0
      %4356 = vmatprep.subr.mxu0 0.0
      %4357 = vmatpush1.msra.mxu0 0.0
      %4358 = vmatprep.subr.mxu0 0.0
      %4359 = vmatpush1.msra.mxu0 0.0
      %4360 = vmatprep.subr.mxu0 0.0
      %4361 = vmatpush1.msra.mxu0 0.0
      %4362 = vmatprep.subr.mxu0 0.0
      %4363 = vmatpush1.msra.mxu0 0.0
      %4364 = vmatprep.subr.mxu0 %v4332
      %4365 = vmatpush1.msra.mxu0 %v4329
      %4366 = vmatprep.subr.mxu0 0.0
      %4367 = vmatpush2.msra.mxu0 0.0
      %4368 = vmatprep.subr.mxu0 0.0
      %4369 = vmatpush2.msra.mxu0 0.0
      %4370 = vmatprep.subr.mxu0 0.0
      %4371 = vmatpush2.msra.mxu0 0.0
      %4372 = vmatprep.subr.mxu0 0.0
      %4373 = vmatpush2.msra.mxu0 0.0
      %4374 = vmatprep.subr.mxu0 0.0
      %4375 = vmatpush2.msra.mxu0 0.0
      %4376 = vmatprep.subr.mxu0 0.0
      %4377 = vmatpush2.msra.mxu0 0.0
      %4378 = vmatprep.subr.mxu0 0.0
      %4379 = vmatpush2.msra.mxu0 0.0
      %4380 = vmatprep.subr.mxu0 0.0
      %4381 = vmatpush2.msra.mxu0 0.0
      %4382 = vmatprep.subr.mxu0 0.0
      %4383 = vmatpush2.msra.mxu0 0.0
      %4384 = vmatprep.subr.mxu0 0.0
      %4385 = vmatpush2.msra.mxu0 0.0
      %4386 = vmatprep.subr.mxu0 0.0
      %4387 = vmatpush2.msra.mxu0 0.0
      %4388 = vmatprep.subr.mxu0 0.0
      %4389 = vmatpush2.msra.mxu0 0.0
      %4390 = vmatprep.subr.mxu0 0.0
      %4391 = vmatpush2.msra.mxu0 0.0
      %4392 = vmatprep.subr.mxu0 0.0
      %4393 = vmatpush2.msra.mxu0 0.0
      %4394 = vmatprep.subr.mxu0 0.0
      %4395 = vmatpush2.msra.mxu0 0.0
      %4396 = vmatprep.subr.mxu0 0.0
      %4397 = vmatpush2.msra.mxu0 0.0
      %4398 = vmatprep.mubr.f32.mxu0 0.0
      %4399 = vmatmul.mubr.f32.gmra.mxu0 %v4152
      %v4400 = vpop.f32.mrf.mxu0
      %v4401 = vadd.f32 0.0, %v4400
      %v4402 = vpop.f32.mrf.mxu0
      %v4403 = vadd.f32 0.0, %v4402
      %4404 = vdwg.mxu0
      %v4405 = vadd.f32 %v4045, %v4401
      %v4406 = vadd.f32 %v4046, %v4403
      %4407 = vrot.lane.b32.xlu0 %v1280, 111
      %v4408 = vpop.permute.xlu0 %4407
      %4409 = vrot.lane.b32.xlu0 %v1281, 111
      %v4410 = vpop.permute.xlu0 %4409
      %v4411 = vsel %vm4138, %v4408, %v4410
      %v4412 = vsel %vm4138, %v4410, %v4408
      %v4413 = vmul.f32 %v4411, %v4144
      %v4414 = vmul.f32 %v4412, %v4148
      %v4416 = vsel %vm385, %v4413, 0
      %v4419 = vsel %vm385, %v4414, 0
      %4421 = vmatprep.subr.mxu0 0.0
      %4422 = vmatpush1.msra.mxu0 0.0
      %4423 = vmatprep.subr.mxu0 0.0
      %4424 = vmatpush1.msra.mxu0 0.0
      %4425 = vmatprep.subr.mxu0 0.0
      %4426 = vmatpush1.msra.mxu0 0.0
      %4427 = vmatprep.subr.mxu0 0.0
      %4428 = vmatpush1.msra.mxu0 0.0
      %4429 = vmatprep.subr.mxu0 0.0
      %4430 = vmatpush1.msra.mxu0 0.0
      %4431 = vmatprep.subr.mxu0 0.0
      %4432 = vmatpush1.msra.mxu0 0.0
      %4433 = vmatprep.subr.mxu0 0.0
      %4434 = vmatpush1.msra.mxu0 0.0
      %4435 = vmatprep.subr.mxu0 0.0
      %4436 = vmatpush1.msra.mxu0 0.0
      %4437 = vmatprep.subr.mxu0 0.0
      %4438 = vmatpush1.msra.mxu0 0.0
      %4439 = vmatprep.subr.mxu0 0.0
      %4440 = vmatpush1.msra.mxu0 0.0
      %4441 = vmatprep.subr.mxu0 0.0
      %4442 = vmatpush1.msra.mxu0 0.0
      %4443 = vmatprep.subr.mxu0 0.0
      %4444 = vmatpush1.msra.mxu0 0.0
      %4445 = vmatprep.subr.mxu0 0.0
      %4446 = vmatpush1.msra.mxu0 0.0
      %4447 = vmatprep.subr.mxu0 0.0
      %4448 = vmatpush1.msra.mxu0 0.0
      %4449 = vmatprep.subr.mxu0 0.0
      %4450 = vmatpush1.msra.mxu0 0.0
      %4451 = vmatprep.subr.mxu0 %v4419
      %4452 = vmatpush1.msra.mxu0 %v4416
      %4453 = vmatprep.subr.mxu0 0.0
      %4454 = vmatpush2.msra.mxu0 0.0
      %4455 = vmatprep.subr.mxu0 0.0
      %4456 = vmatpush2.msra.mxu0 0.0
      %4457 = vmatprep.subr.mxu0 0.0
      %4458 = vmatpush2.msra.mxu0 0.0
      %4459 = vmatprep.subr.mxu0 0.0
      %4460 = vmatpush2.msra.mxu0 0.0
      %4461 = vmatprep.subr.mxu0 0.0
      %4462 = vmatpush2.msra.mxu0 0.0
      %4463 = vmatprep.subr.mxu0 0.0
      %4464 = vmatpush2.msra.mxu0 0.0
      %4465 = vmatprep.subr.mxu0 0.0
      %4466 = vmatpush2.msra.mxu0 0.0
      %4467 = vmatprep.subr.mxu0 0.0
      %4468 = vmatpush2.msra.mxu0 0.0
      %4469 = vmatprep.subr.mxu0 0.0
      %4470 = vmatpush2.msra.mxu0 0.0
      %4471 = vmatprep.subr.mxu0 0.0
      %4472 = vmatpush2.msra.mxu0 0.0
      %4473 = vmatprep.subr.mxu0 0.0
      %4474 = vmatpush2.msra.mxu0 0.0
      %4475 = vmatprep.subr.mxu0 0.0
      %4476 = vmatpush2.msra.mxu0 0.0
      %4477 = vmatprep.subr.mxu0 0.0
      %4478 = vmatpush2.msra.mxu0 0.0
      %4479 = vmatprep.subr.mxu0 0.0
      %4480 = vmatpush2.msra.mxu0 0.0
      %4481 = vmatprep.subr.mxu0 0.0
      %4482 = vmatpush2.msra.mxu0 0.0
      %4483 = vmatprep.subr.mxu0 0.0
      %4484 = vmatpush2.msra.mxu0 0.0
      %4485 = vmatprep.mubr.f32.mxu0 0.0
      %4486 = vmatmul.mubr.f32.gmra.mxu0 %v4152
      %v4487 = vpop.f32.mrf.mxu0
      %v4488 = vadd.f32 0.0, %v4487
      %v4489 = vpop.f32.mrf.mxu0
      %v4490 = vadd.f32 0.0, %v4489
      %4491 = vdwg.mxu0
      %v4492 = vadd.f32 %v4132, %v4488
      %v4493 = vadd.f32 %v4133, %v4490
      %v4494 = vsel %vm385, %v4231, 0.0
      %v4495 = vsel %vm385, %v4232, 0.0
      %v4496 = vadd.f32 %v4494, %v4495
      %4497 = vadd.xlane.f32.xlu0 %v4496
      %v4498 = vpop.xlane.xlu0 %4497
      %v4499 = vsel %vm385, %v4318, 0.0
      %v4500 = vsel %vm385, %v4319, 0.0
      %v4501 = vadd.f32 %v4499, %v4500
      %4502 = vadd.xlane.f32.xlu0 %v4501
      %v4503 = vpop.xlane.xlu0 %4502
      %v4504 = vsel %vm385, %v4405, 0.0
      %v4505 = vsel %vm385, %v4406, 0.0
      %v4506 = vadd.f32 %v4504, %v4505
      %4507 = vadd.xlane.f32.xlu0 %v4506
      %v4508 = vpop.xlane.xlu0 %4507
      %v4509 = vsel %vm385, %v4492, 0.0
      %v4510 = vsel %vm385, %v4493, 0.0
      %v4511 = vadd.f32 %v4509, %v4510
      %4512 = vadd.xlane.f32.xlu0 %v4511
      %v4513 = vpop.xlane.xlu0 %4512
      %v4514 = vmul.f32 %v4498, 0.00390625
      %v4515 = vmul.f32 %v4503, 0.00390625
      %v4516 = vmul.f32 %v4508, 0.00390625
      %v4517 = vmul.f32 %v4513, 0.00390625
      %v4518 = vsub.f32 %v4231, %v4514
      %v4519 = vsub.f32 %v4232, %v4514
      %v4520 = vsub.f32 %v4318, %v4515
      %v4521 = vsub.f32 %v4319, %v4515
      %v4522 = vsub.f32 %v4405, %v4516
      %v4523 = vsub.f32 %v4406, %v4516
      %v4524 = vsub.f32 %v4492, %v4517
      %v4525 = vsub.f32 %v4493, %v4517
      %v4526 = vmul.f32 %v4518, %v4518
      %v4527 = vmul.f32 %v4519, %v4519
      %v4528 = vmul.f32 %v4520, %v4520
      %v4529 = vmul.f32 %v4521, %v4521
      %v4530 = vmul.f32 %v4522, %v4522
      %v4531 = vmul.f32 %v4523, %v4523
      %v4532 = vmul.f32 %v4524, %v4524
      %v4533 = vmul.f32 %v4525, %v4525
      %v4534 = vsel %vm385, %v4526, 0.0
      %v4535 = vsel %vm385, %v4527, 0.0
      %v4536 = vadd.f32 %v4534, %v4535
      %4537 = vadd.xlane.f32.xlu0 %v4536
      %v4538 = vpop.xlane.xlu0 %4537
      %v4539 = vsel %vm385, %v4528, 0.0
      %v4540 = vsel %vm385, %v4529, 0.0
      %v4541 = vadd.f32 %v4539, %v4540
      %4542 = vadd.xlane.f32.xlu0 %v4541
      %v4543 = vpop.xlane.xlu0 %4542
      %v4544 = vsel %vm385, %v4530, 0.0
      %v4545 = vsel %vm385, %v4531, 0.0
      %v4546 = vadd.f32 %v4544, %v4545
      %4547 = vadd.xlane.f32.xlu0 %v4546
      %v4548 = vpop.xlane.xlu0 %4547
      %v4549 = vsel %vm385, %v4532, 0.0
      %v4550 = vsel %vm385, %v4533, 0.0
      %v4551 = vadd.f32 %v4549, %v4550
      %4552 = vadd.xlane.f32.xlu0 %v4551
      %v4553 = vpop.xlane.xlu0 %4552
      %v4554 = vmul.f32 %v4538, 0.00390625
      %v4555 = vmul.f32 %v4543, 0.00390625
      %v4556 = vmul.f32 %v4548, 0.00390625
      %v4557 = vmul.f32 %v4553, 0.00390625
      %v4558 = vadd.f32 %v4554, 1e-05
      %v4559 = vadd.f32 %v4555, 1e-05
      %v4560 = vadd.f32 %v4556, 1e-05
      %v4561 = vadd.f32 %v4557, 1e-05
      %v4562 = vrsqrt.pop %v4558
      %v4563 = vrsqrt.pop %v4559
      %v4564 = vrsqrt.pop %v4560
      %v4565 = vrsqrt.pop %v4561
      %v4566 = vmul.f32 %v4518, %v4562
      %v4567 = vmul.f32 %v4519, %v4562
      %v4568 = vmul.f32 %v4520, %v4563
      %v4569 = vmul.f32 %v4521, %v4563
      %v4570 = vmul.f32 %v4522, %v4564
      %v4571 = vmul.f32 %v4523, %v4564
      %v4572 = vmul.f32 %v4524, %v4565
      %v4573 = vmul.f32 %v4525, %v4565
      %vm4574 = vcmp.ge.f32.partialorder %v4566, 0.0
      %vm4575 = vcmp.ge.f32.partialorder %v4567, 0.0
      %vm4576 = vcmp.ge.f32.partialorder %v4568, 0.0
      %vm4577 = vcmp.ge.f32.partialorder %v4569, 0.0
      %vm4578 = vcmp.ge.f32.partialorder %v4570, 0.0
      %vm4579 = vcmp.ge.f32.partialorder %v4571, 0.0
      %vm4580 = vcmp.ge.f32.partialorder %v4572, 0.0
      %vm4581 = vcmp.ge.f32.partialorder %v4573, 0.0
      %v4582 = vmul.f32 %v4566, 0.01
      %v4583 = vmul.f32 %v4567, 0.01
      %v4584 = vmul.f32 %v4568, 0.01
      %v4585 = vmul.f32 %v4569, 0.01
      %v4586 = vmul.f32 %v4570, 0.01
      %v4587 = vmul.f32 %v4571, 0.01
      %v4588 = vmul.f32 %v4572, 0.01
      %v4589 = vmul.f32 %v4573, 0.01
      %v4590 = vsel %vm4574, %v4566, %v4582
      %v4591 = vsel %vm4575, %v4567, %v4583
      %v4592 = vsel %vm4576, %v4568, %v4584
      %v4593 = vsel %vm4577, %v4569, %v4585
      %v4594 = vsel %vm4578, %v4570, %v4586
      %v4595 = vsel %vm4579, %v4571, %v4587
      %v4596 = vsel %vm4580, %v4572, %v4588
      %v4597 = vsel %vm4581, %v4573, %v4589
      %v4598 = vld [vmem:[%s6] sm:$0xff]
      %v4599 = vld [vmem:[%s7] sm:$0xff]
      %4601 = vset.pattern.permute.xlu0 0
      %4602 = vperm.xlu0 %4601, %v4599
      %v4603 = vpop.permute.xlu0 %4602
      %v4606 = vsel %vm381, %v4598, 0
      %v4609 = vsel %vm385, %v4590, 0
      %v4612 = vsel %vm385, %v4591, 0
      %4614 = vmatprep.subr.mxu0 0.0
      %4615 = vmatpush1.msra.mxu0 0.0
      %4616 = vmatprep.subr.mxu0 0.0
      %4617 = vmatpush1.msra.mxu0 0.0
      %4618 = vmatprep.subr.mxu0 0.0
      %4619 = vmatpush1.msra.mxu0 0.0
      %4620 = vmatprep.subr.mxu0 0.0
      %4621 = vmatpush1.msra.mxu0 0.0
      %4622 = vmatprep.subr.mxu0 0.0
      %4623 = vmatpush1.msra.mxu0 0.0
      %4624 = vmatprep.subr.mxu0 0.0
      %4625 = vmatpush1.msra.mxu0 0.0
      %4626 = vmatprep.subr.mxu0 0.0
      %4627 = vmatpush1.msra.mxu0 0.0
      %4628 = vmatprep.subr.mxu0 0.0
      %4629 = vmatpush1.msra.mxu0 0.0
      %4630 = vmatprep.subr.mxu0 0.0
      %4631 = vmatpush1.msra.mxu0 0.0
      %4632 = vmatprep.subr.mxu0 0.0
      %4633 = vmatpush1.msra.mxu0 0.0
      %4634 = vmatprep.subr.mxu0 0.0
      %4635 = vmatpush1.msra.mxu0 0.0
      %4636 = vmatprep.subr.mxu0 0.0
      %4637 = vmatpush1.msra.mxu0 0.0
      %4638 = vmatprep.subr.mxu0 0.0
      %4639 = vmatpush1.msra.mxu0 0.0
      %4640 = vmatprep.subr.mxu0 0.0
      %4641 = vmatpush1.msra.mxu0 0.0
      %4642 = vmatprep.subr.mxu0 0.0
      %4643 = vmatpush1.msra.mxu0 0.0
      %4644 = vmatprep.subr.mxu0 %v4612
      %4645 = vmatpush1.msra.mxu0 %v4609
      %4646 = vmatprep.subr.mxu0 0.0
      %4647 = vmatpush2.msra.mxu0 0.0
      %4648 = vmatprep.subr.mxu0 0.0
      %4649 = vmatpush2.msra.mxu0 0.0
      %4650 = vmatprep.subr.mxu0 0.0
      %4651 = vmatpush2.msra.mxu0 0.0
      %4652 = vmatprep.subr.mxu0 0.0
      %4653 = vmatpush2.msra.mxu0 0.0
      %4654 = vmatprep.subr.mxu0 0.0
      %4655 = vmatpush2.msra.mxu0 0.0
      %4656 = vmatprep.subr.mxu0 0.0
      %4657 = vmatpush2.msra.mxu0 0.0
      %4658 = vmatprep.subr.mxu0 0.0
      %4659 = vmatpush2.msra.mxu0 0.0
      %4660 = vmatprep.subr.mxu0 0.0
      %4661 = vmatpush2.msra.mxu0 0.0
      %4662 = vmatprep.subr.mxu0 0.0
      %4663 = vmatpush2.msra.mxu0 0.0
      %4664 = vmatprep.subr.mxu0 0.0
      %4665 = vmatpush2.msra.mxu0 0.0
      %4666 = vmatprep.subr.mxu0 0.0
      %4667 = vmatpush2.msra.mxu0 0.0
      %4668 = vmatprep.subr.mxu0 0.0
      %4669 = vmatpush2.msra.mxu0 0.0
      %4670 = vmatprep.subr.mxu0 0.0
      %4671 = vmatpush2.msra.mxu0 0.0
      %4672 = vmatprep.subr.mxu0 0.0
      %4673 = vmatpush2.msra.mxu0 0.0
      %4674 = vmatprep.subr.mxu0 0.0
      %4675 = vmatpush2.msra.mxu0 0.0
      %4676 = vmatprep.subr.mxu0 0.0
      %4677 = vmatpush2.msra.mxu0 0.0
      %4678 = vmatprep.mubr.f32.mxu0 0.0
      %4679 = vmatmul.mubr.f32.gmra.mxu0 %v4606
      %v4680 = vpop.f32.mrf.mxu0
      %v4681 = vadd.f32 %v4603, %v4680
      %v4682 = vpop.f32.mrf.mxu0
      %v4683 = vadd.f32 %v4603, %v4682
      %4684 = vdwg.mxu0
      %v4686 = vsel %vm385, %v4592, 0
      %v4689 = vsel %vm385, %v4593, 0
      %4691 = vmatprep.subr.mxu0 0.0
      %4692 = vmatpush1.msra.mxu0 0.0
      %4693 = vmatprep.subr.mxu0 0.0
      %4694 = vmatpush1.msra.mxu0 0.0
      %4695 = vmatprep.subr.mxu0 0.0
      %4696 = vmatpush1.msra.mxu0 0.0
      %4697 = vmatprep.subr.mxu0 0.0
      %4698 = vmatpush1.msra.mxu0 0.0
      %4699 = vmatprep.subr.mxu0 0.0
      %4700 = vmatpush1.msra.mxu0 0.0
      %4701 = vmatprep.subr.mxu0 0.0
      %4702 = vmatpush1.msra.mxu0 0.0
      %4703 = vmatprep.subr.mxu0 0.0
      %4704 = vmatpush1.msra.mxu0 0.0
      %4705 = vmatprep.subr.mxu0 0.0
      %4706 = vmatpush1.msra.mxu0 0.0
      %4707 = vmatprep.subr.mxu0 0.0
      %4708 = vmatpush1.msra.mxu0 0.0
      %4709 = vmatprep.subr.mxu0 0.0
      %4710 = vmatpush1.msra.mxu0 0.0
      %4711 = vmatprep.subr.mxu0 0.0
      %4712 = vmatpush1.msra.mxu0 0.0
      %4713 = vmatprep.subr.mxu0 0.0
      %4714 = vmatpush1.msra.mxu0 0.0
      %4715 = vmatprep.subr.mxu0 0.0
      %4716 = vmatpush1.msra.mxu0 0.0
      %4717 = vmatprep.subr.mxu0 0.0
      %4718 = vmatpush1.msra.mxu0 0.0
      %4719 = vmatprep.subr.mxu0 0.0
      %4720 = vmatpush1.msra.mxu0 0.0
      %4721 = vmatprep.subr.mxu0 %v4689
      %4722 = vmatpush1.msra.mxu0 %v4686
      %4723 = vmatprep.subr.mxu0 0.0
      %4724 = vmatpush2.msra.mxu0 0.0
      %4725 = vmatprep.subr.mxu0 0.0
      %4726 = vmatpush2.msra.mxu0 0.0
      %4727 = vmatprep.subr.mxu0 0.0
      %4728 = vmatpush2.msra.mxu0 0.0
      %4729 = vmatprep.subr.mxu0 0.0
      %4730 = vmatpush2.msra.mxu0 0.0
      %4731 = vmatprep.subr.mxu0 0.0
      %4732 = vmatpush2.msra.mxu0 0.0
      %4733 = vmatprep.subr.mxu0 0.0
      %4734 = vmatpush2.msra.mxu0 0.0
      %4735 = vmatprep.subr.mxu0 0.0
      %4736 = vmatpush2.msra.mxu0 0.0
      %4737 = vmatprep.subr.mxu0 0.0
      %4738 = vmatpush2.msra.mxu0 0.0
      %4739 = vmatprep.subr.mxu0 0.0
      %4740 = vmatpush2.msra.mxu0 0.0
      %4741 = vmatprep.subr.mxu0 0.0
      %4742 = vmatpush2.msra.mxu0 0.0
      %4743 = vmatprep.subr.mxu0 0.0
      %4744 = vmatpush2.msra.mxu0 0.0
      %4745 = vmatprep.subr.mxu0 0.0
      %4746 = vmatpush2.msra.mxu0 0.0
      %4747 = vmatprep.subr.mxu0 0.0
      %4748 = vmatpush2.msra.mxu0 0.0
      %4749 = vmatprep.subr.mxu0 0.0
      %4750 = vmatpush2.msra.mxu0 0.0
      %4751 = vmatprep.subr.mxu0 0.0
      %4752 = vmatpush2.msra.mxu0 0.0
      %4753 = vmatprep.subr.mxu0 0.0
      %4754 = vmatpush2.msra.mxu0 0.0
      %4755 = vmatprep.mubr.f32.mxu0 0.0
      %4756 = vmatmul.mubr.f32.gmra.mxu0 %v4606
      %v4757 = vpop.f32.mrf.mxu0
      %v4758 = vadd.f32 %v4603, %v4757
      %v4759 = vpop.f32.mrf.mxu0
      %v4760 = vadd.f32 %v4603, %v4759
      %4761 = vdwg.mxu0
      %v4763 = vsel %vm385, %v4594, 0
      %v4766 = vsel %vm385, %v4595, 0
      %4768 = vmatprep.subr.mxu0 0.0
      %4769 = vmatpush1.msra.mxu0 0.0
      %4770 = vmatprep.subr.mxu0 0.0
      %4771 = vmatpush1.msra.mxu0 0.0
      %4772 = vmatprep.subr.mxu0 0.0
      %4773 = vmatpush1.msra.mxu0 0.0
      %4774 = vmatprep.subr.mxu0 0.0
      %4775 = vmatpush1.msra.mxu0 0.0
      %4776 = vmatprep.subr.mxu0 0.0
      %4777 = vmatpush1.msra.mxu0 0.0
      %4778 = vmatprep.subr.mxu0 0.0
      %4779 = vmatpush1.msra.mxu0 0.0
      %4780 = vmatprep.subr.mxu0 0.0
      %4781 = vmatpush1.msra.mxu0 0.0
      %4782 = vmatprep.subr.mxu0 0.0
      %4783 = vmatpush1.msra.mxu0 0.0
      %4784 = vmatprep.subr.mxu0 0.0
      %4785 = vmatpush1.msra.mxu0 0.0
      %4786 = vmatprep.subr.mxu0 0.0
      %4787 = vmatpush1.msra.mxu0 0.0
      %4788 = vmatprep.subr.mxu0 0.0
      %4789 = vmatpush1.msra.mxu0 0.0
      %4790 = vmatprep.subr.mxu0 0.0
      %4791 = vmatpush1.msra.mxu0 0.0
      %4792 = vmatprep.subr.mxu0 0.0
      %4793 = vmatpush1.msra.mxu0 0.0
      %4794 = vmatprep.subr.mxu0 0.0
      %4795 = vmatpush1.msra.mxu0 0.0
      %4796 = vmatprep.subr.mxu0 0.0
      %4797 = vmatpush1.msra.mxu0 0.0
      %4798 = vmatprep.subr.mxu0 %v4766
      %4799 = vmatpush1.msra.mxu0 %v4763
      %4800 = vmatprep.subr.mxu0 0.0
      %4801 = vmatpush2.msra.mxu0 0.0
      %4802 = vmatprep.subr.mxu0 0.0
      %4803 = vmatpush2.msra.mxu0 0.0
      %4804 = vmatprep.subr.mxu0 0.0
      %4805 = vmatpush2.msra.mxu0 0.0
      %4806 = vmatprep.subr.mxu0 0.0
      %4807 = vmatpush2.msra.mxu0 0.0
      %4808 = vmatprep.subr.mxu0 0.0
      %4809 = vmatpush2.msra.mxu0 0.0
      %4810 = vmatprep.subr.mxu0 0.0
      %4811 = vmatpush2.msra.mxu0 0.0
      %4812 = vmatprep.subr.mxu0 0.0
      %4813 = vmatpush2.msra.mxu0 0.0
      %4814 = vmatprep.subr.mxu0 0.0
      %4815 = vmatpush2.msra.mxu0 0.0
      %4816 = vmatprep.subr.mxu0 0.0
      %4817 = vmatpush2.msra.mxu0 0.0
      %4818 = vmatprep.subr.mxu0 0.0
      %4819 = vmatpush2.msra.mxu0 0.0
      %4820 = vmatprep.subr.mxu0 0.0
      %4821 = vmatpush2.msra.mxu0 0.0
      %4822 = vmatprep.subr.mxu0 0.0
      %4823 = vmatpush2.msra.mxu0 0.0
      %4824 = vmatprep.subr.mxu0 0.0
      %4825 = vmatpush2.msra.mxu0 0.0
      %4826 = vmatprep.subr.mxu0 0.0
      %4827 = vmatpush2.msra.mxu0 0.0
      %4828 = vmatprep.subr.mxu0 0.0
      %4829 = vmatpush2.msra.mxu0 0.0
      %4830 = vmatprep.subr.mxu0 0.0
      %4831 = vmatpush2.msra.mxu0 0.0
      %4832 = vmatprep.mubr.f32.mxu0 0.0
      %4833 = vmatmul.mubr.f32.gmra.mxu0 %v4606
      %v4834 = vpop.f32.mrf.mxu0
      %v4835 = vadd.f32 %v4603, %v4834
      %v4836 = vpop.f32.mrf.mxu0
      %v4837 = vadd.f32 %v4603, %v4836
      %4838 = vdwg.mxu0
      %v4840 = vsel %vm385, %v4596, 0
      %v4843 = vsel %vm385, %v4597, 0
      %4845 = vmatprep.subr.mxu0 0.0
      %4846 = vmatpush1.msra.mxu0 0.0
      %4847 = vmatprep.subr.mxu0 0.0
      %4848 = vmatpush1.msra.mxu0 0.0
      %4849 = vmatprep.subr.mxu0 0.0
      %4850 = vmatpush1.msra.mxu0 0.0
      %4851 = vmatprep.subr.mxu0 0.0
      %4852 = vmatpush1.msra.mxu0 0.0
      %4853 = vmatprep.subr.mxu0 0.0
      %4854 = vmatpush1.msra.mxu0 0.0
      %4855 = vmatprep.subr.mxu0 0.0
      %4856 = vmatpush1.msra.mxu0 0.0
      %4857 = vmatprep.subr.mxu0 0.0
      %4858 = vmatpush1.msra.mxu0 0.0
      %4859 = vmatprep.subr.mxu0 0.0
      %4860 = vmatpush1.msra.mxu0 0.0
      %4861 = vmatprep.subr.mxu0 0.0
      %4862 = vmatpush1.msra.mxu0 0.0
      %4863 = vmatprep.subr.mxu0 0.0
      %4864 = vmatpush1.msra.mxu0 0.0
      %4865 = vmatprep.subr.mxu0 0.0
      %4866 = vmatpush1.msra.mxu0 0.0
      %4867 = vmatprep.subr.mxu0 0.0
      %4868 = vmatpush1.msra.mxu0 0.0
      %4869 = vmatprep.subr.mxu0 0.0
      %4870 = vmatpush1.msra.mxu0 0.0
      %4871 = vmatprep.subr.mxu0 0.0
      %4872 = vmatpush1.msra.mxu0 0.0
      %4873 = vmatprep.subr.mxu0 0.0
      %4874 = vmatpush1.msra.mxu0 0.0
      %4875 = vmatprep.subr.mxu0 %v4843
      %4876 = vmatpush1.msra.mxu0 %v4840
      %4877 = vmatprep.subr.mxu0 0.0
      %4878 = vmatpush2.msra.mxu0 0.0
      %4879 = vmatprep.subr.mxu0 0.0
      %4880 = vmatpush2.msra.mxu0 0.0
      %4881 = vmatprep.subr.mxu0 0.0
      %4882 = vmatpush2.msra.mxu0 0.0
      %4883 = vmatprep.subr.mxu0 0.0
      %4884 = vmatpush2.msra.mxu0 0.0
      %4885 = vmatprep.subr.mxu0 0.0
      %4886 = vmatpush2.msra.mxu0 0.0
      %4887 = vmatprep.subr.mxu0 0.0
      %4888 = vmatpush2.msra.mxu0 0.0
      %4889 = vmatprep.subr.mxu0 0.0
      %4890 = vmatpush2.msra.mxu0 0.0
      %4891 = vmatprep.subr.mxu0 0.0
      %4892 = vmatpush2.msra.mxu0 0.0
      %4893 = vmatprep.subr.mxu0 0.0
      %4894 = vmatpush2.msra.mxu0 0.0
      %4895 = vmatprep.subr.mxu0 0.0
      %4896 = vmatpush2.msra.mxu0 0.0
      %4897 = vmatprep.subr.mxu0 0.0
      %4898 = vmatpush2.msra.mxu0 0.0
      %4899 = vmatprep.subr.mxu0 0.0
      %4900 = vmatpush2.msra.mxu0 0.0
      %4901 = vmatprep.subr.mxu0 0.0
      %4902 = vmatpush2.msra.mxu0 0.0
      %4903 = vmatprep.subr.mxu0 0.0
      %4904 = vmatpush2.msra.mxu0 0.0
      %4905 = vmatprep.subr.mxu0 0.0
      %4906 = vmatpush2.msra.mxu0 0.0
      %4907 = vmatprep.subr.mxu0 0.0
      %4908 = vmatpush2.msra.mxu0 0.0
      %4909 = vmatprep.mubr.f32.mxu0 0.0
      %4910 = vmatmul.mubr.f32.gmra.mxu0 %v4606
      %v4911 = vpop.f32.mrf.mxu0
      %v4912 = vadd.f32 %v4603, %v4911
      %v4913 = vpop.f32.mrf.mxu0
      %v4914 = vadd.f32 %v4603, %v4913
      %4915 = vdwg.mxu0
      %v4916 = vadd.f32 %v4681, %v457
      %v4917 = vadd.f32 %v4683, %v459
      %v4918 = vadd.f32 %v4758, %v534
      %v4919 = vadd.f32 %v4760, %v536
      %v4920 = vadd.f32 %v4835, %v611
      %v4921 = vadd.f32 %v4837, %v613
      %v4922 = vadd.f32 %v4912, %v688
      %v4923 = vadd.f32 %v4914, %v690
      %4924 = vst [vmem:[%s366] sm:$0xff] %v4916
      %4925 = vst [vmem:[%s366 + $0x8] sm:$0xff] %v4917
      %4926 = vst [vmem:[%s366 + $0x10] sm:$0xff] %v4918
      %4927 = vst [vmem:[%s366 + $0x18] sm:$0xff] %v4919
      %4928 = vst [vmem:[%s366 + $0x20] sm:$0xff] %v4920
      %4929 = vst [vmem:[%s366 + $0x28] sm:$0xff] %v4921
      %4930 = vst [vmem:[%s366 + $0x30] sm:$0xff] %v4922
      %4931 = vst [vmem:[%s366 + $0x38] sm:$0xff] %v4923
      %s4932 = smul.u32 4, %s21
      %p4933 = scmp.lt.s32.totalorder %s4932, 7
      %s4934 = scalar_select %p4933, %s4932, 7
      %s4935 = smul.addr %s4934, 2
      %s4936 = smul.addr %s4935, 8
      %s4937 = scalar_lea.vmem %s10, %s4936
      // Predicated region
      $region61: #{residual_forward.1} parent=59 // pred_check
        %p4938 = pneg %p254
      $region62: #{residual_forward.1} parent=59 // pred_check_branch
        %4940 = sbr.rel (%p4938) target = $region64
      $region63: #{residual_forward.1} parent=59 // pred_region
        %s4941 = smul.u32 4, %s21
      $region64: #{residual_forward.1} parent=59 // pred_fallthru
        _
    $region60: #{residual_forward.1} parent=5 // pred_fallthru
      _
    %p4942 = scmp.le.s32.totalorder 2, %s16
    // Predicated region
    $region65: #{residual_forward.1} parent=5 // pred_check
      %p4943 = pneg %p4942
    $region66: #{residual_forward.1} parent=5 // pred_check_branch
      %4945 = sbr.rel (%p4943) target = $region68
    $region67: #{residual_forward.1} parent=5 // pred_region
      %s4946 = ssub.s32 %s16, 2
      // Predicated region
      $region69: #{residual_forward.1} parent=67 // pred_check
        %p4947 = pneg %p260
      $region70: #{residual_forward.1} parent=67 // pred_check_branch
        %4949 = sbr.rel (%p4947) target = $region72
      $region71: #{residual_forward.1} parent=67 // pred_region
        %s4950 = smul.u32 4, %s22
        %p4951 = scmp.lt.s32.totalorder %s4950, 7
        %s4952 = scalar_select %p4951, %s4950, 7
        %s4953 = smul.addr %s4952, 2
        %s4954 = smul.addr %s4953, 8
        %s4955 = scalar_lea.vmem %s10, %s4954
      $region72: #{residual_forward.1} parent=67 // pred_fallthru
        _
    $region68: #{residual_forward.1} parent=5 // pred_fallthru
      _
  $region6: #{residual_forward.1} parent=0 // loop_footer
    %s20 = sadd.s32 1, %s16
  $region7: #{residual_forward.1} parent=0 // loop_footer_branch
    %15 = sbr.rel target = $region3
  $region8: #{residual_forward.1} parent=0 // loop_exit
    _

</llo_original>
